<compile_context>
chip_gen: v5e
topology: v5e:2x2
jax: 0.10.0
libtpu: 0.0.40
codegen_flags: <defaults>
</compile_context>

<pallas_src>
import math

import jax
import jax.numpy as jnp
from jax.experimental import pallas as pl
from jax.experimental.pallas import tpu as pltpu

_LANE = 128


def _level_geometry(T, H, W, levels):
    """Static per-level window sizes / pads / output offsets (mirrors the torch code)."""
    specs = []
    offset = 0
    for i in range(len(levels[0])):
        lt, lh, lw = int(levels[0][i]), int(levels[1][i]), int(levels[2][i])
        kt, kh, kw = math.ceil(T / lt), math.ceil(H / lh), math.ceil(W / lw)
        tp1 = (kt * lt - T) // 2           # torch: pad1 = floor(diff/2) (left side)
        hp1 = (kh * lh - H) // 2
        wp1 = (kw * lw - W) // 2
        specs.append(dict(l=(lt, lh, lw), k=(kt, kh, kw), pad=(tp1, hp1, wp1),
                          offset=offset, ncells=lt * lh * lw))
        offset += lt * lh * lw
    return specs, offset


def _make_fused_kernel(level_specs, mode, T, H, W):
    is_max = (mode == "max")

    def combine(a, b):
        return jnp.maximum(a, b) if is_max else a + b

    def kernel(x_ref, o_ref):
        # x_ref block: (1, T, H, W, Ct)   o_ref block: (1, total_cells, Ct)
        ct = x_ref.shape[-1]
        f32 = jnp.float32

        def reduce_range(get, lo, hi):
            acc = get(lo)
            for i in range(lo + 1, hi):
                acc = combine(acc, get(i))
            return acc

        for spec in level_specs:
            lt, lh, lw = spec["l"]
            kt, kh, kw = spec["k"]
            tp1, hp1, wp1 = spec["pad"]
            vol = kt * kh * kw
            rows = []
            for a in range(lt):
                # valid original T indices covered by padded window [a*kt, (a+1)*kt)
                tlo, thi = max(0, a * kt - tp1), min(T, (a + 1) * kt - tp1)
                rt = (reduce_range(lambda t: x_ref[0, t].astype(f32), tlo, thi)
                      if thi > tlo else None)                       # (H, W, Ct)
                for b in range(lh):
                    hlo, hhi = max(0, b * kh - hp1), min(H, (b + 1) * kh - hp1)
                    rh = (reduce_range(lambda h: rt[h], hlo, hhi)
                          if (rt is not None and hhi > hlo) else None)   # (W, Ct)
                    for d in range(lw):
                        wlo, whi = max(0, d * kw - wp1), min(W, (d + 1) * kw - wp1)
                        n_valid = (max(0, thi - tlo) * max(0, hhi - hlo)
                                   * max(0, whi - wlo))
                        if rh is None or whi <= wlo:
                            # window lies entirely inside the zero padding
                            cell = jnp.zeros((1, ct), f32)
                        else:
                            win = rh[wlo:whi, :]                    # (valid_w, Ct)
                            if is_max:
                                cell = jnp.max(win, axis=0, keepdims=True)
                                if n_valid < vol:
                                    # padded zeros participate in the max (torch semantics)
                                    cell = jnp.maximum(cell, 0.0)
                            else:
                                cell = jnp.sum(win, axis=0, keepdims=True)
                        rows.append(cell)
            lvl = jnp.concatenate(rows, axis=0)                     # (ncells, Ct)
            if not is_max:
                lvl = lvl * (1.0 / float(vol))    # count_include_pad=True divisor
            o_ref[0, spec["offset"]:spec["offset"] + spec["ncells"], :] = (
                lvl.astype(o_ref.dtype))

    return kernel


def spatial_pyramid_pool_3d(x, levels, mode="max"):
    """Pallas implementation of PyramidPooling3D.spatial_pyramid_pool (NCDHW input)."""
    if mode not in ("max", "avg"):
        raise RuntimeError('Unknown pooling type: %s, please use "max" or "avg".' % mode)
    N, C, T, H, W = x.shape
    specs, total_cells = _level_geometry(T, H, W, levels)

    # Channels-last so C sits on the lane axis; pad C to a multiple of 128 and tile it.
    ct = _LANE
    cp = ((C + ct - 1) // ct) * ct
    xt = jnp.transpose(x, (0, 2, 3, 4, 1))               # (N, T, H, W, C)
    if cp != C:
        xt = jnp.pad(xt, ((0, 0), (0, 0), (0, 0), (0, 0), (0, cp - C)))

    kern = _make_fused_kernel(specs, mode, T, H, W)
    out = pl.pallas_call(
        kern,
        out_shape=jax.ShapeDtypeStruct((N, total_cells, cp), x.dtype),
        grid=(N, cp // ct),
        in_specs=[pl.BlockSpec((1, T, H, W, ct), lambda n, c: (n, 0, 0, 0, c))],
        out_specs=pl.BlockSpec((1, total_cells, ct), lambda n, c: (n, 0, c)),
        compiler_params=pltpu.CompilerParams(
            dimension_semantics=("parallel", "parallel"),   # feeds both v7x TensorCores
            vmem_limit_bytes=32 * 1024 * 1024,
        ),
    )(xt)

    # Restore the PyTorch flatten order: per level, (N, C, lt, lh, lw).view(N, -1), then
    # concat over levels.  This is tiny wrapper-side layout plumbing.
    pieces = []
    for s in specs:
        nc = s["ncells"]
        blk = out[:, s["offset"]:s["offset"] + nc, :C]    # (N, ncells, C)
        pieces.append(jnp.transpose(blk, (0, 2, 1)).reshape(N, C * nc))
    return jnp.concatenate(pieces, axis=1)


def _reference_spp(x, levels, mode="max"):
    """Pure-JAX reference with identical semantics (for verification)."""
    N, C, T, H, W = x.shape
    outs = []
    for i in range(len(levels[0])):
        lt, lh, lw = int(levels[0][i]), int(levels[1][i]), int(levels[2][i])
        kt, kh, kw = math.ceil(T / lt), math.ceil(H / lh), math.ceil(W / lw)
        td, hd, wd = kt * lt - T, kh * lh - H, kw * lw - W
        xp = jnp.pad(x, ((0, 0), (0, 0),
                         (td // 2, td - td // 2),
                         (hd // 2, hd - hd // 2),
                         (wd // 2, wd - wd // 2)))
        xr = xp.reshape(N, C, lt, kt, lh, kh, lw, kw)
        if mode == "max":
            p = jnp.max(xr, axis=(3, 5, 7))
        else:
            p = jnp.mean(xr, axis=(3, 5, 7))
        outs.append(p.reshape(N, -1))
    return jnp.concatenate(outs, axis=1)


class SpatialPyramidPooling3D:
    """No learnable parameters — static pyramid pooling, mirroring the nn.Module."""

    def __init__(self, levels, mode="max"):
        self.levels = levels
        self.mode = mode

    def __call__(self, x):
        return spatial_pyramid_pool_3d(x, self.levels, self.mode)

    def get_output_size(self, filters):
        out = 0
        for i in range(len(self.levels[0])):
            out += filters * self.levels[0][i] * self.levels[1][i] * self.levels[2][i]
        return out


if __name__ == "__main__":
    key = jax.random.PRNGKey(0)
    # levels[0]=temporal divisions, levels[1]=height divisions, levels[2]=width divisions
    levels = [[1, 2, 3], [1, 2, 3], [1, 2, 3]]

    configs = [
        (2, 4, 8, 16, 16),   # small NCDHW
        (1, 136, 4, 8, 8),   # exercises channel padding + two 128-channel tiles
    ]
    for (N, C, T, H, W) in configs:
        key, sub = jax.random.split(key)
        x = jax.random.normal(sub, (N, C, T, H, W), dtype=jnp.float32)
        for mode in ("max", "avg"):
            spp = SpatialPyramidPooling3D(levels, mode=mode)
            out = jax.block_until_ready(spp(x))
            ref = _reference_spp(x, levels, mode=mode)
            expected_n = sum(C * levels[0][i] * levels[1][i] * levels[2][i]
                             for i in range(len(levels[0])))
            assert out.shape == (N, expected_n), (out.shape, expected_n)
            assert jnp.allclose(out, ref, atol=1e-5, rtol=1e-5), \
                f"mismatch mode={mode} shape={x.shape}"

    print("KERNEL_OK")
</pallas_src>

<mosaic_0001>
module attributes {stable_mosaic.version = 11 : i64} {
  func.func @kernel(%arg0: i32, %arg1: i32, %arg2: memref<1x8x16x16x128xf32, #tpu.memory_space<vmem>>, %arg3: memref<1x36x128xf32, #tpu.memory_space<vmem>>) attributes {dimension_semantics = [#tpu.dimension_semantics<parallel>, #tpu.dimension_semantics<parallel>], iteration_bounds = array<i64: 2, 1>, scalar_prefetch = 0 : i64, scratch_operands = 0 : i64, tpu.core_type = #tpu.core_type<tc>, window_params = [{transform_indices = @transform_0, window_bounds = array<i64: 1, 8, 16, 16, 128>}, {transform_indices = @transform_1, window_bounds = array<i64: 1, 36, 128>}]} {
    %c0 = arith.constant 0 : index
    %c0_0 = arith.constant 0 : index
    %c0_1 = arith.constant 0 : index
    %c0_2 = arith.constant 0 : index
    %c0_3 = arith.constant 0 : index
    %0 = vector.load %arg2[%c0, %c0_0, %c0_1, %c0_2, %c0_3] : memref<1x8x16x16x128xf32, #tpu.memory_space<vmem>>, vector<1x1x16x16x128xf32>
    %1 = vector.shape_cast %0 : vector<1x1x16x16x128xf32> to vector<16x16x128xf32>
    %c0_4 = arith.constant 0 : index
    %c1 = arith.constant 1 : index
    %c0_5 = arith.constant 0 : index
    %c0_6 = arith.constant 0 : index
    %c0_7 = arith.constant 0 : index
    %2 = vector.load %arg2[%c0_4, %c1, %c0_5, %c0_6, %c0_7] : memref<1x8x16x16x128xf32, #tpu.memory_space<vmem>>, vector<1x1x16x16x128xf32>
    %3 = vector.shape_cast %2 : vector<1x1x16x16x128xf32> to vector<16x16x128xf32>
    %4 = arith.maximumf %1, %3 : vector<16x16x128xf32>
    %c0_8 = arith.constant 0 : index
    %c2 = arith.constant 2 : index
    %c0_9 = arith.constant 0 : index
    %c0_10 = arith.constant 0 : index
    %c0_11 = arith.constant 0 : index
    %5 = vector.load %arg2[%c0_8, %c2, %c0_9, %c0_10, %c0_11] : memref<1x8x16x16x128xf32, #tpu.memory_space<vmem>>, vector<1x1x16x16x128xf32>
    %6 = vector.shape_cast %5 : vector<1x1x16x16x128xf32> to vector<16x16x128xf32>
    %7 = arith.maximumf %4, %6 : vector<16x16x128xf32>
    %c0_12 = arith.constant 0 : index
    %c3 = arith.constant 3 : index
    %c0_13 = arith.constant 0 : index
    %c0_14 = arith.constant 0 : index
    %c0_15 = arith.constant 0 : index
    %8 = vector.load %arg2[%c0_12, %c3, %c0_13, %c0_14, %c0_15] : memref<1x8x16x16x128xf32, #tpu.memory_space<vmem>>, vector<1x1x16x16x128xf32>
    %9 = vector.shape_cast %8 : vector<1x1x16x16x128xf32> to vector<16x16x128xf32>
    %10 = arith.maximumf %7, %9 : vector<16x16x128xf32>
    %c0_16 = arith.constant 0 : index
    %c4 = arith.constant 4 : index
    %c0_17 = arith.constant 0 : index
    %c0_18 = arith.constant 0 : index
    %c0_19 = arith.constant 0 : index
    %11 = vector.load %arg2[%c0_16, %c4, %c0_17, %c0_18, %c0_19] : memref<1x8x16x16x128xf32, #tpu.memory_space<vmem>>, vector<1x1x16x16x128xf32>
    %12 = vector.shape_cast %11 : vector<1x1x16x16x128xf32> to vector<16x16x128xf32>
    %13 = arith.maximumf %10, %12 : vector<16x16x128xf32>
    %c0_20 = arith.constant 0 : index
    %c5 = arith.constant 5 : index
    %c0_21 = arith.constant 0 : index
    %c0_22 = arith.constant 0 : index
    %c0_23 = arith.constant 0 : index
    %14 = vector.load %arg2[%c0_20, %c5, %c0_21, %c0_22, %c0_23] : memref<1x8x16x16x128xf32, #tpu.memory_space<vmem>>, vector<1x1x16x16x128xf32>
    %15 = vector.shape_cast %14 : vector<1x1x16x16x128xf32> to vector<16x16x128xf32>
    %16 = arith.maximumf %13, %15 : vector<16x16x128xf32>
    %c0_24 = arith.constant 0 : index
    %c6 = arith.constant 6 : index
    %c0_25 = arith.constant 0 : index
    %c0_26 = arith.constant 0 : index
    %c0_27 = arith.constant 0 : index
    %17 = vector.load %arg2[%c0_24, %c6, %c0_25, %c0_26, %c0_27] : memref<1x8x16x16x128xf32, #tpu.memory_space<vmem>>, vector<1x1x16x16x128xf32>
    %18 = vector.shape_cast %17 : vector<1x1x16x16x128xf32> to vector<16x16x128xf32>
    %19 = arith.maximumf %16, %18 : vector<16x16x128xf32>
    %c0_28 = arith.constant 0 : index
    %c7 = arith.constant 7 : index
    %c0_29 = arith.constant 0 : index
    %c0_30 = arith.constant 0 : index
    %c0_31 = arith.constant 0 : index
    %20 = vector.load %arg2[%c0_28, %c7, %c0_29, %c0_30, %c0_31] : memref<1x8x16x16x128xf32, #tpu.memory_space<vmem>>, vector<1x1x16x16x128xf32>
    %21 = vector.shape_cast %20 : vector<1x1x16x16x128xf32> to vector<16x16x128xf32>
    %22 = arith.maximumf %19, %21 : vector<16x16x128xf32>
    %23 = vector.extract_strided_slice %22 {offsets = [0, 0, 0], sizes = [1, 16, 128], strides = [1, 1, 1]} : vector<16x16x128xf32> to vector<1x16x128xf32>
    %24 = vector.shape_cast %23 : vector<1x16x128xf32> to vector<16x128xf32>
    %25 = vector.extract_strided_slice %22 {offsets = [1, 0, 0], sizes = [1, 16, 128], strides = [1, 1, 1]} : vector<16x16x128xf32> to vector<1x16x128xf32>
    %26 = vector.shape_cast %25 : vector<1x16x128xf32> to vector<16x128xf32>
    %27 = arith.maximumf %24, %26 : vector<16x128xf32>
    %28 = vector.extract_strided_slice %22 {offsets = [2, 0, 0], sizes = [1, 16, 128], strides = [1, 1, 1]} : vector<16x16x128xf32> to vector<1x16x128xf32>
    %29 = vector.shape_cast %28 : vector<1x16x128xf32> to vector<16x128xf32>
    %30 = arith.maximumf %27, %29 : vector<16x128xf32>
    %31 = vector.extract_strided_slice %22 {offsets = [3, 0, 0], sizes = [1, 16, 128], strides = [1, 1, 1]} : vector<16x16x128xf32> to vector<1x16x128xf32>
    %32 = vector.shape_cast %31 : vector<1x16x128xf32> to vector<16x128xf32>
    %33 = arith.maximumf %30, %32 : vector<16x128xf32>
    %34 = vector.extract_strided_slice %22 {offsets = [4, 0, 0], sizes = [1, 16, 128], strides = [1, 1, 1]} : vector<16x16x128xf32> to vector<1x16x128xf32>
    %35 = vector.shape_cast %34 : vector<1x16x128xf32> to vector<16x128xf32>
    %36 = arith.maximumf %33, %35 : vector<16x128xf32>
    %37 = vector.extract_strided_slice %22 {offsets = [5, 0, 0], sizes = [1, 16, 128], strides = [1, 1, 1]} : vector<16x16x128xf32> to vector<1x16x128xf32>
    %38 = vector.shape_cast %37 : vector<1x16x128xf32> to vector<16x128xf32>
    %39 = arith.maximumf %36, %38 : vector<16x128xf32>
    %40 = vector.extract_strided_slice %22 {offsets = [6, 0, 0], sizes = [1, 16, 128], strides = [1, 1, 1]} : vector<16x16x128xf32> to vector<1x16x128xf32>
    %41 = vector.shape_cast %40 : vector<1x16x128xf32> to vector<16x128xf32>
    %42 = arith.maximumf %39, %41 : vector<16x128xf32>
    %43 = vector.extract_strided_slice %22 {offsets = [7, 0, 0], sizes = [1, 16, 128], strides = [1, 1, 1]} : vector<16x16x128xf32> to vector<1x16x128xf32>
    %44 = vector.shape_cast %43 : vector<1x16x128xf32> to vector<16x128xf32>
    %45 = arith.maximumf %42, %44 : vector<16x128xf32>
    %46 = vector.extract_strided_slice %22 {offsets = [8, 0, 0], sizes = [1, 16, 128], strides = [1, 1, 1]} : vector<16x16x128xf32> to vector<1x16x128xf32>
    %47 = vector.shape_cast %46 : vector<1x16x128xf32> to vector<16x128xf32>
    %48 = arith.maximumf %45, %47 : vector<16x128xf32>
    %49 = vector.extract_strided_slice %22 {offsets = [9, 0, 0], sizes = [1, 16, 128], strides = [1, 1, 1]} : vector<16x16x128xf32> to vector<1x16x128xf32>
    %50 = vector.shape_cast %49 : vector<1x16x128xf32> to vector<16x128xf32>
    %51 = arith.maximumf %48, %50 : vector<16x128xf32>
    %52 = vector.extract_strided_slice %22 {offsets = [10, 0, 0], sizes = [1, 16, 128], strides = [1, 1, 1]} : vector<16x16x128xf32> to vector<1x16x128xf32>
    %53 = vector.shape_cast %52 : vector<1x16x128xf32> to vector<16x128xf32>
    %54 = arith.maximumf %51, %53 : vector<16x128xf32>
    %55 = vector.extract_strided_slice %22 {offsets = [11, 0, 0], sizes = [1, 16, 128], strides = [1, 1, 1]} : vector<16x16x128xf32> to vector<1x16x128xf32>
    %56 = vector.shape_cast %55 : vector<1x16x128xf32> to vector<16x128xf32>
    %57 = arith.maximumf %54, %56 : vector<16x128xf32>
    %58 = vector.extract_strided_slice %22 {offsets = [12, 0, 0], sizes = [1, 16, 128], strides = [1, 1, 1]} : vector<16x16x128xf32> to vector<1x16x128xf32>
    %59 = vector.shape_cast %58 : vector<1x16x128xf32> to vector<16x128xf32>
    %60 = arith.maximumf %57, %59 : vector<16x128xf32>
    %61 = vector.extract_strided_slice %22 {offsets = [13, 0, 0], sizes = [1, 16, 128], strides = [1, 1, 1]} : vector<16x16x128xf32> to vector<1x16x128xf32>
    %62 = vector.shape_cast %61 : vector<1x16x128xf32> to vector<16x128xf32>
    %63 = arith.maximumf %60, %62 : vector<16x128xf32>
    %64 = vector.extract_strided_slice %22 {offsets = [14, 0, 0], sizes = [1, 16, 128], strides = [1, 1, 1]} : vector<16x16x128xf32> to vector<1x16x128xf32>
    %65 = vector.shape_cast %64 : vector<1x16x128xf32> to vector<16x128xf32>
    %66 = arith.maximumf %63, %65 : vector<16x128xf32>
    %67 = vector.extract_strided_slice %22 {offsets = [15, 0, 0], sizes = [1, 16, 128], strides = [1, 1, 1]} : vector<16x16x128xf32> to vector<1x16x128xf32>
    %68 = vector.shape_cast %67 : vector<1x16x128xf32> to vector<16x128xf32>
    %69 = arith.maximumf %66, %68 : vector<16x128xf32>
    %cst = arith.constant dense<0xFF800000> : vector<128xf32>
    %70 = vector.multi_reduction <maximumf>, %69, %cst [0] : vector<16x128xf32> to vector<128xf32>
    %71 = vector.shape_cast %70 : vector<128xf32> to vector<1x128xf32>
    %c0_32 = arith.constant 0 : index
    %c0_33 = arith.constant 0 : index
    %c0_34 = arith.constant 0 : index
    %72 = vector.load %arg3[%c0_32, %c0_33, %c0_34] : memref<1x36x128xf32, #tpu.memory_space<vmem>>, vector<1x1x128xf32>
    %73 = vector.shape_cast %72 : vector<1x1x128xf32> to vector<1x128xf32>
    %74 = vector.shape_cast %71 : vector<1x128xf32> to vector<1x1x128xf32>
    tpu.vector_store %arg3[%c0_32, %c0_33, %c0_34], %74 {strides = array<i32>} : memref<1x36x128xf32, #tpu.memory_space<vmem>>, vector<1x1x128xf32>,
    %c0_35 = arith.constant 0 : index
    %c0_36 = arith.constant 0 : index
    %c0_37 = arith.constant 0 : index
    %c0_38 = arith.constant 0 : index
    %c0_39 = arith.constant 0 : index
    %75 = vector.load %arg2[%c0_35, %c0_36, %c0_37, %c0_38, %c0_39] : memref<1x8x16x16x128xf32, #tpu.memory_space<vmem>>, vector<1x1x16x16x128xf32>
    %76 = vector.shape_cast %75 : vector<1x1x16x16x128xf32> to vector<16x16x128xf32>
    %c0_40 = arith.constant 0 : index
    %c1_41 = arith.constant 1 : index
    %c0_42 = arith.constant 0 : index
    %c0_43 = arith.constant 0 : index
    %c0_44 = arith.constant 0 : index
    %77 = vector.load %arg2[%c0_40, %c1_41, %c0_42, %c0_43, %c0_44] : memref<1x8x16x16x128xf32, #tpu.memory_space<vmem>>, vector<1x1x16x16x128xf32>
    %78 = vector.shape_cast %77 : vector<1x1x16x16x128xf32> to vector<16x16x128xf32>
    %79 = arith.maximumf %76, %78 : vector<16x16x128xf32>
    %c0_45 = arith.constant 0 : index
    %c2_46 = arith.constant 2 : index
    %c0_47 = arith.constant 0 : index
    %c0_48 = arith.constant 0 : index
    %c0_49 = arith.constant 0 : index
    %80 = vector.load %arg2[%c0_45, %c2_46, %c0_47, %c0_48, %c0_49] : memref<1x8x16x16x128xf32, #tpu.memory_space<vmem>>, vector<1x1x16x16x128xf32>
    %81 = vector.shape_cast %80 : vector<1x1x16x16x128xf32> to vector<16x16x128xf32>
    %82 = arith.maximumf %79, %81 : vector<16x16x128xf32>
    %c0_50 = arith.constant 0 : index
    %c3_51 = arith.constant 3 : index
    %c0_52 = arith.constant 0 : index
    %c0_53 = arith.constant 0 : index
    %c0_54 = arith.constant 0 : index
    %83 = vector.load %arg2[%c0_50, %c3_51, %c0_52, %c0_53, %c0_54] : memref<1x8x16x16x128xf32, #tpu.memory_space<vmem>>, vector<1x1x16x16x128xf32>
    %84 = vector.shape_cast %83 : vector<1x1x16x16x128xf32> to vector<16x16x128xf32>
    %85 = arith.maximumf %82, %84 : vector<16x16x128xf32>
    %86 = vector.extract_strided_slice %85 {offsets = [0, 0, 0], sizes = [1, 16, 128], strides = [1, 1, 1]} : vector<16x16x128xf32> to vector<1x16x128xf32>
    %87 = vector.shape_cast %86 : vector<1x16x128xf32> to vector<16x128xf32>
    %88 = vector.extract_strided_slice %85 {offsets = [1, 0, 0], sizes = [1, 16, 128], strides = [1, 1, 1]} : vector<16x16x128xf32> to vector<1x16x128xf32>
    %89 = vector.shape_cast %88 : vector<1x16x128xf32> to vector<16x128xf32>
    %90 = arith.maximumf %87, %89 : vector<16x128xf32>
    %91 = vector.extract_strided_slice %85 {offsets = [2, 0, 0], sizes = [1, 16, 128], strides = [1, 1, 1]} : vector<16x16x128xf32> to vector<1x16x128xf32>
    %92 = vector.shape_cast %91 : vector<1x16x128xf32> to vector<16x128xf32>
    %93 = arith.maximumf %90, %92 : vector<16x128xf32>
    %94 = vector.extract_strided_slice %85 {offsets = [3, 0, 0], sizes = [1, 16, 128], strides = [1, 1, 1]} : vector<16x16x128xf32> to vector<1x16x128xf32>
    %95 = vector.shape_cast %94 : vector<1x16x128xf32> to vector<16x128xf32>
    %96 = arith.maximumf %93, %95 : vector<16x128xf32>
    %97 = vector.extract_strided_slice %85 {offsets = [4, 0, 0], sizes = [1, 16, 128], strides = [1, 1, 1]} : vector<16x16x128xf32> to vector<1x16x128xf32>
    %98 = vector.shape_cast %97 : vector<1x16x128xf32> to vector<16x128xf32>
    %99 = arith.maximumf %96, %98 : vector<16x128xf32>
    %100 = vector.extract_strided_slice %85 {offsets = [5, 0, 0], sizes = [1, 16, 128], strides = [1, 1, 1]} : vector<16x16x128xf32> to vector<1x16x128xf32>
    %101 = vector.shape_cast %100 : vector<1x16x128xf32> to vector<16x128xf32>
    %102 = arith.maximumf %99, %101 : vector<16x128xf32>
    %103 = vector.extract_strided_slice %85 {offsets = [6, 0, 0], sizes = [1, 16, 128], strides = [1, 1, 1]} : vector<16x16x128xf32> to vector<1x16x128xf32>
    %104 = vector.shape_cast %103 : vector<1x16x128xf32> to vector<16x128xf32>
    %105 = arith.maximumf %102, %104 : vector<16x128xf32>
    %106 = vector.extract_strided_slice %85 {offsets = [7, 0, 0], sizes = [1, 16, 128], strides = [1, 1, 1]} : vector<16x16x128xf32> to vector<1x16x128xf32>
    %107 = vector.shape_cast %106 : vector<1x16x128xf32> to vector<16x128xf32>
    %108 = arith.maximumf %105, %107 : vector<16x128xf32>
    %109 = vector.extract_strided_slice %108 {offsets = [0, 0], sizes = [8, 128], strides = [1, 1]} : vector<16x128xf32> to vector<8x128xf32>
    %cst_55 = arith.constant dense<0xFF800000> : vector<128xf32>
    %110 = vector.multi_reduction <maximumf>, %109, %cst_55 [0] : vector<8x128xf32> to vector<128xf32>
    %111 = vector.shape_cast %110 : vector<128xf32> to vector<1x128xf32>
    %112 = vector.extract_strided_slice %108 {offsets = [8, 0], sizes = [8, 128], strides = [1, 1]} : vector<16x128xf32> to vector<8x128xf32>
    %cst_56 = arith.constant dense<0xFF800000> : vector<128xf32>
    %113 = vector.multi_reduction <maximumf>, %112, %cst_56 [0] : vector<8x128xf32> to vector<128xf32>
    %114 = vector.shape_cast %113 : vector<128xf32> to vector<1x128xf32>
    %115 = vector.extract_strided_slice %85 {offsets = [8, 0, 0], sizes = [1, 16, 128], strides = [1, 1, 1]} : vector<16x16x128xf32> to vector<1x16x128xf32>
    %116 = vector.shape_cast %115 : vector<1x16x128xf32> to vector<16x128xf32>
    %117 = vector.extract_strided_slice %85 {offsets = [9, 0, 0], sizes = [1, 16, 128], strides = [1, 1, 1]} : vector<16x16x128xf32> to vector<1x16x128xf32>
    %118 = vector.shape_cast %117 : vector<1x16x128xf32> to vector<16x128xf32>
    %119 = arith.maximumf %116, %118 : vector<16x128xf32>
    %120 = vector.extract_strided_slice %85 {offsets = [10, 0, 0], sizes = [1, 16, 128], strides = [1, 1, 1]} : vector<16x16x128xf32> to vector<1x16x128xf32>
    %121 = vector.shape_cast %120 : vector<1x16x128xf32> to vector<16x128xf32>
    %122 = arith.maximumf %119, %121 : vector<16x128xf32>
    %123 = vector.extract_strided_slice %85 {offsets = [11, 0, 0], sizes = [1, 16, 128], strides = [1, 1, 1]} : vector<16x16x128xf32> to vector<1x16x128xf32>
    %124 = vector.shape_cast %123 : vector<1x16x128xf32> to vector<16x128xf32>
    %125 = arith.maximumf %122, %124 : vector<16x128xf32>
    %126 = vector.extract_strided_slice %85 {offsets = [12, 0, 0], sizes = [1, 16, 128], strides = [1, 1, 1]} : vector<16x16x128xf32> to vector<1x16x128xf32>
    %127 = vector.shape_cast %126 : vector<1x16x128xf32> to vector<16x128xf32>
    %128 = arith.maximumf %125, %127 : vector<16x128xf32>
    %129 = vector.extract_strided_slice %85 {offsets = [13, 0, 0], sizes = [1, 16, 128], strides = [1, 1, 1]} : vector<16x16x128xf32> to vector<1x16x128xf32>
    %130 = vector.shape_cast %129 : vector<1x16x128xf32> to vector<16x128xf32>
    %131 = arith.maximumf %128, %130 : vector<16x128xf32>
    %132 = vector.extract_strided_slice %85 {offsets = [14, 0, 0], sizes = [1, 16, 128], strides = [1, 1, 1]} : vector<16x16x128xf32> to vector<1x16x128xf32>
    %133 = vector.shape_cast %132 : vector<1x16x128xf32> to vector<16x128xf32>
    %134 = arith.maximumf %131, %133 : vector<16x128xf32>
    %135 = vector.extract_strided_slice %85 {offsets = [15, 0, 0], sizes = [1, 16, 128], strides = [1, 1, 1]} : vector<16x16x128xf32> to vector<1x16x128xf32>
    %136 = vector.shape_cast %135 : vector<1x16x128xf32> to vector<16x128xf32>
    %137 = arith.maximumf %134, %136 : vector<16x128xf32>
    %138 = vector.extract_strided_slice %137 {offsets = [0, 0], sizes = [8, 128], strides = [1, 1]} : vector<16x128xf32> to vector<8x128xf32>
    %cst_57 = arith.constant dense<0xFF800000> : vector<128xf32>
    %139 = vector.multi_reduction <maximumf>, %138, %cst_57 [0] : vector<8x128xf32> to vector<128xf32>
    %140 = vector.shape_cast %139 : vector<128xf32> to vector<1x128xf32>
    %141 = vector.extract_strided_slice %137 {offsets = [8, 0], sizes = [8, 128], strides = [1, 1]} : vector<16x128xf32> to vector<8x128xf32>
    %cst_58 = arith.constant dense<0xFF800000> : vector<128xf32>
    %142 = vector.multi_reduction <maximumf>, %141, %cst_58 [0] : vector<8x128xf32> to vector<128xf32>
    %143 = vector.shape_cast %142 : vector<128xf32> to vector<1x128xf32>
    %c0_59 = arith.constant 0 : index
    %c4_60 = arith.constant 4 : index
    %c0_61 = arith.constant 0 : index
    %c0_62 = arith.constant 0 : index
    %c0_63 = arith.constant 0 : index
    %144 = vector.load %arg2[%c0_59, %c4_60, %c0_61, %c0_62, %c0_63] : memref<1x8x16x16x128xf32, #tpu.memory_space<vmem>>, vector<1x1x16x16x128xf32>
    %145 = vector.shape_cast %144 : vector<1x1x16x16x128xf32> to vector<16x16x128xf32>
    %c0_64 = arith.constant 0 : index
    %c5_65 = arith.constant 5 : index
    %c0_66 = arith.constant 0 : index
    %c0_67 = arith.constant 0 : index
    %c0_68 = arith.constant 0 : index
    %146 = vector.load %arg2[%c0_64, %c5_65, %c0_66, %c0_67, %c0_68] : memref<1x8x16x16x128xf32, #tpu.memory_space<vmem>>, vector<1x1x16x16x128xf32>
    %147 = vector.shape_cast %146 : vector<1x1x16x16x128xf32> to vector<16x16x128xf32>
    %148 = arith.maximumf %145, %147 : vector<16x16x128xf32>
    %c0_69 = arith.constant 0 : index
    %c6_70 = arith.constant 6 : index
    %c0_71 = arith.constant 0 : index
    %c0_72 = arith.constant 0 : index
    %c0_73 = arith.constant 0 : index
    %149 = vector.load %arg2[%c0_69, %c6_70, %c0_71, %c0_72, %c0_73] : memref<1x8x16x16x128xf32, #tpu.memory_space<vmem>>, vector<1x1x16x16x128xf32>
    %150 = vector.shape_cast %149 : vector<1x1x16x16x128xf32> to vector<16x16x128xf32>
    %151 = arith.maximumf %148, %150 : vector<16x16x128xf32>
    %c0_74 = arith.constant 0 : index
    %c7_75 = arith.constant 7 : index
    %c0_76 = arith.constant 0 : index
    %c0_77 = arith.constant 0 : index
    %c0_78 = arith.constant 0 : index
    %152 = vector.load %arg2[%c0_74, %c7_75, %c0_76, %c0_77, %c0_78] : memref<1x8x16x16x128xf32, #tpu.memory_space<vmem>>, vector<1x1x16x16x128xf32>
    %153 = vector.shape_cast %152 : vector<1x1x16x16x128xf32> to vector<16x16x128xf32>
    %154 = arith.maximumf %151, %153 : vector<16x16x128xf32>
    %155 = vector.extract_strided_slice %154 {offsets = [0, 0, 0], sizes = [1, 16, 128], strides = [1, 1, 1]} : vector<16x16x128xf32> to vector<1x16x128xf32>
    %156 = vector.shape_cast %155 : vector<1x16x128xf32> to vector<16x128xf32>
    %157 = vector.extract_strided_slice %154 {offsets = [1, 0, 0], sizes = [1, 16, 128], strides = [1, 1, 1]} : vector<16x16x128xf32> to vector<1x16x128xf32>
    %158 = vector.shape_cast %157 : vector<1x16x128xf32> to vector<16x128xf32>
    %159 = arith.maximumf %156, %158 : vector<16x128xf32>
    %160 = vector.extract_strided_slice %154 {offsets = [2, 0, 0], sizes = [1, 16, 128], strides = [1, 1, 1]} : vector<16x16x128xf32> to vector<1x16x128xf32>
    %161 = vector.shape_cast %160 : vector<1x16x128xf32> to vector<16x128xf32>
    %162 = arith.maximumf %159, %161 : vector<16x128xf32>
    %163 = vector.extract_strided_slice %154 {offsets = [3, 0, 0], sizes = [1, 16, 128], strides = [1, 1, 1]} : vector<16x16x128xf32> to vector<1x16x128xf32>
    %164 = vector.shape_cast %163 : vector<1x16x128xf32> to vector<16x128xf32>
    %165 = arith.maximumf %162, %164 : vector<16x128xf32>
    %166 = vector.extract_strided_slice %154 {offsets = [4, 0, 0], sizes = [1, 16, 128], strides = [1, 1, 1]} : vector<16x16x128xf32> to vector<1x16x128xf32>
    %167 = vector.shape_cast %166 : vector<1x16x128xf32> to vector<16x128xf32>
    %168 = arith.maximumf %165, %167 : vector<16x128xf32>
    %169 = vector.extract_strided_slice %154 {offsets = [5, 0, 0], sizes = [1, 16, 128], strides = [1, 1, 1]} : vector<16x16x128xf32> to vector<1x16x128xf32>
    %170 = vector.shape_cast %169 : vector<1x16x128xf32> to vector<16x128xf32>
    %171 = arith.maximumf %168, %170 : vector<16x128xf32>
    %172 = vector.extract_strided_slice %154 {offsets = [6, 0, 0], sizes = [1, 16, 128], strides = [1, 1, 1]} : vector<16x16x128xf32> to vector<1x16x128xf32>
    %173 = vector.shape_cast %172 : vector<1x16x128xf32> to vector<16x128xf32>
    %174 = arith.maximumf %171, %173 : vector<16x128xf32>
    %175 = vector.extract_strided_slice %154 {offsets = [7, 0, 0], sizes = [1, 16, 128], strides = [1, 1, 1]} : vector<16x16x128xf32> to vector<1x16x128xf32>
    %176 = vector.shape_cast %175 : vector<1x16x128xf32> to vector<16x128xf32>
    %177 = arith.maximumf %174, %176 : vector<16x128xf32>
    %178 = vector.extract_strided_slice %177 {offsets = [0, 0], sizes = [8, 128], strides = [1, 1]} : vector<16x128xf32> to vector<8x128xf32>
    %cst_79 = arith.constant dense<0xFF800000> : vector<128xf32>
    %179 = vector.multi_reduction <maximumf>, %178, %cst_79 [0] : vector<8x128xf32> to vector<128xf32>
    %180 = vector.shape_cast %179 : vector<128xf32> to vector<1x128xf32>
    %181 = vector.extract_strided_slice %177 {offsets = [8, 0], sizes = [8, 128], strides = [1, 1]} : vector<16x128xf32> to vector<8x128xf32>
    %cst_80 = arith.constant dense<0xFF800000> : vector<128xf32>
    %182 = vector.multi_reduction <maximumf>, %181, %cst_80 [0] : vector<8x128xf32> to vector<128xf32>
    %183 = vector.shape_cast %182 : vector<128xf32> to vector<1x128xf32>
    %184 = vector.extract_strided_slice %154 {offsets = [8, 0, 0], sizes = [1, 16, 128], strides = [1, 1, 1]} : vector<16x16x128xf32> to vector<1x16x128xf32>
    %185 = vector.shape_cast %184 : vector<1x16x128xf32> to vector<16x128xf32>
    %186 = vector.extract_strided_slice %154 {offsets = [9, 0, 0], sizes = [1, 16, 128], strides = [1, 1, 1]} : vector<16x16x128xf32> to vector<1x16x128xf32>
    %187 = vector.shape_cast %186 : vector<1x16x128xf32> to vector<16x128xf32>
    %188 = arith.maximumf %185, %187 : vector<16x128xf32>
    %189 = vector.extract_strided_slice %154 {offsets = [10, 0, 0], sizes = [1, 16, 128], strides = [1, 1, 1]} : vector<16x16x128xf32> to vector<1x16x128xf32>
    %190 = vector.shape_cast %189 : vector<1x16x128xf32> to vector<16x128xf32>
    %191 = arith.maximumf %188, %190 : vector<16x128xf32>
    %192 = vector.extract_strided_slice %154 {offsets = [11, 0, 0], sizes = [1, 16, 128], strides = [1, 1, 1]} : vector<16x16x128xf32> to vector<1x16x128xf32>
    %193 = vector.shape_cast %192 : vector<1x16x128xf32> to vector<16x128xf32>
    %194 = arith.maximumf %191, %193 : vector<16x128xf32>
    %195 = vector.extract_strided_slice %154 {offsets = [12, 0, 0], sizes = [1, 16, 128], strides = [1, 1, 1]} : vector<16x16x128xf32> to vector<1x16x128xf32>
    %196 = vector.shape_cast %195 : vector<1x16x128xf32> to vector<16x128xf32>
    %197 = arith.maximumf %194, %196 : vector<16x128xf32>
    %198 = vector.extract_strided_slice %154 {offsets = [13, 0, 0], sizes = [1, 16, 128], strides = [1, 1, 1]} : vector<16x16x128xf32> to vector<1x16x128xf32>
    %199 = vector.shape_cast %198 : vector<1x16x128xf32> to vector<16x128xf32>
    %200 = arith.maximumf %197, %199 : vector<16x128xf32>
    %201 = vector.extract_strided_slice %154 {offsets = [14, 0, 0], sizes = [1, 16, 128], strides = [1, 1, 1]} : vector<16x16x128xf32> to vector<1x16x128xf32>
    %202 = vector.shape_cast %201 : vector<1x16x128xf32> to vector<16x128xf32>
    %203 = arith.maximumf %200, %202 : vector<16x128xf32>
    %204 = vector.extract_strided_slice %154 {offsets = [15, 0, 0], sizes = [1, 16, 128], strides = [1, 1, 1]} : vector<16x16x128xf32> to vector<1x16x128xf32>
    %205 = vector.shape_cast %204 : vector<1x16x128xf32> to vector<16x128xf32>
    %206 = arith.maximumf %203, %205 : vector<16x128xf32>
    %207 = vector.extract_strided_slice %206 {offsets = [0, 0], sizes = [8, 128], strides = [1, 1]} : vector<16x128xf32> to vector<8x128xf32>
    %cst_81 = arith.constant dense<0xFF800000> : vector<128xf32>
    %208 = vector.multi_reduction <maximumf>, %207, %cst_81 [0] : vector<8x128xf32> to vector<128xf32>
    %209 = vector.shape_cast %208 : vector<128xf32> to vector<1x128xf32>
    %210 = vector.extract_strided_slice %206 {offsets = [8, 0], sizes = [8, 128], strides = [1, 1]} : vector<16x128xf32> to vector<8x128xf32>
    %cst_82 = arith.constant dense<0xFF800000> : vector<128xf32>
    %211 = vector.multi_reduction <maximumf>, %210, %cst_82 [0] : vector<8x128xf32> to vector<128xf32>
    %212 = vector.shape_cast %211 : vector<128xf32> to vector<1x128xf32>
    %213 = tpu.concatenate %111, %114, %140, %143, %180, %183, %209, %212 in 0 : vector<1x128xf32>, vector<1x128xf32>, vector<1x128xf32>, vector<1x128xf32>, vector<1x128xf32>, vector<1x128xf32>, vector<1x128xf32>, vector<1x128xf32> -> vector<8x128xf32>
    %c0_83 = arith.constant 0 : index
    %c1_84 = arith.constant 1 : index
    %c0_85 = arith.constant 0 : index
    %214 = vector.load %arg3[%c0_83, %c1_84, %c0_85] : memref<1x36x128xf32, #tpu.memory_space<vmem>>, vector<1x8x128xf32>
    %215 = vector.shape_cast %214 : vector<1x8x128xf32> to vector<8x128xf32>
    %216 = vector.shape_cast %213 : vector<8x128xf32> to vector<1x8x128xf32>
    tpu.vector_store %arg3[%c0_83, %c1_84, %c0_85], %216 {strides = array<i32>} : memref<1x36x128xf32, #tpu.memory_space<vmem>>, vector<1x8x128xf32>,
    %c0_86 = arith.constant 0 : index
    %c0_87 = arith.constant 0 : index
    %c0_88 = arith.constant 0 : index
    %c0_89 = arith.constant 0 : index
    %c0_90 = arith.constant 0 : index
    %217 = vector.load %arg2[%c0_86, %c0_87, %c0_88, %c0_89, %c0_90] : memref<1x8x16x16x128xf32, #tpu.memory_space<vmem>>, vector<1x1x16x16x128xf32>
    %218 = vector.shape_cast %217 : vector<1x1x16x16x128xf32> to vector<16x16x128xf32>
    %c0_91 = arith.constant 0 : index
    %c1_92 = arith.constant 1 : index
    %c0_93 = arith.constant 0 : index
    %c0_94 = arith.constant 0 : index
    %c0_95 = arith.constant 0 : index
    %219 = vector.load %arg2[%c0_91, %c1_92, %c0_93, %c0_94, %c0_95] : memref<1x8x16x16x128xf32, #tpu.memory_space<vmem>>, vector<1x1x16x16x128xf32>
    %220 = vector.shape_cast %219 : vector<1x1x16x16x128xf32> to vector<16x16x128xf32>
    %221 = arith.maximumf %218, %220 : vector<16x16x128xf32>
    %c0_96 = arith.constant 0 : index
    %c2_97 = arith.constant 2 : index
    %c0_98 = arith.constant 0 : index
    %c0_99 = arith.constant 0 : index
    %c0_100 = arith.constant 0 : index
    %222 = vector.load %arg2[%c0_96, %c2_97, %c0_98, %c0_99, %c0_100] : memref<1x8x16x16x128xf32, #tpu.memory_space<vmem>>, vector<1x1x16x16x128xf32>
    %223 = vector.shape_cast %222 : vector<1x1x16x16x128xf32> to vector<16x16x128xf32>
    %224 = arith.maximumf %221, %223 : vector<16x16x128xf32>
    %225 = vector.extract_strided_slice %224 {offsets = [0, 0, 0], sizes = [1, 16, 128], strides = [1, 1, 1]} : vector<16x16x128xf32> to vector<1x16x128xf32>
    %226 = vector.shape_cast %225 : vector<1x16x128xf32> to vector<16x128xf32>
    %227 = vector.extract_strided_slice %224 {offsets = [1, 0, 0], sizes = [1, 16, 128], strides = [1, 1, 1]} : vector<16x16x128xf32> to vector<1x16x128xf32>
    %228 = vector.shape_cast %227 : vector<1x16x128xf32> to vector<16x128xf32>
    %229 = arith.maximumf %226, %228 : vector<16x128xf32>
    %230 = vector.extract_strided_slice %224 {offsets = [2, 0, 0], sizes = [1, 16, 128], strides = [1, 1, 1]} : vector<16x16x128xf32> to vector<1x16x128xf32>
    %231 = vector.shape_cast %230 : vector<1x16x128xf32> to vector<16x128xf32>
    %232 = arith.maximumf %229, %231 : vector<16x128xf32>
    %233 = vector.extract_strided_slice %224 {offsets = [3, 0, 0], sizes = [1, 16, 128], strides = [1, 1, 1]} : vector<16x16x128xf32> to vector<1x16x128xf32>
    %234 = vector.shape_cast %233 : vector<1x16x128xf32> to vector<16x128xf32>
    %235 = arith.maximumf %232, %234 : vector<16x128xf32>
    %236 = vector.extract_strided_slice %224 {offsets = [4, 0, 0], sizes = [1, 16, 128], strides = [1, 1, 1]} : vector<16x16x128xf32> to vector<1x16x128xf32>
    %237 = vector.shape_cast %236 : vector<1x16x128xf32> to vector<16x128xf32>
    %238 = arith.maximumf %235, %237 : vector<16x128xf32>
    %239 = vector.extract_strided_slice %238 {offsets = [0, 0], sizes = [5, 128], strides = [1, 1]} : vector<16x128xf32> to vector<5x128xf32>
    %cst_101 = arith.constant dense<0xFF800000> : vector<128xf32>
    %240 = vector.multi_reduction <maximumf>, %239, %cst_101 [0] : vector<5x128xf32> to vector<128xf32>
    %241 = vector.shape_cast %240 : vector<128xf32> to vector<1x128xf32>
    %cst_102 = arith.constant 0.000000e+00 : f32
    %242 = vector.broadcast %cst_102 : f32 to vector<1x128xf32>
    %243 = arith.maximumf %241, %242 : vector<1x128xf32>
    %244 = vector.extract_strided_slice %238 {offsets = [5, 0], sizes = [6, 128], strides = [1, 1]} : vector<16x128xf32> to vector<6x128xf32>
    %cst_103 = arith.constant dense<0xFF800000> : vector<128xf32>
    %245 = vector.multi_reduction <maximumf>, %244, %cst_103 [0] : vector<6x128xf32> to vector<128xf32>
    %246 = vector.shape_cast %245 : vector<128xf32> to vector<1x128xf32>
    %cst_104 = arith.constant 0.000000e+00 : f32
    %247 = vector.broadcast %cst_104 : f32 to vector<1x128xf32>
    %248 = arith.maximumf %246, %247 : vector<1x128xf32>
    %249 = vector.extract_strided_slice %238 {offsets = [11, 0], sizes = [5, 128], strides = [1, 1]} : vector<16x128xf32> to vector<5x128xf32>
    %cst_105 = arith.constant dense<0xFF800000> : vector<128xf32>
    %250 = vector.multi_reduction <maximumf>, %249, %cst_105 [0] : vector<5x128xf32> to vector<128xf32>
    %251 = vector.shape_cast %250 : vector<128xf32> to vector<1x128xf32>
    %cst_106 = arith.constant 0.000000e+00 : f32
    %252 = vector.broadcast %cst_106 : f32 to vector<1x128xf32>
    %253 = arith.maximumf %251, %252 : vector<1x128xf32>
    %254 = vector.extract_strided_slice %224 {offsets = [5, 0, 0], sizes = [1, 16, 128], strides = [1, 1, 1]} : vector<16x16x128xf32> to vector<1x16x128xf32>
    %255 = vector.shape_cast %254 : vector<1x16x128xf32> to vector<16x128xf32>
    %256 = vector.extract_strided_slice %224 {offsets = [6, 0, 0], sizes = [1, 16, 128], strides = [1, 1, 1]} : vector<16x16x128xf32> to vector<1x16x128xf32>
    %257 = vector.shape_cast %256 : vector<1x16x128xf32> to vector<16x128xf32>
    %258 = arith.maximumf %255, %257 : vector<16x128xf32>
    %259 = vector.extract_strided_slice %224 {offsets = [7, 0, 0], sizes = [1, 16, 128], strides = [1, 1, 1]} : vector<16x16x128xf32> to vector<1x16x128xf32>
    %260 = vector.shape_cast %259 : vector<1x16x128xf32> to vector<16x128xf32>
    %261 = arith.maximumf %258, %260 : vector<16x128xf32>
    %262 = vector.extract_strided_slice %224 {offsets = [8, 0, 0], sizes = [1, 16, 128], strides = [1, 1, 1]} : vector<16x16x128xf32> to vector<1x16x128xf32>
    %263 = vector.shape_cast %262 : vector<1x16x128xf32> to vector<16x128xf32>
    %264 = arith.maximumf %261, %263 : vector<16x128xf32>
    %265 = vector.extract_strided_slice %224 {offsets = [9, 0, 0], sizes = [1, 16, 128], strides = [1, 1, 1]} : vector<16x16x128xf32> to vector<1x16x128xf32>
    %266 = vector.shape_cast %265 : vector<1x16x128xf32> to vector<16x128xf32>
    %267 = arith.maximumf %264, %266 : vector<16x128xf32>
    %268 = vector.extract_strided_slice %224 {offsets = [10, 0, 0], sizes = [1, 16, 128], strides = [1, 1, 1]} : vector<16x16x128xf32> to vector<1x16x128xf32>
    %269 = vector.shape_cast %268 : vector<1x16x128xf32> to vector<16x128xf32>
    %270 = arith.maximumf %267, %269 : vector<16x128xf32>
    %271 = vector.extract_strided_slice %270 {offsets = [0, 0], sizes = [5, 128], strides = [1, 1]} : vector<16x128xf32> to vector<5x128xf32>
    %cst_107 = arith.constant dense<0xFF800000> : vector<128xf32>
    %272 = vector.multi_reduction <maximumf>, %271, %cst_107 [0] : vector<5x128xf32> to vector<128xf32>
    %273 = vector.shape_cast %272 : vector<128xf32> to vector<1x128xf32>
    %cst_108 = arith.constant 0.000000e+00 : f32
    %274 = vector.broadcast %cst_108 : f32 to vector<1x128xf32>
    %275 = arith.maximumf %273, %274 : vector<1x128xf32>
    %276 = vector.extract_strided_slice %270 {offsets = [5, 0], sizes = [6, 128], strides = [1, 1]} : vector<16x128xf32> to vector<6x128xf32>
    %cst_109 = arith.constant dense<0xFF800000> : vector<128xf32>
    %277 = vector.multi_reduction <maximumf>, %276, %cst_109 [0] : vector<6x128xf32> to vector<128xf32>
    %278 = vector.shape_cast %277 : vector<128xf32> to vector<1x128xf32>
    %279 = vector.extract_strided_slice %270 {offsets = [11, 0], sizes = [5, 128], strides = [1, 1]} : vector<16x128xf32> to vector<5x128xf32>
    %cst_110 = arith.constant dense<0xFF800000> : vector<128xf32>
    %280 = vector.multi_reduction <maximumf>, %279, %cst_110 [0] : vector<5x128xf32> to vector<128xf32>
    %281 = vector.shape_cast %280 : vector<128xf32> to vector<1x128xf32>
    %cst_111 = arith.constant 0.000000e+00 : f32
    %282 = vector.broadcast %cst_111 : f32 to vector<1x128xf32>
    %283 = arith.maximumf %281, %282 : vector<1x128xf32>
    %284 = vector.extract_strided_slice %224 {offsets = [11, 0, 0], sizes = [1, 16, 128], strides = [1, 1, 1]} : vector<16x16x128xf32> to vector<1x16x128xf32>
    %285 = vector.shape_cast %284 : vector<1x16x128xf32> to vector<16x128xf32>
    %286 = vector.extract_strided_slice %224 {offsets = [12, 0, 0], sizes = [1, 16, 128], strides = [1, 1, 1]} : vector<16x16x128xf32> to vector<1x16x128xf32>
    %287 = vector.shape_cast %286 : vector<1x16x128xf32> to vector<16x128xf32>
    %288 = arith.maximumf %285, %287 : vector<16x128xf32>
    %289 = vector.extract_strided_slice %224 {offsets = [13, 0, 0], sizes = [1, 16, 128], strides = [1, 1, 1]} : vector<16x16x128xf32> to vector<1x16x128xf32>
    %290 = vector.shape_cast %289 : vector<1x16x128xf32> to vector<16x128xf32>
    %291 = arith.maximumf %288, %290 : vector<16x128xf32>
    %292 = vector.extract_strided_slice %224 {offsets = [14, 0, 0], sizes = [1, 16, 128], strides = [1, 1, 1]} : vector<16x16x128xf32> to vector<1x16x128xf32>
    %293 = vector.shape_cast %292 : vector<1x16x128xf32> to vector<16x128xf32>
    %294 = arith.maximumf %291, %293 : vector<16x128xf32>
    %295 = vector.extract_strided_slice %224 {offsets = [15, 0, 0], sizes = [1, 16, 128], strides = [1, 1, 1]} : vector<16x16x128xf32> to vector<1x16x128xf32>
    %296 = vector.shape_cast %295 : vector<1x16x128xf32> to vector<16x128xf32>
    %297 = arith.maximumf %294, %296 : vector<16x128xf32>
    %298 = vector.extract_strided_slice %297 {offsets = [0, 0], sizes = [5, 128], strides = [1, 1]} : vector<16x128xf32> to vector<5x128xf32>
    %cst_112 = arith.constant dense<0xFF800000> : vector<128xf32>
    %299 = vector.multi_reduction <maximumf>, %298, %cst_112 [0] : vector<5x128xf32> to vector<128xf32>
    %300 = vector.shape_cast %299 : vector<128xf32> to vector<1x128xf32>
    %cst_113 = arith.constant 0.000000e+00 : f32
    %301 = vector.broadcast %cst_113 : f32 to vector<1x128xf32>
    %302 = arith.maximumf %300, %301 : vector<1x128xf32>
    %303 = vector.extract_strided_slice %297 {offsets = [5, 0], sizes = [6, 128], strides = [1, 1]} : vector<16x128xf32> to vector<6x128xf32>
    %cst_114 = arith.constant dense<0xFF800000> : vector<128xf32>
    %304 = vector.multi_reduction <maximumf>, %303, %cst_114 [0] : vector<6x128xf32> to vector<128xf32>
    %305 = vector.shape_cast %304 : vector<128xf32> to vector<1x128xf32>
    %cst_115 = arith.constant 0.000000e+00 : f32
    %306 = vector.broadcast %cst_115 : f32 to vector<1x128xf32>
    %307 = arith.maximumf %305, %306 : vector<1x128xf32>
    %308 = vector.extract_strided_slice %297 {offsets = [11, 0], sizes = [5, 128], strides = [1, 1]} : vector<16x128xf32> to vector<5x128xf32>
    %cst_116 = arith.constant dense<0xFF800000> : vector<128xf32>
    %309 = vector.multi_reduction <maximumf>, %308, %cst_116 [0] : vector<5x128xf32> to vector<128xf32>
    %310 = vector.shape_cast %309 : vector<128xf32> to vector<1x128xf32>
    %cst_117 = arith.constant 0.000000e+00 : f32
    %311 = vector.broadcast %cst_117 : f32 to vector<1x128xf32>
    %312 = arith.maximumf %310, %311 : vector<1x128xf32>
    %c0_118 = arith.constant 0 : index
    %c3_119 = arith.constant 3 : index
    %c0_120 = arith.constant 0 : index
    %c0_121 = arith.constant 0 : index
    %c0_122 = arith.constant 0 : index
    %313 = vector.load %arg2[%c0_118, %c3_119, %c0_120, %c0_121, %c0_122] : memref<1x8x16x16x128xf32, #tpu.memory_space<vmem>>, vector<1x1x16x16x128xf32>
    %314 = vector.shape_cast %313 : vector<1x1x16x16x128xf32> to vector<16x16x128xf32>
    %c0_123 = arith.constant 0 : index
    %c4_124 = arith.constant 4 : index
    %c0_125 = arith.constant 0 : index
    %c0_126 = arith.constant 0 : index
    %c0_127 = arith.constant 0 : index
    %315 = vector.load %arg2[%c0_123, %c4_124, %c0_125, %c0_126, %c0_127] : memref<1x8x16x16x128xf32, #tpu.memory_space<vmem>>, vector<1x1x16x16x128xf32>
    %316 = vector.shape_cast %315 : vector<1x1x16x16x128xf32> to vector<16x16x128xf32>
    %317 = arith.maximumf %314, %316 : vector<16x16x128xf32>
    %c0_128 = arith.constant 0 : index
    %c5_129 = arith.constant 5 : index
    %c0_130 = arith.constant 0 : index
    %c0_131 = arith.constant 0 : index
    %c0_132 = arith.constant 0 : index
    %318 = vector.load %arg2[%c0_128, %c5_129, %c0_130, %c0_131, %c0_132] : memref<1x8x16x16x128xf32, #tpu.memory_space<vmem>>, vector<1x1x16x16x128xf32>
    %319 = vector.shape_cast %318 : vector<1x1x16x16x128xf32> to vector<16x16x128xf32>
    %320 = arith.maximumf %317, %319 : vector<16x16x128xf32>
    %321 = vector.extract_strided_slice %320 {offsets = [0, 0, 0], sizes = [1, 16, 128], strides = [1, 1, 1]} : vector<16x16x128xf32> to vector<1x16x128xf32>
    %322 = vector.shape_cast %321 : vector<1x16x128xf32> to vector<16x128xf32>
    %323 = vector.extract_strided_slice %320 {offsets = [1, 0, 0], sizes = [1, 16, 128], strides = [1, 1, 1]} : vector<16x16x128xf32> to vector<1x16x128xf32>
    %324 = vector.shape_cast %323 : vector<1x16x128xf32> to vector<16x128xf32>
    %325 = arith.maximumf %322, %324 : vector<16x128xf32>
    %326 = vector.extract_strided_slice %320 {offsets = [2, 0, 0], sizes = [1, 16, 128], strides = [1, 1, 1]} : vector<16x16x128xf32> to vector<1x16x128xf32>
    %327 = vector.shape_cast %326 : vector<1x16x128xf32> to vector<16x128xf32>
    %328 = arith.maximumf %325, %327 : vector<16x128xf32>
    %329 = vector.extract_strided_slice %320 {offsets = [3, 0, 0], sizes = [1, 16, 128], strides = [1, 1, 1]} : vector<16x16x128xf32> to vector<1x16x128xf32>
    %330 = vector.shape_cast %329 : vector<1x16x128xf32> to vector<16x128xf32>
    %331 = arith.maximumf %328, %330 : vector<16x128xf32>
    %332 = vector.extract_strided_slice %320 {offsets = [4, 0, 0], sizes = [1, 16, 128], strides = [1, 1, 1]} : vector<16x16x128xf32> to vector<1x16x128xf32>
    %333 = vector.shape_cast %332 : vector<1x16x128xf32> to vector<16x128xf32>
    %334 = arith.maximumf %331, %333 : vector<16x128xf32>
    %335 = vector.extract_strided_slice %334 {offsets = [0, 0], sizes = [5, 128], strides = [1, 1]} : vector<16x128xf32> to vector<5x128xf32>
    %cst_133 = arith.constant dense<0xFF800000> : vector<128xf32>
    %336 = vector.multi_reduction <maximumf>, %335, %cst_133 [0] : vector<5x128xf32> to vector<128xf32>
    %337 = vector.shape_cast %336 : vector<128xf32> to vector<1x128xf32>
    %cst_134 = arith.constant 0.000000e+00 : f32
    %338 = vector.broadcast %cst_134 : f32 to vector<1x128xf32>
    %339 = arith.maximumf %337, %338 : vector<1x128xf32>
    %340 = vector.extract_strided_slice %334 {offsets = [5, 0], sizes = [6, 128], strides = [1, 1]} : vector<16x128xf32> to vector<6x128xf32>
    %cst_135 = arith.constant dense<0xFF800000> : vector<128xf32>
    %341 = vector.multi_reduction <maximumf>, %340, %cst_135 [0] : vector<6x128xf32> to vector<128xf32>
    %342 = vector.shape_cast %341 : vector<128xf32> to vector<1x128xf32>
    %cst_136 = arith.constant 0.000000e+00 : f32
    %343 = vector.broadcast %cst_136 : f32 to vector<1x128xf32>
    %344 = arith.maximumf %342, %343 : vector<1x128xf32>
    %345 = vector.extract_strided_slice %334 {offsets = [11, 0], sizes = [5, 128], strides = [1, 1]} : vector<16x128xf32> to vector<5x128xf32>
    %cst_137 = arith.constant dense<0xFF800000> : vector<128xf32>
    %346 = vector.multi_reduction <maximumf>, %345, %cst_137 [0] : vector<5x128xf32> to vector<128xf32>
    %347 = vector.shape_cast %346 : vector<128xf32> to vector<1x128xf32>
    %cst_138 = arith.constant 0.000000e+00 : f32
    %348 = vector.broadcast %cst_138 : f32 to vector<1x128xf32>
    %349 = arith.maximumf %347, %348 : vector<1x128xf32>
    %350 = vector.extract_strided_slice %320 {offsets = [5, 0, 0], sizes = [1, 16, 128], strides = [1, 1, 1]} : vector<16x16x128xf32> to vector<1x16x128xf32>
    %351 = vector.shape_cast %350 : vector<1x16x128xf32> to vector<16x128xf32>
    %352 = vector.extract_strided_slice %320 {offsets = [6, 0, 0], sizes = [1, 16, 128], strides = [1, 1, 1]} : vector<16x16x128xf32> to vector<1x16x128xf32>
    %353 = vector.shape_cast %352 : vector<1x16x128xf32> to vector<16x128xf32>
    %354 = arith.maximumf %351, %353 : vector<16x128xf32>
    %355 = vector.extract_strided_slice %320 {offsets = [7, 0, 0], sizes = [1, 16, 128], strides = [1, 1, 1]} : vector<16x16x128xf32> to vector<1x16x128xf32>
    %356 = vector.shape_cast %355 : vector<1x16x128xf32> to vector<16x128xf32>
    %357 = arith.maximumf %354, %356 : vector<16x128xf32>
    %358 = vector.extract_strided_slice %320 {offsets = [8, 0, 0], sizes = [1, 16, 128], strides = [1, 1, 1]} : vector<16x16x128xf32> to vector<1x16x128xf32>
    %359 = vector.shape_cast %358 : vector<1x16x128xf32> to vector<16x128xf32>
    %360 = arith.maximumf %357, %359 : vector<16x128xf32>
    %361 = vector.extract_strided_slice %320 {offsets = [9, 0, 0], sizes = [1, 16, 128], strides = [1, 1, 1]} : vector<16x16x128xf32> to vector<1x16x128xf32>
    %362 = vector.shape_cast %361 : vector<1x16x128xf32> to vector<16x128xf32>
    %363 = arith.maximumf %360, %362 : vector<16x128xf32>
    %364 = vector.extract_strided_slice %320 {offsets = [10, 0, 0], sizes = [1, 16, 128], strides = [1, 1, 1]} : vector<16x16x128xf32> to vector<1x16x128xf32>
    %365 = vector.shape_cast %364 : vector<1x16x128xf32> to vector<16x128xf32>
    %366 = arith.maximumf %363, %365 : vector<16x128xf32>
    %367 = vector.extract_strided_slice %366 {offsets = [0, 0], sizes = [5, 128], strides = [1, 1]} : vector<16x128xf32> to vector<5x128xf32>
    %cst_139 = arith.constant dense<0xFF800000> : vector<128xf32>
    %368 = vector.multi_reduction <maximumf>, %367, %cst_139 [0] : vector<5x128xf32> to vector<128xf32>
    %369 = vector.shape_cast %368 : vector<128xf32> to vector<1x128xf32>
    %cst_140 = arith.constant 0.000000e+00 : f32
    %370 = vector.broadcast %cst_140 : f32 to vector<1x128xf32>
    %371 = arith.maximumf %369, %370 : vector<1x128xf32>
    %372 = vector.extract_strided_slice %366 {offsets = [5, 0], sizes = [6, 128], strides = [1, 1]} : vector<16x128xf32> to vector<6x128xf32>
    %cst_141 = arith.constant dense<0xFF800000> : vector<128xf32>
    %373 = vector.multi_reduction <maximumf>, %372, %cst_141 [0] : vector<6x128xf32> to vector<128xf32>
    %374 = vector.shape_cast %373 : vector<128xf32> to vector<1x128xf32>
    %375 = vector.extract_strided_slice %366 {offsets = [11, 0], sizes = [5, 128], strides = [1, 1]} : vector<16x128xf32> to vector<5x128xf32>
    %cst_142 = arith.constant dense<0xFF800000> : vector<128xf32>
    %376 = vector.multi_reduction <maximumf>, %375, %cst_142 [0] : vector<5x128xf32> to vector<128xf32>
    %377 = vector.shape_cast %376 : vector<128xf32> to vector<1x128xf32>
    %cst_143 = arith.constant 0.000000e+00 : f32
    %378 = vector.broadcast %cst_143 : f32 to vector<1x128xf32>
    %379 = arith.maximumf %377, %378 : vector<1x128xf32>
    %380 = vector.extract_strided_slice %320 {offsets = [11, 0, 0], sizes = [1, 16, 128], strides = [1, 1, 1]} : vector<16x16x128xf32> to vector<1x16x128xf32>
    %381 = vector.shape_cast %380 : vector<1x16x128xf32> to vector<16x128xf32>
    %382 = vector.extract_strided_slice %320 {offsets = [12, 0, 0], sizes = [1, 16, 128], strides = [1, 1, 1]} : vector<16x16x128xf32> to vector<1x16x128xf32>
    %383 = vector.shape_cast %382 : vector<1x16x128xf32> to vector<16x128xf32>
    %384 = arith.maximumf %381, %383 : vector<16x128xf32>
    %385 = vector.extract_strided_slice %320 {offsets = [13, 0, 0], sizes = [1, 16, 128], strides = [1, 1, 1]} : vector<16x16x128xf32> to vector<1x16x128xf32>
    %386 = vector.shape_cast %385 : vector<1x16x128xf32> to vector<16x128xf32>
    %387 = arith.maximumf %384, %386 : vector<16x128xf32>
    %388 = vector.extract_strided_slice %320 {offsets = [14, 0, 0], sizes = [1, 16, 128], strides = [1, 1, 1]} : vector<16x16x128xf32> to vector<1x16x128xf32>
    %389 = vector.shape_cast %388 : vector<1x16x128xf32> to vector<16x128xf32>
    %390 = arith.maximumf %387, %389 : vector<16x128xf32>
    %391 = vector.extract_strided_slice %320 {offsets = [15, 0, 0], sizes = [1, 16, 128], strides = [1, 1, 1]} : vector<16x16x128xf32> to vector<1x16x128xf32>
    %392 = vector.shape_cast %391 : vector<1x16x128xf32> to vector<16x128xf32>
    %393 = arith.maximumf %390, %392 : vector<16x128xf32>
    %394 = vector.extract_strided_slice %393 {offsets = [0, 0], sizes = [5, 128], strides = [1, 1]} : vector<16x128xf32> to vector<5x128xf32>
    %cst_144 = arith.constant dense<0xFF800000> : vector<128xf32>
    %395 = vector.multi_reduction <maximumf>, %394, %cst_144 [0] : vector<5x128xf32> to vector<128xf32>
    %396 = vector.shape_cast %395 : vector<128xf32> to vector<1x128xf32>
    %cst_145 = arith.constant 0.000000e+00 : f32
    %397 = vector.broadcast %cst_145 : f32 to vector<1x128xf32>
    %398 = arith.maximumf %396, %397 : vector<1x128xf32>
    %399 = vector.extract_strided_slice %393 {offsets = [5, 0], sizes = [6, 128], strides = [1, 1]} : vector<16x128xf32> to vector<6x128xf32>
    %cst_146 = arith.constant dense<0xFF800000> : vector<128xf32>
    %400 = vector.multi_reduction <maximumf>, %399, %cst_146 [0] : vector<6x128xf32> to vector<128xf32>
    %401 = vector.shape_cast %400 : vector<128xf32> to vector<1x128xf32>
    %cst_147 = arith.constant 0.000000e+00 : f32
    %402 = vector.broadcast %cst_147 : f32 to vector<1x128xf32>
    %403 = arith.maximumf %401, %402 : vector<1x128xf32>
    %404 = vector.extract_strided_slice %393 {offsets = [11, 0], sizes = [5, 128], strides = [1, 1]} : vector<16x128xf32> to vector<5x128xf32>
    %cst_148 = arith.constant dense<0xFF800000> : vector<128xf32>
    %405 = vector.multi_reduction <maximumf>, %404, %cst_148 [0] : vector<5x128xf32> to vector<128xf32>
    %406 = vector.shape_cast %405 : vector<128xf32> to vector<1x128xf32>
    %cst_149 = arith.constant 0.000000e+00 : f32
    %407 = vector.broadcast %cst_149 : f32 to vector<1x128xf32>
    %408 = arith.maximumf %406, %407 : vector<1x128xf32>
    %c0_150 = arith.constant 0 : index
    %c6_151 = arith.constant 6 : index
    %c0_152 = arith.constant 0 : index
    %c0_153 = arith.constant 0 : index
    %c0_154 = arith.constant 0 : index
    %409 = vector.load %arg2[%c0_150, %c6_151, %c0_152, %c0_153, %c0_154] : memref<1x8x16x16x128xf32, #tpu.memory_space<vmem>>, vector<1x1x16x16x128xf32>
    %410 = vector.shape_cast %409 : vector<1x1x16x16x128xf32> to vector<16x16x128xf32>
    %c0_155 = arith.constant 0 : index
    %c7_156 = arith.constant 7 : index
    %c0_157 = arith.constant 0 : index
    %c0_158 = arith.constant 0 : index
    %c0_159 = arith.constant 0 : index
    %411 = vector.load %arg2[%c0_155, %c7_156, %c0_157, %c0_158, %c0_159] : memref<1x8x16x16x128xf32, #tpu.memory_space<vmem>>, vector<1x1x16x16x128xf32>
    %412 = vector.shape_cast %411 : vector<1x1x16x16x128xf32> to vector<16x16x128xf32>
    %413 = arith.maximumf %410, %412 : vector<16x16x128xf32>
    %414 = vector.extract_strided_slice %413 {offsets = [0, 0, 0], sizes = [1, 16, 128], strides = [1, 1, 1]} : vector<16x16x128xf32> to vector<1x16x128xf32>
    %415 = vector.shape_cast %414 : vector<1x16x128xf32> to vector<16x128xf32>
    %416 = vector.extract_strided_slice %413 {offsets = [1, 0, 0], sizes = [1, 16, 128], strides = [1, 1, 1]} : vector<16x16x128xf32> to vector<1x16x128xf32>
    %417 = vector.shape_cast %416 : vector<1x16x128xf32> to vector<16x128xf32>
    %418 = arith.maximumf %415, %417 : vector<16x128xf32>
    %419 = vector.extract_strided_slice %413 {offsets = [2, 0, 0], sizes = [1, 16, 128], strides = [1, 1, 1]} : vector<16x16x128xf32> to vector<1x16x128xf32>
    %420 = vector.shape_cast %419 : vector<1x16x128xf32> to vector<16x128xf32>
    %421 = arith.maximumf %418, %420 : vector<16x128xf32>
    %422 = vector.extract_strided_slice %413 {offsets = [3, 0, 0], sizes = [1, 16, 128], strides = [1, 1, 1]} : vector<16x16x128xf32> to vector<1x16x128xf32>
    %423 = vector.shape_cast %422 : vector<1x16x128xf32> to vector<16x128xf32>
    %424 = arith.maximumf %421, %423 : vector<16x128xf32>
    %425 = vector.extract_strided_slice %413 {offsets = [4, 0, 0], sizes = [1, 16, 128], strides = [1, 1, 1]} : vector<16x16x128xf32> to vector<1x16x128xf32>
    %426 = vector.shape_cast %425 : vector<1x16x128xf32> to vector<16x128xf32>
    %427 = arith.maximumf %424, %426 : vector<16x128xf32>
    %428 = vector.extract_strided_slice %427 {offsets = [0, 0], sizes = [5, 128], strides = [1, 1]} : vector<16x128xf32> to vector<5x128xf32>
    %cst_160 = arith.constant dense<0xFF800000> : vector<128xf32>
    %429 = vector.multi_reduction <maximumf>, %428, %cst_160 [0] : vector<5x128xf32> to vector<128xf32>
    %430 = vector.shape_cast %429 : vector<128xf32> to vector<1x128xf32>
    %cst_161 = arith.constant 0.000000e+00 : f32
    %431 = vector.broadcast %cst_161 : f32 to vector<1x128xf32>
    %432 = arith.maximumf %430, %431 : vector<1x128xf32>
    %433 = vector.extract_strided_slice %427 {offsets = [5, 0], sizes = [6, 128], strides = [1, 1]} : vector<16x128xf32> to vector<6x128xf32>
    %cst_162 = arith.constant dense<0xFF800000> : vector<128xf32>
    %434 = vector.multi_reduction <maximumf>, %433, %cst_162 [0] : vector<6x128xf32> to vector<128xf32>
    %435 = vector.shape_cast %434 : vector<128xf32> to vector<1x128xf32>
    %cst_163 = arith.constant 0.000000e+00 : f32
    %436 = vector.broadcast %cst_163 : f32 to vector<1x128xf32>
    %437 = arith.maximumf %435, %436 : vector<1x128xf32>
    %438 = vector.extract_strided_slice %427 {offsets = [11, 0], sizes = [5, 128], strides = [1, 1]} : vector<16x128xf32> to vector<5x128xf32>
    %cst_164 = arith.constant dense<0xFF800000> : vector<128xf32>
    %439 = vector.multi_reduction <maximumf>, %438, %cst_164 [0] : vector<5x128xf32> to vector<128xf32>
    %440 = vector.shape_cast %439 : vector<128xf32> to vector<1x128xf32>
    %cst_165 = arith.constant 0.000000e+00 : f32
    %441 = vector.broadcast %cst_165 : f32 to vector<1x128xf32>
    %442 = arith.maximumf %440, %441 : vector<1x128xf32>
    %443 = vector.extract_strided_slice %413 {offsets = [5, 0, 0], sizes = [1, 16, 128], strides = [1, 1, 1]} : vector<16x16x128xf32> to vector<1x16x128xf32>
    %444 = vector.shape_cast %443 : vector<1x16x128xf32> to vector<16x128xf32>
    %445 = vector.extract_strided_slice %413 {offsets = [6, 0, 0], sizes = [1, 16, 128], strides = [1, 1, 1]} : vector<16x16x128xf32> to vector<1x16x128xf32>
    %446 = vector.shape_cast %445 : vector<1x16x128xf32> to vector<16x128xf32>
    %447 = arith.maximumf %444, %446 : vector<16x128xf32>
    %448 = vector.extract_strided_slice %413 {offsets = [7, 0, 0], sizes = [1, 16, 128], strides = [1, 1, 1]} : vector<16x16x128xf32> to vector<1x16x128xf32>
    %449 = vector.shape_cast %448 : vector<1x16x128xf32> to vector<16x128xf32>
    %450 = arith.maximumf %447, %449 : vector<16x128xf32>
    %451 = vector.extract_strided_slice %413 {offsets = [8, 0, 0], sizes = [1, 16, 128], strides = [1, 1, 1]} : vector<16x16x128xf32> to vector<1x16x128xf32>
    %452 = vector.shape_cast %451 : vector<1x16x128xf32> to vector<16x128xf32>
    %453 = arith.maximumf %450, %452 : vector<16x128xf32>
    %454 = vector.extract_strided_slice %413 {offsets = [9, 0, 0], sizes = [1, 16, 128], strides = [1, 1, 1]} : vector<16x16x128xf32> to vector<1x16x128xf32>
    %455 = vector.shape_cast %454 : vector<1x16x128xf32> to vector<16x128xf32>
    %456 = arith.maximumf %453, %455 : vector<16x128xf32>
    %457 = vector.extract_strided_slice %413 {offsets = [10, 0, 0], sizes = [1, 16, 128], strides = [1, 1, 1]} : vector<16x16x128xf32> to vector<1x16x128xf32>
    %458 = vector.shape_cast %457 : vector<1x16x128xf32> to vector<16x128xf32>
    %459 = arith.maximumf %456, %458 : vector<16x128xf32>
    %460 = vector.extract_strided_slice %459 {offsets = [0, 0], sizes = [5, 128], strides = [1, 1]} : vector<16x128xf32> to vector<5x128xf32>
    %cst_166 = arith.constant dense<0xFF800000> : vector<128xf32>
    %461 = vector.multi_reduction <maximumf>, %460, %cst_166 [0] : vector<5x128xf32> to vector<128xf32>
    %462 = vector.shape_cast %461 : vector<128xf32> to vector<1x128xf32>
    %cst_167 = arith.constant 0.000000e+00 : f32
    %463 = vector.broadcast %cst_167 : f32 to vector<1x128xf32>
    %464 = arith.maximumf %462, %463 : vector<1x128xf32>
    %465 = vector.extract_strided_slice %459 {offsets = [5, 0], sizes = [6, 128], strides = [1, 1]} : vector<16x128xf32> to vector<6x128xf32>
    %cst_168 = arith.constant dense<0xFF800000> : vector<128xf32>
    %466 = vector.multi_reduction <maximumf>, %465, %cst_168 [0] : vector<6x128xf32> to vector<128xf32>
    %467 = vector.shape_cast %466 : vector<128xf32> to vector<1x128xf32>
    %cst_169 = arith.constant 0.000000e+00 : f32
    %468 = vector.broadcast %cst_169 : f32 to vector<1x128xf32>
    %469 = arith.maximumf %467, %468 : vector<1x128xf32>
    %470 = vector.extract_strided_slice %459 {offsets = [11, 0], sizes = [5, 128], strides = [1, 1]} : vector<16x128xf32> to vector<5x128xf32>
    %cst_170 = arith.constant dense<0xFF800000> : vector<128xf32>
    %471 = vector.multi_reduction <maximumf>, %470, %cst_170 [0] : vector<5x128xf32> to vector<128xf32>
    %472 = vector.shape_cast %471 : vector<128xf32> to vector<1x128xf32>
    %cst_171 = arith.constant 0.000000e+00 : f32
    %473 = vector.broadcast %cst_171 : f32 to vector<1x128xf32>
    %474 = arith.maximumf %472, %473 : vector<1x128xf32>
    %475 = vector.extract_strided_slice %413 {offsets = [11, 0, 0], sizes = [1, 16, 128], strides = [1, 1, 1]} : vector<16x16x128xf32> to vector<1x16x128xf32>
    %476 = vector.shape_cast %475 : vector<1x16x128xf32> to vector<16x128xf32>
    %477 = vector.extract_strided_slice %413 {offsets = [12, 0, 0], sizes = [1, 16, 128], strides = [1, 1, 1]} : vector<16x16x128xf32> to vector<1x16x128xf32>
    %478 = vector.shape_cast %477 : vector<1x16x128xf32> to vector<16x128xf32>
    %479 = arith.maximumf %476, %478 : vector<16x128xf32>
    %480 = vector.extract_strided_slice %413 {offsets = [13, 0, 0], sizes = [1, 16, 128], strides = [1, 1, 1]} : vector<16x16x128xf32> to vector<1x16x128xf32>
    %481 = vector.shape_cast %480 : vector<1x16x128xf32> to vector<16x128xf32>
    %482 = arith.maximumf %479, %481 : vector<16x128xf32>
    %483 = vector.extract_strided_slice %413 {offsets = [14, 0, 0], sizes = [1, 16, 128], strides = [1, 1, 1]} : vector<16x16x128xf32> to vector<1x16x128xf32>
    %484 = vector.shape_cast %483 : vector<1x16x128xf32> to vector<16x128xf32>
    %485 = arith.maximumf %482, %484 : vector<16x128xf32>
    %486 = vector.extract_strided_slice %413 {offsets = [15, 0, 0], sizes = [1, 16, 128], strides = [1, 1, 1]} : vector<16x16x128xf32> to vector<1x16x128xf32>
    %487 = vector.shape_cast %486 : vector<1x16x128xf32> to vector<16x128xf32>
    %488 = arith.maximumf %485, %487 : vector<16x128xf32>
    %489 = vector.extract_strided_slice %488 {offsets = [0, 0], sizes = [5, 128], strides = [1, 1]} : vector<16x128xf32> to vector<5x128xf32>
    %cst_172 = arith.constant dense<0xFF800000> : vector<128xf32>
    %490 = vector.multi_reduction <maximumf>, %489, %cst_172 [0] : vector<5x128xf32> to vector<128xf32>
    %491 = vector.shape_cast %490 : vector<128xf32> to vector<1x128xf32>
    %cst_173 = arith.constant 0.000000e+00 : f32
    %492 = vector.broadcast %cst_173 : f32 to vector<1x128xf32>
    %493 = arith.maximumf %491, %492 : vector<1x128xf32>
    %494 = vector.extract_strided_slice %488 {offsets = [5, 0], sizes = [6, 128], strides = [1, 1]} : vector<16x128xf32> to vector<6x128xf32>
    %cst_174 = arith.constant dense<0xFF800000> : vector<128xf32>
    %495 = vector.multi_reduction <maximumf>, %494, %cst_174 [0] : vector<6x128xf32> to vector<128xf32>
    %496 = vector.shape_cast %495 : vector<128xf32> to vector<1x128xf32>
    %cst_175 = arith.constant 0.000000e+00 : f32
    %497 = vector.broadcast %cst_175 : f32 to vector<1x128xf32>
    %498 = arith.maximumf %496, %497 : vector<1x128xf32>
    %499 = vector.extract_strided_slice %488 {offsets = [11, 0], sizes = [5, 128], strides = [1, 1]} : vector<16x128xf32> to vector<5x128xf32>
    %cst_176 = arith.constant dense<0xFF800000> : vector<128xf32>
    %500 = vector.multi_reduction <maximumf>, %499, %cst_176 [0] : vector<5x128xf32> to vector<128xf32>
    %501 = vector.shape_cast %500 : vector<128xf32> to vector<1x128xf32>
    %cst_177 = arith.constant 0.000000e+00 : f32
    %502 = vector.broadcast %cst_177 : f32 to vector<1x128xf32>
    %503 = arith.maximumf %501, %502 : vector<1x128xf32>
    %504 = tpu.concatenate %243, %248, %253, %275, %278, %283, %302, %307, %312, %339, %344, %349, %371, %374, %379, %398 in 0 : vector<1x128xf32>, vector<1x128xf32>, vector<1x128xf32>, vector<1x128xf32>, vector<1x128xf32>, vector<1x128xf32>, vector<1x128xf32>, vector<1x128xf32>, vector<1x128xf32>, vector<1x128xf32>, vector<1x128xf32>, vector<1x128xf32>, vector<1x128xf32>, vector<1x128xf32>, vector<1x128xf32>, vector<1x128xf32> -> vector<16x128xf32>
    %505 = tpu.concatenate %403, %408, %432, %437, %442, %464, %469, %474, %493, %498, %503 in 0 : vector<1x128xf32>, vector<1x128xf32>, vector<1x128xf32>, vector<1x128xf32>, vector<1x128xf32>, vector<1x128xf32>, vector<1x128xf32>, vector<1x128xf32>, vector<1x128xf32>, vector<1x128xf32>, vector<1x128xf32> -> vector<11x128xf32>
    %506 = tpu.concatenate %504, %505 in 0 : vector<16x128xf32>, vector<11x128xf32> -> vector<27x128xf32>
    %c0_178 = arith.constant 0 : index
    %c9 = arith.constant 9 : index
    %c0_179 = arith.constant 0 : index
    %507 = vector.load %arg3[%c0_178, %c9, %c0_179] : memref<1x36x128xf32, #tpu.memory_space<vmem>>, vector<1x27x128xf32>
    %508 = vector.shape_cast %507 : vector<1x27x128xf32> to vector<27x128xf32>
    %509 = vector.shape_cast %506 : vector<27x128xf32> to vector<1x27x128xf32>
    tpu.vector_store %arg3[%c0_178, %c9, %c0_179], %509 {strides = array<i32>} : memref<1x36x128xf32, #tpu.memory_space<vmem>>, vector<1x27x128xf32>,
    return
  }
  func.func @transform_0(%arg0: i32, %arg1: i32) -> (i32, i32, i32, i32, i32) {
    %c0_i32 = arith.constant 0 : i32
    %c0_i32_0 = arith.constant 0 : i32
    %c0_i32_1 = arith.constant 0 : i32
    %c0_i32_2 = arith.constant 0 : i32
    return %arg0, %c0_i32, %c0_i32_0, %c0_i32_1, %arg1 : i32, i32, i32, i32, i32
  }
  func.func @transform_1(%arg0: i32, %arg1: i32) -> (i32, i32, i32) {
    %c0_i32 = arith.constant 0 : i32
    %c0_i32_0 = arith.constant 0 : i32
    return %arg0, %c0_i32, %arg1 : i32, i32, i32
  }
}

</mosaic_0001>

<llo_original>
// kernel: tpu_custom_call.1
$region0: #{tpu_custom_call.1}
  #allocation0 [shape = 'u32[]', space=smem, size = 0x4, offset = 0x4, fixed_abs, tag = 'smem constant byte address 0x4 - core index']
  #allocation1 [shape = 'u32[72,128]{1,0:T(1,128)}', space=vmem, size = 0x9000, scoped, tag = 'internal scratch']
  %s0 = inlined_call_operand.hbm [shape: f32[2,8,16,16,128], index: 0, kind: input, shape index: {}]
  %s1 = inlined_call_operand.vmem [shape: f32[2,36,128], index: 1, kind: output, shape index: {}]
  %s2 = sld [smem:[#allocation0]]
  $region41: #{tpu_custom_call.1} parent=0
    _
  %s4 = ssub.s32 1, %s2
  %s5 = scalar_select 0, %s4, %s2
  $region1: #{tpu_custom_call.1} parent=0
    #allocation2 [shape = 'u8[2097152]{0}', space=vmem, size = 0x200000, scoped, tag = 'input window, operand 0']
    #allocation3 [shape = 's32[2]{0}', space=sflag, size = 0x8, scoped, tag = 'scoped memory for tpu_custom_call.1']
    %6 = vsyncpa [#allocation3], 0
    %s7 = scalar_lea.sflag [#allocation3], 1
    %8 = vsyncpa %s7, 0
    loop: start=0, step=1, limit=4
    $region2: #{tpu_custom_call.1} parent=1 // loop_pre_header
      _
    $region3: #{tpu_custom_call.1} parent=1 // loop_header
      %s10 = sphi 0, %s14
      %p11 = scmp.ge.s32.totalorder %s10, 4
      %s17 = sphi 0, %s29
      %s18 = sphi 0, %s25
      %s19 = sphi 0, %s17
      %s20 = sphi 0, %s18
      %s21 = sphi 0, %s19
      %s22 = sphi 0, %s20
      %s34 = sphi 0, %s36
      %s37 = sphi 0, %s34
      %s38 = sphi 0, %s37
      %s54 = sphi 0, %s38
      %s62 = sphi 0, %s64
      %s65 = sphi 0, %s62
      %s66 = sphi 0, %s65
      %s82 = sphi 0, %s66
    $region4: #{tpu_custom_call.1} parent=1 // loop_header_branch
      %13 = sbr.rel (%p11) target = $region8
    $region5: #{tpu_custom_call.1} parent=1 // loop_body
      %s15 = ssub.s32 %s10, 1
      %s16 = ssub.s32 %s10, 2
      %s23 = sadd.s32 1, %s18
      %p24 = scmp.ge.s32.totalorder %s23, 1
      %s25 = scalar_select %p24, 0, %s23
      %s26 = sadd.s32 1, %s17
      %s27 = scalar_select %p24, %s26, %s17
      %p28 = scmp.ge.s32.totalorder %s27, 2
      %s29 = scalar_select %p28, 0, %s27
      %s30 = ssub.s32 %s17, %s29
      %s31 = ssub.s32 %s18, %s25
      %s32 = sor.u32 %s30, %s31
      %p33 = scmp.eq.s32.totalorder %s32, 0
      %s35 = sadd.s32 %s34, 1
      %s36 = scalar_select %p33, %s34, %s35
      %p39 = pneg %p33
      %p40 = scmp.eq.s32.totalorder %s10, 1
      %p41 = por %p39, %p40
      %p42 = scmp.ne.s32.totalorder %s34, %s37
      %p43 = scmp.eq.s32.totalorder %s10, 0
      %p44 = por %p42, %p43
      %p45 = scmp.ne.s32.totalorder %s34, %s37
      %p46 = scmp.eq.s32.totalorder %s15, 1
      %p47 = por %p45, %p46
      %p48 = scmp.ne.s32.totalorder %s37, %s38
      %p49 = scmp.eq.s32.totalorder %s15, 0
      %p50 = por %p48, %p49
      %p51 = scmp.ne.s32.totalorder %s37, %s38
      %p52 = scmp.eq.s32.totalorder %s16, 1
      %p53 = por %p51, %p52
      %p55 = scmp.ne.s32.totalorder %s38, %s54
      %p56 = scmp.eq.s32.totalorder %s16, 0
      %p57 = por %p55, %p56
      %s58 = ssub.s32 %s17, %s29
      %s59 = ssub.s32 %s18, %s25
      %s60 = sor.u32 %s58, %s59
      %p61 = scmp.eq.s32.totalorder %s60, 0
      %s63 = sadd.s32 %s62, 1
      %s64 = scalar_select %p61, %s62, %s63
      %p67 = pneg %p61
      %p68 = scmp.eq.s32.totalorder %s10, 1
      %p69 = por %p67, %p68
      %p70 = scmp.ne.s32.totalorder %s62, %s65
      %p71 = scmp.eq.s32.totalorder %s10, 0
      %p72 = por %p70, %p71
      %p73 = scmp.ne.s32.totalorder %s62, %s65
      %p74 = scmp.eq.s32.totalorder %s15, 1
      %p75 = por %p73, %p74
      %p76 = scmp.ne.s32.totalorder %s65, %s66
      %p77 = scmp.eq.s32.totalorder %s15, 0
      %p78 = por %p76, %p77
      %p79 = scmp.ne.s32.totalorder %s65, %s66
      %p80 = scmp.eq.s32.totalorder %s16, 1
      %p81 = por %p79, %p80
      %p83 = scmp.ne.s32.totalorder %s66, %s82
      %p84 = scmp.eq.s32.totalorder %s16, 0
      %p85 = por %p83, %p84
      %p86 = scmp.le.s32.totalorder 1, %s10
      %p87 = scmp.lt.s32.totalorder %s10, 3
      %p88 = pnand %p86, %p87
      %p89 = pneg %p88
      // Predicated region
      $region9: #{tpu_custom_call.1} parent=5 // pred_check
        _
      $region10: #{tpu_custom_call.1} parent=5 // pred_check_branch
        %91 = sbr.rel (%p88) target = $region12
      $region11: #{tpu_custom_call.1} parent=5 // pred_region
        %s92 = ssub.s32 %s10, 1
      $region12: #{tpu_custom_call.1} parent=5 // pred_fallthru
        _
      %p93 = scmp.lt.s32.totalorder %s10, 2
      // Predicated region
      $region13: #{tpu_custom_call.1} parent=5 // pred_check
        %p94 = pneg %p93
      $region14: #{tpu_custom_call.1} parent=5 // pred_check_branch
        %96 = sbr.rel (%p94) target = $region16
      $region15: #{tpu_custom_call.1} parent=5 // pred_region
        // Predicated region
        $region17: #{tpu_custom_call.1} parent=15 // pred_check
          %p97 = pneg %p44
        $region18: #{tpu_custom_call.1} parent=15 // pred_check_branch
          %99 = sbr.rel (%p97) target = $region20
        $region19: #{tpu_custom_call.1} parent=15 // pred_region
          %s100 = sand.u32 %s34, 1
          %s101 = scalar_lea.sflag [#allocation3], %s100
          %s102 = sand.u32 %s34, 1
          %s103 = smul.addr %s102, 2048
          %s104 = scalar_lea.vmem [#allocation2], %s103
          %106 = vsyncadd %s101, 0
          %s107 = smul.addr %s17, 256
          %s108 = sadd.s32 %s18, %s107
          %s109 = smul.addr %s108, 8
          %s110 = scalar_lea.hbm %s0, %s109
          %s111 = sshll.u32 %s110, 4
          %s112 = int_to_ptr.hbm [resolvable:$true] %s111
          %s113 = sshll.u32 %s104, 4
          %s114 = int_to_ptr.vmem [resolvable:$true] %s113
          %119 = dma.hbm_to_vmem [thread:$0]  %s112, 32768, %s114, %s101, 128, 128, 8
        $region20: #{tpu_custom_call.1} parent=15 // pred_fallthru
          _
      $region16: #{tpu_custom_call.1} parent=5 // pred_fallthru
        _
      %p120 = scmp.le.s32.totalorder 1, %s10
      %p121 = scmp.lt.s32.totalorder %s10, 3
      %p122 = pnand %p120, %p121
      %p123 = pneg %p122
      // Predicated region
      $region21: #{tpu_custom_call.1} parent=5 // pred_check
        _
      $region22: #{tpu_custom_call.1} parent=5 // pred_check_branch
        %125 = sbr.rel (%p122) target = $region24
      $region23: #{tpu_custom_call.1} parent=5 // pred_region
        %s126 = ssub.s32 %s10, 1
        %s127 = sand.u32 %s37, 1
        %s128 = scalar_lea.sflag [#allocation3], %s127
        %s129 = sand.u32 %s37, 1
        %s130 = smul.addr %s129, 2048
        %s131 = scalar_lea.vmem [#allocation2], %s130
        // Predicated region
        $region25: #{tpu_custom_call.1} parent=23 // pred_check
          %p132 = pneg %p50
        $region26: #{tpu_custom_call.1} parent=23 // pred_check_branch
          %134 = sbr.rel (%p132) target = $region28
        $region27: #{tpu_custom_call.1} parent=23 // pred_region
          %136 = dma.done %s128, 32768
        $region28: #{tpu_custom_call.1} parent=23 // pred_fallthru
          _
        %s137 = sand.u32 %s37, 1
        %s138 = scalar_lea.sflag [#allocation3], %s137
        %s139 = sand.u32 %s37, 1
        %s140 = smul.addr %s139, 2048
        %s141 = scalar_lea.vmem [#allocation2], %s140
        %p142 = pneg %p50
        %p143 = pneg %p47
        %p144 = pneg %p78
        %p145 = pneg %p75
        %p146 = scmp.lt.s32.totalorder %s19, 1
        %s147 = scalar_select %p146, %s19, 1
        %p148 = scmp.lt.s32.totalorder %s20, 0
        %s149 = scalar_select %p148, %s20, 0
        %s150 = smul.addr %s147, 5
        %s151 = sadd.s32 %s149, %s150
        %s152 = smul.addr %s151, 8
        %s153 = scalar_lea.vmem %s1, %s152
        %p154 = scmp.lt.s32.totalorder %s19, 1
        %s155 = scalar_select %p154, %s19, 1
        %p156 = scmp.lt.s32.totalorder %s20, 0
        %s157 = scalar_select %p156, %s20, 0
        %s158 = smul.addr %s155, 5
        %s159 = sadd.s32 %s157, %s158
        %s160 = smul.addr %s159, 8
        %s161 = scalar_lea.vmem %s1, %s160
        %v162 = vld [vmem:[%s131] sm:$0xff]
        %v163 = vld [vmem:[%s131 + $0x8] sm:$0xff]
        %v164 = vld [vmem:[%s131 + $0x10] sm:$0xff]
        %v165 = vld [vmem:[%s131 + $0x18] sm:$0xff]
        %v166 = vld [vmem:[%s131 + $0x20] sm:$0xff]
        %v167 = vld [vmem:[%s131 + $0x28] sm:$0xff]
        %v168 = vld [vmem:[%s131 + $0x30] sm:$0xff]
        %v169 = vld [vmem:[%s131 + $0x38] sm:$0xff]
        %v170 = vld [vmem:[%s131 + $0x40] sm:$0xff]
        %v171 = vld [vmem:[%s131 + $0x48] sm:$0xff]
        %v172 = vld [vmem:[%s131 + $0x50] sm:$0xff]
        %v173 = vld [vmem:[%s131 + $0x58] sm:$0xff]
        %v174 = vld [vmem:[%s131 + $0x60] sm:$0xff]
        %v175 = vld [vmem:[%s131 + $0x68] sm:$0xff]
        %v176 = vld [vmem:[%s131 + $0x70] sm:$0xff]
        %v177 = vld [vmem:[%s131 + $0x78] sm:$0xff]
        %v178 = vld [vmem:[%s131 + $0x80] sm:$0xff]
        %v179 = vld [vmem:[%s131 + $0x88] sm:$0xff]
        %v180 = vld [vmem:[%s131 + $0x90] sm:$0xff]
        %v181 = vld [vmem:[%s131 + $0x98] sm:$0xff]
        %v182 = vld [vmem:[%s131 + $0xa0] sm:$0xff]
        %v183 = vld [vmem:[%s131 + $0xa8] sm:$0xff]
        %v184 = vld [vmem:[%s131 + $0xb0] sm:$0xff]
        %v185 = vld [vmem:[%s131 + $0xb8] sm:$0xff]
        %v186 = vld [vmem:[%s131 + $0xc0] sm:$0xff]
        %v187 = vld [vmem:[%s131 + $0xc8] sm:$0xff]
        %v188 = vld [vmem:[%s131 + $0xd0] sm:$0xff]
        %v189 = vld [vmem:[%s131 + $0xd8] sm:$0xff]
        %v190 = vld [vmem:[%s131 + $0xe0] sm:$0xff]
        %v191 = vld [vmem:[%s131 + $0xe8] sm:$0xff]
        %v192 = vld [vmem:[%s131 + $0xf0] sm:$0xff]
        %v193 = vld [vmem:[%s131 + $0xf8] sm:$0xff]
        %s194 = scalar_lea.vmem %s131, 256 [#allocation2]
        %v195 = vld [vmem:[%s194] sm:$0xff]
        %v196 = vld [vmem:[%s194 + $0x8] sm:$0xff]
        %v197 = vld [vmem:[%s194 + $0x10] sm:$0xff]
        %v198 = vld [vmem:[%s194 + $0x18] sm:$0xff]
        %v199 = vld [vmem:[%s194 + $0x20] sm:$0xff]
        %v200 = vld [vmem:[%s194 + $0x28] sm:$0xff]
        %v201 = vld [vmem:[%s194 + $0x30] sm:$0xff]
        %v202 = vld [vmem:[%s194 + $0x38] sm:$0xff]
        %v203 = vld [vmem:[%s194 + $0x40] sm:$0xff]
        %v204 = vld [vmem:[%s194 + $0x48] sm:$0xff]
        %v205 = vld [vmem:[%s194 + $0x50] sm:$0xff]
        %v206 = vld [vmem:[%s194 + $0x58] sm:$0xff]
        %v207 = vld [vmem:[%s194 + $0x60] sm:$0xff]
        %v208 = vld [vmem:[%s194 + $0x68] sm:$0xff]
        %v209 = vld [vmem:[%s194 + $0x70] sm:$0xff]
        %v210 = vld [vmem:[%s194 + $0x78] sm:$0xff]
        %v211 = vld [vmem:[%s194 + $0x80] sm:$0xff]
        %v212 = vld [vmem:[%s194 + $0x88] sm:$0xff]
        %v213 = vld [vmem:[%s194 + $0x90] sm:$0xff]
        %v214 = vld [vmem:[%s194 + $0x98] sm:$0xff]
        %v215 = vld [vmem:[%s194 + $0xa0] sm:$0xff]
        %v216 = vld [vmem:[%s194 + $0xa8] sm:$0xff]
        %v217 = vld [vmem:[%s194 + $0xb0] sm:$0xff]
        %v218 = vld [vmem:[%s194 + $0xb8] sm:$0xff]
        %v219 = vld [vmem:[%s194 + $0xc0] sm:$0xff]
        %v220 = vld [vmem:[%s194 + $0xc8] sm:$0xff]
        %v221 = vld [vmem:[%s194 + $0xd0] sm:$0xff]
        %v222 = vld [vmem:[%s194 + $0xd8] sm:$0xff]
        %v223 = vld [vmem:[%s194 + $0xe0] sm:$0xff]
        %v224 = vld [vmem:[%s194 + $0xe8] sm:$0xff]
        %v225 = vld [vmem:[%s194 + $0xf0] sm:$0xff]
        %v226 = vld [vmem:[%s194 + $0xf8] sm:$0xff]
        %v227 = vmax.f32 %v162, %v195
        %v228 = vmax.f32 %v163, %v196
        %v229 = vmax.f32 %v164, %v197
        %v230 = vmax.f32 %v165, %v198
        %v231 = vmax.f32 %v166, %v199
        %v232 = vmax.f32 %v167, %v200
        %v233 = vmax.f32 %v168, %v201
        %v234 = vmax.f32 %v169, %v202
        %v235 = vmax.f32 %v170, %v203
        %v236 = vmax.f32 %v171, %v204
        %v237 = vmax.f32 %v172, %v205
        %v238 = vmax.f32 %v173, %v206
        %v239 = vmax.f32 %v174, %v207
        %v240 = vmax.f32 %v175, %v208
        %v241 = vmax.f32 %v176, %v209
        %v242 = vmax.f32 %v177, %v210
        %v243 = vmax.f32 %v178, %v211
        %v244 = vmax.f32 %v179, %v212
        %v245 = vmax.f32 %v180, %v213
        %v246 = vmax.f32 %v181, %v214
        %v247 = vmax.f32 %v182, %v215
        %v248 = vmax.f32 %v183, %v216
        %v249 = vmax.f32 %v184, %v217
        %v250 = vmax.f32 %v185, %v218
        %v251 = vmax.f32 %v186, %v219
        %v252 = vmax.f32 %v187, %v220
        %v253 = vmax.f32 %v188, %v221
        %v254 = vmax.f32 %v189, %v222
        %v255 = vmax.f32 %v190, %v223
        %v256 = vmax.f32 %v191, %v224
        %v257 = vmax.f32 %v192, %v225
        %v258 = vmax.f32 %v193, %v226
        %s259 = scalar_lea.vmem %s131, 512 [#allocation2]
        %v260 = vld [vmem:[%s259] sm:$0xff]
        %v261 = vld [vmem:[%s259 + $0x8] sm:$0xff]
        %v262 = vld [vmem:[%s259 + $0x10] sm:$0xff]
        %v263 = vld [vmem:[%s259 + $0x18] sm:$0xff]
        %v264 = vld [vmem:[%s259 + $0x20] sm:$0xff]
        %v265 = vld [vmem:[%s259 + $0x28] sm:$0xff]
        %v266 = vld [vmem:[%s259 + $0x30] sm:$0xff]
        %v267 = vld [vmem:[%s259 + $0x38] sm:$0xff]
        %v268 = vld [vmem:[%s259 + $0x40] sm:$0xff]
        %v269 = vld [vmem:[%s259 + $0x48] sm:$0xff]
        %v270 = vld [vmem:[%s259 + $0x50] sm:$0xff]
        %v271 = vld [vmem:[%s259 + $0x58] sm:$0xff]
        %v272 = vld [vmem:[%s259 + $0x60] sm:$0xff]
        %v273 = vld [vmem:[%s259 + $0x68] sm:$0xff]
        %v274 = vld [vmem:[%s259 + $0x70] sm:$0xff]
        %v275 = vld [vmem:[%s259 + $0x78] sm:$0xff]
        %v276 = vld [vmem:[%s259 + $0x80] sm:$0xff]
        %v277 = vld [vmem:[%s259 + $0x88] sm:$0xff]
        %v278 = vld [vmem:[%s259 + $0x90] sm:$0xff]
        %v279 = vld [vmem:[%s259 + $0x98] sm:$0xff]
        %v280 = vld [vmem:[%s259 + $0xa0] sm:$0xff]
        %v281 = vld [vmem:[%s259 + $0xa8] sm:$0xff]
        %v282 = vld [vmem:[%s259 + $0xb0] sm:$0xff]
        %v283 = vld [vmem:[%s259 + $0xb8] sm:$0xff]
        %v284 = vld [vmem:[%s259 + $0xc0] sm:$0xff]
        %v285 = vld [vmem:[%s259 + $0xc8] sm:$0xff]
        %v286 = vld [vmem:[%s259 + $0xd0] sm:$0xff]
        %v287 = vld [vmem:[%s259 + $0xd8] sm:$0xff]
        %v288 = vld [vmem:[%s259 + $0xe0] sm:$0xff]
        %v289 = vld [vmem:[%s259 + $0xe8] sm:$0xff]
        %v290 = vld [vmem:[%s259 + $0xf0] sm:$0xff]
        %v291 = vld [vmem:[%s259 + $0xf8] sm:$0xff]
        %v292 = vmax.f32 %v227, %v260
        %v293 = vmax.f32 %v228, %v261
        %v294 = vmax.f32 %v229, %v262
        %v295 = vmax.f32 %v230, %v263
        %v296 = vmax.f32 %v231, %v264
        %v297 = vmax.f32 %v232, %v265
        %v298 = vmax.f32 %v233, %v266
        %v299 = vmax.f32 %v234, %v267
        %v300 = vmax.f32 %v235, %v268
        %v301 = vmax.f32 %v236, %v269
        %v302 = vmax.f32 %v237, %v270
        %v303 = vmax.f32 %v238, %v271
        %v304 = vmax.f32 %v239, %v272
        %v305 = vmax.f32 %v240, %v273
        %v306 = vmax.f32 %v241, %v274
        %v307 = vmax.f32 %v242, %v275
        %v308 = vmax.f32 %v243, %v276
        %v309 = vmax.f32 %v244, %v277
        %v310 = vmax.f32 %v245, %v278
        %v311 = vmax.f32 %v246, %v279
        %v312 = vmax.f32 %v247, %v280
        %v313 = vmax.f32 %v248, %v281
        %v314 = vmax.f32 %v249, %v282
        %v315 = vmax.f32 %v250, %v283
        %v316 = vmax.f32 %v251, %v284
        %v317 = vmax.f32 %v252, %v285
        %v318 = vmax.f32 %v253, %v286
        %v319 = vmax.f32 %v254, %v287
        %v320 = vmax.f32 %v255, %v288
        %v321 = vmax.f32 %v256, %v289
        %v322 = vmax.f32 %v257, %v290
        %v323 = vmax.f32 %v258, %v291
        %s324 = scalar_lea.vmem %s131, 768 [#allocation2]
        %v325 = vld [vmem:[%s324] sm:$0xff]
        %v326 = vld [vmem:[%s324 + $0x8] sm:$0xff]
        %v327 = vld [vmem:[%s324 + $0x10] sm:$0xff]
        %v328 = vld [vmem:[%s324 + $0x18] sm:$0xff]
        %v329 = vld [vmem:[%s324 + $0x20] sm:$0xff]
        %v330 = vld [vmem:[%s324 + $0x28] sm:$0xff]
        %v331 = vld [vmem:[%s324 + $0x30] sm:$0xff]
        %v332 = vld [vmem:[%s324 + $0x38] sm:$0xff]
        %v333 = vld [vmem:[%s324 + $0x40] sm:$0xff]
        %v334 = vld [vmem:[%s324 + $0x48] sm:$0xff]
        %v335 = vld [vmem:[%s324 + $0x50] sm:$0xff]
        %v336 = vld [vmem:[%s324 + $0x58] sm:$0xff]
        %v337 = vld [vmem:[%s324 + $0x60] sm:$0xff]
        %v338 = vld [vmem:[%s324 + $0x68] sm:$0xff]
        %v339 = vld [vmem:[%s324 + $0x70] sm:$0xff]
        %v340 = vld [vmem:[%s324 + $0x78] sm:$0xff]
        %v341 = vld [vmem:[%s324 + $0x80] sm:$0xff]
        %v342 = vld [vmem:[%s324 + $0x88] sm:$0xff]
        %v343 = vld [vmem:[%s324 + $0x90] sm:$0xff]
        %v344 = vld [vmem:[%s324 + $0x98] sm:$0xff]
        %v345 = vld [vmem:[%s324 + $0xa0] sm:$0xff]
        %v346 = vld [vmem:[%s324 + $0xa8] sm:$0xff]
        %v347 = vld [vmem:[%s324 + $0xb0] sm:$0xff]
        %v348 = vld [vmem:[%s324 + $0xb8] sm:$0xff]
        %v349 = vld [vmem:[%s324 + $0xc0] sm:$0xff]
        %v350 = vld [vmem:[%s324 + $0xc8] sm:$0xff]
        %v351 = vld [vmem:[%s324 + $0xd0] sm:$0xff]
        %v352 = vld [vmem:[%s324 + $0xd8] sm:$0xff]
        %v353 = vld [vmem:[%s324 + $0xe0] sm:$0xff]
        %v354 = vld [vmem:[%s324 + $0xe8] sm:$0xff]
        %v355 = vld [vmem:[%s324 + $0xf0] sm:$0xff]
        %v356 = vld [vmem:[%s324 + $0xf8] sm:$0xff]
        %v357 = vmax.f32 %v292, %v325
        %v358 = vmax.f32 %v293, %v326
        %v359 = vmax.f32 %v294, %v327
        %v360 = vmax.f32 %v295, %v328
        %v361 = vmax.f32 %v296, %v329
        %v362 = vmax.f32 %v297, %v330
        %v363 = vmax.f32 %v298, %v331
        %v364 = vmax.f32 %v299, %v332
        %v365 = vmax.f32 %v300, %v333
        %v366 = vmax.f32 %v301, %v334
        %v367 = vmax.f32 %v302, %v335
        %v368 = vmax.f32 %v303, %v336
        %v369 = vmax.f32 %v304, %v337
        %v370 = vmax.f32 %v305, %v338
        %v371 = vmax.f32 %v306, %v339
        %v372 = vmax.f32 %v307, %v340
        %v373 = vmax.f32 %v308, %v341
        %v374 = vmax.f32 %v309, %v342
        %v375 = vmax.f32 %v310, %v343
        %v376 = vmax.f32 %v311, %v344
        %v377 = vmax.f32 %v312, %v345
        %v378 = vmax.f32 %v313, %v346
        %v379 = vmax.f32 %v314, %v347
        %v380 = vmax.f32 %v315, %v348
        %v381 = vmax.f32 %v316, %v349
        %v382 = vmax.f32 %v317, %v350
        %v383 = vmax.f32 %v318, %v351
        %v384 = vmax.f32 %v319, %v352
        %v385 = vmax.f32 %v320, %v353
        %v386 = vmax.f32 %v321, %v354
        %v387 = vmax.f32 %v322, %v355
        %v388 = vmax.f32 %v323, %v356
        %s389 = scalar_lea.vmem %s131, 1024 [#allocation2]
        %v390 = vld [vmem:[%s389] sm:$0xff]
        %v391 = vld [vmem:[%s389 + $0x8] sm:$0xff]
        %v392 = vld [vmem:[%s389 + $0x10] sm:$0xff]
        %v393 = vld [vmem:[%s389 + $0x18] sm:$0xff]
        %v394 = vld [vmem:[%s389 + $0x20] sm:$0xff]
        %v395 = vld [vmem:[%s389 + $0x28] sm:$0xff]
        %v396 = vld [vmem:[%s389 + $0x30] sm:$0xff]
        %v397 = vld [vmem:[%s389 + $0x38] sm:$0xff]
        %v398 = vld [vmem:[%s389 + $0x40] sm:$0xff]
        %v399 = vld [vmem:[%s389 + $0x48] sm:$0xff]
        %v400 = vld [vmem:[%s389 + $0x50] sm:$0xff]
        %v401 = vld [vmem:[%s389 + $0x58] sm:$0xff]
        %v402 = vld [vmem:[%s389 + $0x60] sm:$0xff]
        %v403 = vld [vmem:[%s389 + $0x68] sm:$0xff]
        %v404 = vld [vmem:[%s389 + $0x70] sm:$0xff]
        %v405 = vld [vmem:[%s389 + $0x78] sm:$0xff]
        %v406 = vld [vmem:[%s389 + $0x80] sm:$0xff]
        %v407 = vld [vmem:[%s389 + $0x88] sm:$0xff]
        %v408 = vld [vmem:[%s389 + $0x90] sm:$0xff]
        %v409 = vld [vmem:[%s389 + $0x98] sm:$0xff]
        %v410 = vld [vmem:[%s389 + $0xa0] sm:$0xff]
        %v411 = vld [vmem:[%s389 + $0xa8] sm:$0xff]
        %v412 = vld [vmem:[%s389 + $0xb0] sm:$0xff]
        %v413 = vld [vmem:[%s389 + $0xb8] sm:$0xff]
        %v414 = vld [vmem:[%s389 + $0xc0] sm:$0xff]
        %v415 = vld [vmem:[%s389 + $0xc8] sm:$0xff]
        %v416 = vld [vmem:[%s389 + $0xd0] sm:$0xff]
        %v417 = vld [vmem:[%s389 + $0xd8] sm:$0xff]
        %v418 = vld [vmem:[%s389 + $0xe0] sm:$0xff]
        %v419 = vld [vmem:[%s389 + $0xe8] sm:$0xff]
        %v420 = vld [vmem:[%s389 + $0xf0] sm:$0xff]
        %v421 = vld [vmem:[%s389 + $0xf8] sm:$0xff]
        %v422 = vmax.f32 %v357, %v390
        %v423 = vmax.f32 %v358, %v391
        %v424 = vmax.f32 %v359, %v392
        %v425 = vmax.f32 %v360, %v393
        %v426 = vmax.f32 %v361, %v394
        %v427 = vmax.f32 %v362, %v395
        %v428 = vmax.f32 %v363, %v396
        %v429 = vmax.f32 %v364, %v397
        %v430 = vmax.f32 %v365, %v398
        %v431 = vmax.f32 %v366, %v399
        %v432 = vmax.f32 %v367, %v400
        %v433 = vmax.f32 %v368, %v401
        %v434 = vmax.f32 %v369, %v402
        %v435 = vmax.f32 %v370, %v403
        %v436 = vmax.f32 %v371, %v404
        %v437 = vmax.f32 %v372, %v405
        %v438 = vmax.f32 %v373, %v406
        %v439 = vmax.f32 %v374, %v407
        %v440 = vmax.f32 %v375, %v408
        %v441 = vmax.f32 %v376, %v409
        %v442 = vmax.f32 %v377, %v410
        %v443 = vmax.f32 %v378, %v411
        %v444 = vmax.f32 %v379, %v412
        %v445 = vmax.f32 %v380, %v413
        %v446 = vmax.f32 %v381, %v414
        %v447 = vmax.f32 %v382, %v415
        %v448 = vmax.f32 %v383, %v416
        %v449 = vmax.f32 %v384, %v417
        %v450 = vmax.f32 %v385, %v418
        %v451 = vmax.f32 %v386, %v419
        %v452 = vmax.f32 %v387, %v420
        %v453 = vmax.f32 %v388, %v421
        %s454 = scalar_lea.vmem %s131, 1280 [#allocation2]
        %v455 = vld [vmem:[%s454] sm:$0xff]
        %v456 = vld [vmem:[%s454 + $0x8] sm:$0xff]
        %v457 = vld [vmem:[%s454 + $0x10] sm:$0xff]
        %v458 = vld [vmem:[%s454 + $0x18] sm:$0xff]
        %v459 = vld [vmem:[%s454 + $0x20] sm:$0xff]
        %v460 = vld [vmem:[%s454 + $0x28] sm:$0xff]
        %v461 = vld [vmem:[%s454 + $0x30] sm:$0xff]
        %v462 = vld [vmem:[%s454 + $0x38] sm:$0xff]
        %v463 = vld [vmem:[%s454 + $0x40] sm:$0xff]
        %v464 = vld [vmem:[%s454 + $0x48] sm:$0xff]
        %v465 = vld [vmem:[%s454 + $0x50] sm:$0xff]
        %v466 = vld [vmem:[%s454 + $0x58] sm:$0xff]
        %v467 = vld [vmem:[%s454 + $0x60] sm:$0xff]
        %v468 = vld [vmem:[%s454 + $0x68] sm:$0xff]
        %v469 = vld [vmem:[%s454 + $0x70] sm:$0xff]
        %v470 = vld [vmem:[%s454 + $0x78] sm:$0xff]
        %v471 = vld [vmem:[%s454 + $0x80] sm:$0xff]
        %v472 = vld [vmem:[%s454 + $0x88] sm:$0xff]
        %v473 = vld [vmem:[%s454 + $0x90] sm:$0xff]
        %v474 = vld [vmem:[%s454 + $0x98] sm:$0xff]
        %v475 = vld [vmem:[%s454 + $0xa0] sm:$0xff]
        %v476 = vld [vmem:[%s454 + $0xa8] sm:$0xff]
        %v477 = vld [vmem:[%s454 + $0xb0] sm:$0xff]
        %v478 = vld [vmem:[%s454 + $0xb8] sm:$0xff]
        %v479 = vld [vmem:[%s454 + $0xc0] sm:$0xff]
        %v480 = vld [vmem:[%s454 + $0xc8] sm:$0xff]
        %v481 = vld [vmem:[%s454 + $0xd0] sm:$0xff]
        %v482 = vld [vmem:[%s454 + $0xd8] sm:$0xff]
        %v483 = vld [vmem:[%s454 + $0xe0] sm:$0xff]
        %v484 = vld [vmem:[%s454 + $0xe8] sm:$0xff]
        %v485 = vld [vmem:[%s454 + $0xf0] sm:$0xff]
        %v486 = vld [vmem:[%s454 + $0xf8] sm:$0xff]
        %v487 = vmax.f32 %v422, %v455
        %v488 = vmax.f32 %v423, %v456
        %v489 = vmax.f32 %v424, %v457
        %v490 = vmax.f32 %v425, %v458
        %v491 = vmax.f32 %v426, %v459
        %v492 = vmax.f32 %v427, %v460
        %v493 = vmax.f32 %v428, %v461
        %v494 = vmax.f32 %v429, %v462
        %v495 = vmax.f32 %v430, %v463
        %v496 = vmax.f32 %v431, %v464
        %v497 = vmax.f32 %v432, %v465
        %v498 = vmax.f32 %v433, %v466
        %v499 = vmax.f32 %v434, %v467
        %v500 = vmax.f32 %v435, %v468
        %v501 = vmax.f32 %v436, %v469
        %v502 = vmax.f32 %v437, %v470
        %v503 = vmax.f32 %v438, %v471
        %v504 = vmax.f32 %v439, %v472
        %v505 = vmax.f32 %v440, %v473
        %v506 = vmax.f32 %v441, %v474
        %v507 = vmax.f32 %v442, %v475
        %v508 = vmax.f32 %v443, %v476
        %v509 = vmax.f32 %v444, %v477
        %v510 = vmax.f32 %v445, %v478
        %v511 = vmax.f32 %v446, %v479
        %v512 = vmax.f32 %v447, %v480
        %v513 = vmax.f32 %v448, %v481
        %v514 = vmax.f32 %v449, %v482
        %v515 = vmax.f32 %v450, %v483
        %v516 = vmax.f32 %v451, %v484
        %v517 = vmax.f32 %v452, %v485
        %v518 = vmax.f32 %v453, %v486
        %s519 = scalar_lea.vmem %s131, 1536 [#allocation2]
        %v520 = vld [vmem:[%s519] sm:$0xff]
        %v521 = vld [vmem:[%s519 + $0x8] sm:$0xff]
        %v522 = vld [vmem:[%s519 + $0x10] sm:$0xff]
        %v523 = vld [vmem:[%s519 + $0x18] sm:$0xff]
        %v524 = vld [vmem:[%s519 + $0x20] sm:$0xff]
        %v525 = vld [vmem:[%s519 + $0x28] sm:$0xff]
        %v526 = vld [vmem:[%s519 + $0x30] sm:$0xff]
        %v527 = vld [vmem:[%s519 + $0x38] sm:$0xff]
        %v528 = vld [vmem:[%s519 + $0x40] sm:$0xff]
        %v529 = vld [vmem:[%s519 + $0x48] sm:$0xff]
        %v530 = vld [vmem:[%s519 + $0x50] sm:$0xff]
        %v531 = vld [vmem:[%s519 + $0x58] sm:$0xff]
        %v532 = vld [vmem:[%s519 + $0x60] sm:$0xff]
        %v533 = vld [vmem:[%s519 + $0x68] sm:$0xff]
        %v534 = vld [vmem:[%s519 + $0x70] sm:$0xff]
        %v535 = vld [vmem:[%s519 + $0x78] sm:$0xff]
        %v536 = vld [vmem:[%s519 + $0x80] sm:$0xff]
        %v537 = vld [vmem:[%s519 + $0x88] sm:$0xff]
        %v538 = vld [vmem:[%s519 + $0x90] sm:$0xff]
        %v539 = vld [vmem:[%s519 + $0x98] sm:$0xff]
        %v540 = vld [vmem:[%s519 + $0xa0] sm:$0xff]
        %v541 = vld [vmem:[%s519 + $0xa8] sm:$0xff]
        %v542 = vld [vmem:[%s519 + $0xb0] sm:$0xff]
        %v543 = vld [vmem:[%s519 + $0xb8] sm:$0xff]
        %v544 = vld [vmem:[%s519 + $0xc0] sm:$0xff]
        %v545 = vld [vmem:[%s519 + $0xc8] sm:$0xff]
        %v546 = vld [vmem:[%s519 + $0xd0] sm:$0xff]
        %v547 = vld [vmem:[%s519 + $0xd8] sm:$0xff]
        %v548 = vld [vmem:[%s519 + $0xe0] sm:$0xff]
        %v549 = vld [vmem:[%s519 + $0xe8] sm:$0xff]
        %v550 = vld [vmem:[%s519 + $0xf0] sm:$0xff]
        %v551 = vld [vmem:[%s519 + $0xf8] sm:$0xff]
        %v552 = vmax.f32 %v487, %v520
        %v553 = vmax.f32 %v488, %v521
        %v554 = vmax.f32 %v489, %v522
        %v555 = vmax.f32 %v490, %v523
        %v556 = vmax.f32 %v491, %v524
        %v557 = vmax.f32 %v492, %v525
        %v558 = vmax.f32 %v493, %v526
        %v559 = vmax.f32 %v494, %v527
        %v560 = vmax.f32 %v495, %v528
        %v561 = vmax.f32 %v496, %v529
        %v562 = vmax.f32 %v497, %v530
        %v563 = vmax.f32 %v498, %v531
        %v564 = vmax.f32 %v499, %v532
        %v565 = vmax.f32 %v500, %v533
        %v566 = vmax.f32 %v501, %v534
        %v567 = vmax.f32 %v502, %v535
        %v568 = vmax.f32 %v503, %v536
        %v569 = vmax.f32 %v504, %v537
        %v570 = vmax.f32 %v505, %v538
        %v571 = vmax.f32 %v506, %v539
        %v572 = vmax.f32 %v507, %v540
        %v573 = vmax.f32 %v508, %v541
        %v574 = vmax.f32 %v509, %v542
        %v575 = vmax.f32 %v510, %v543
        %v576 = vmax.f32 %v511, %v544
        %v577 = vmax.f32 %v512, %v545
        %v578 = vmax.f32 %v513, %v546
        %v579 = vmax.f32 %v514, %v547
        %v580 = vmax.f32 %v515, %v548
        %v581 = vmax.f32 %v516, %v549
        %v582 = vmax.f32 %v517, %v550
        %v583 = vmax.f32 %v518, %v551
        %s584 = scalar_lea.vmem %s131, 1792 [#allocation2]
        %v585 = vld [vmem:[%s584] sm:$0xff]
        %v586 = vld [vmem:[%s584 + $0x8] sm:$0xff]
        %v587 = vld [vmem:[%s584 + $0x10] sm:$0xff]
        %v588 = vld [vmem:[%s584 + $0x18] sm:$0xff]
        %v589 = vld [vmem:[%s584 + $0x20] sm:$0xff]
        %v590 = vld [vmem:[%s584 + $0x28] sm:$0xff]
        %v591 = vld [vmem:[%s584 + $0x30] sm:$0xff]
        %v592 = vld [vmem:[%s584 + $0x38] sm:$0xff]
        %v593 = vld [vmem:[%s584 + $0x40] sm:$0xff]
        %v594 = vld [vmem:[%s584 + $0x48] sm:$0xff]
        %v595 = vld [vmem:[%s584 + $0x50] sm:$0xff]
        %v596 = vld [vmem:[%s584 + $0x58] sm:$0xff]
        %v597 = vld [vmem:[%s584 + $0x60] sm:$0xff]
        %v598 = vld [vmem:[%s584 + $0x68] sm:$0xff]
        %v599 = vld [vmem:[%s584 + $0x70] sm:$0xff]
        %v600 = vld [vmem:[%s584 + $0x78] sm:$0xff]
        %v601 = vld [vmem:[%s584 + $0x80] sm:$0xff]
        %v602 = vld [vmem:[%s584 + $0x88] sm:$0xff]
        %v603 = vld [vmem:[%s584 + $0x90] sm:$0xff]
        %v604 = vld [vmem:[%s584 + $0x98] sm:$0xff]
        %v605 = vld [vmem:[%s584 + $0xa0] sm:$0xff]
        %v606 = vld [vmem:[%s584 + $0xa8] sm:$0xff]
        %v607 = vld [vmem:[%s584 + $0xb0] sm:$0xff]
        %v608 = vld [vmem:[%s584 + $0xb8] sm:$0xff]
        %v609 = vld [vmem:[%s584 + $0xc0] sm:$0xff]
        %v610 = vld [vmem:[%s584 + $0xc8] sm:$0xff]
        %v611 = vld [vmem:[%s584 + $0xd0] sm:$0xff]
        %v612 = vld [vmem:[%s584 + $0xd8] sm:$0xff]
        %v613 = vld [vmem:[%s584 + $0xe0] sm:$0xff]
        %v614 = vld [vmem:[%s584 + $0xe8] sm:$0xff]
        %v615 = vld [vmem:[%s584 + $0xf0] sm:$0xff]
        %v616 = vld [vmem:[%s584 + $0xf8] sm:$0xff]
        %v617 = vmax.f32 %v552, %v585
        %v618 = vmax.f32 %v553, %v586
        %v619 = vmax.f32 %v554, %v587
        %v620 = vmax.f32 %v555, %v588
        %v621 = vmax.f32 %v556, %v589
        %v622 = vmax.f32 %v557, %v590
        %v623 = vmax.f32 %v558, %v591
        %v624 = vmax.f32 %v559, %v592
        %v625 = vmax.f32 %v560, %v593
        %v626 = vmax.f32 %v561, %v594
        %v627 = vmax.f32 %v562, %v595
        %v628 = vmax.f32 %v563, %v596
        %v629 = vmax.f32 %v564, %v597
        %v630 = vmax.f32 %v565, %v598
        %v631 = vmax.f32 %v566, %v599
        %v632 = vmax.f32 %v567, %v600
        %v633 = vmax.f32 %v568, %v601
        %v634 = vmax.f32 %v569, %v602
        %v635 = vmax.f32 %v570, %v603
        %v636 = vmax.f32 %v571, %v604
        %v637 = vmax.f32 %v572, %v605
        %v638 = vmax.f32 %v573, %v606
        %v639 = vmax.f32 %v574, %v607
        %v640 = vmax.f32 %v575, %v608
        %v641 = vmax.f32 %v576, %v609
        %v642 = vmax.f32 %v577, %v610
        %v643 = vmax.f32 %v578, %v611
        %v644 = vmax.f32 %v579, %v612
        %v645 = vmax.f32 %v580, %v613
        %v646 = vmax.f32 %v581, %v614
        %v647 = vmax.f32 %v582, %v615
        %v648 = vmax.f32 %v583, %v616
        %v649 = vmax.f32 %v617, %v619
        %v650 = vmax.f32 %v618, %v620
        %v651 = vmax.f32 %v649, %v621
        %v652 = vmax.f32 %v650, %v622
        %v653 = vmax.f32 %v651, %v623
        %v654 = vmax.f32 %v652, %v624
        %v655 = vmax.f32 %v653, %v625
        %v656 = vmax.f32 %v654, %v626
        %v657 = vmax.f32 %v655, %v627
        %v658 = vmax.f32 %v656, %v628
        %v659 = vmax.f32 %v657, %v629
        %v660 = vmax.f32 %v658, %v630
        %v661 = vmax.f32 %v659, %v631
        %v662 = vmax.f32 %v660, %v632
        %v663 = vmax.f32 %v661, %v633
        %v664 = vmax.f32 %v662, %v634
        %v665 = vmax.f32 %v663, %v635
        %v666 = vmax.f32 %v664, %v636
        %v667 = vmax.f32 %v665, %v637
        %v668 = vmax.f32 %v666, %v638
        %v669 = vmax.f32 %v667, %v639
        %v670 = vmax.f32 %v668, %v640
        %v671 = vmax.f32 %v669, %v641
        %v672 = vmax.f32 %v670, %v642
        %v673 = vmax.f32 %v671, %v643
        %v674 = vmax.f32 %v672, %v644
        %v675 = vmax.f32 %v673, %v645
        %v676 = vmax.f32 %v674, %v646
        %v677 = vmax.f32 %v675, %v647
        %v678 = vmax.f32 %v676, %v648
        %v679 = vmax.f32 %v677, %v678
        %v680 = vrot.slane %v679, 4
        %v681 = vmax.f32 %v679, %v680
        %v682 = vrot.slane %v681, 2
        %v683 = vmax.f32 %v681, %v682
        %v684 = vrot.slane %v683, 1
        %v685 = vmax.f32 %v683, %v684
        %686 = vst [vmem:[%s161] sm:$0x1] %v685
        %v687 = vld [vmem:[%s131] sm:$0xff]
        %v688 = vld [vmem:[%s131 + $0x8] sm:$0xff]
        %v689 = vld [vmem:[%s131 + $0x10] sm:$0xff]
        %v690 = vld [vmem:[%s131 + $0x18] sm:$0xff]
        %v691 = vld [vmem:[%s131 + $0x20] sm:$0xff]
        %v692 = vld [vmem:[%s131 + $0x28] sm:$0xff]
        %v693 = vld [vmem:[%s131 + $0x30] sm:$0xff]
        %v694 = vld [vmem:[%s131 + $0x38] sm:$0xff]
        %v695 = vld [vmem:[%s131 + $0x40] sm:$0xff]
        %v696 = vld [vmem:[%s131 + $0x48] sm:$0xff]
        %v697 = vld [vmem:[%s131 + $0x50] sm:$0xff]
        %v698 = vld [vmem:[%s131 + $0x58] sm:$0xff]
        %v699 = vld [vmem:[%s131 + $0x60] sm:$0xff]
        %v700 = vld [vmem:[%s131 + $0x68] sm:$0xff]
        %v701 = vld [vmem:[%s131 + $0x70] sm:$0xff]
        %v702 = vld [vmem:[%s131 + $0x78] sm:$0xff]
        %v703 = vld [vmem:[%s131 + $0x80] sm:$0xff]
        %v704 = vld [vmem:[%s131 + $0x88] sm:$0xff]
        %v705 = vld [vmem:[%s131 + $0x90] sm:$0xff]
        %v706 = vld [vmem:[%s131 + $0x98] sm:$0xff]
        %v707 = vld [vmem:[%s131 + $0xa0] sm:$0xff]
        %v708 = vld [vmem:[%s131 + $0xa8] sm:$0xff]
        %v709 = vld [vmem:[%s131 + $0xb0] sm:$0xff]
        %v710 = vld [vmem:[%s131 + $0xb8] sm:$0xff]
        %v711 = vld [vmem:[%s131 + $0xc0] sm:$0xff]
        %v712 = vld [vmem:[%s131 + $0xc8] sm:$0xff]
        %v713 = vld [vmem:[%s131 + $0xd0] sm:$0xff]
        %v714 = vld [vmem:[%s131 + $0xd8] sm:$0xff]
        %v715 = vld [vmem:[%s131 + $0xe0] sm:$0xff]
        %v716 = vld [vmem:[%s131 + $0xe8] sm:$0xff]
        %v717 = vld [vmem:[%s131 + $0xf0] sm:$0xff]
        %v718 = vld [vmem:[%s131 + $0xf8] sm:$0xff]
        %v719 = vld [vmem:[%s194] sm:$0xff]
        %v720 = vld [vmem:[%s194 + $0x8] sm:$0xff]
        %v721 = vld [vmem:[%s194 + $0x10] sm:$0xff]
        %v722 = vld [vmem:[%s194 + $0x18] sm:$0xff]
        %v723 = vld [vmem:[%s194 + $0x20] sm:$0xff]
        %v724 = vld [vmem:[%s194 + $0x28] sm:$0xff]
        %v725 = vld [vmem:[%s194 + $0x30] sm:$0xff]
        %v726 = vld [vmem:[%s194 + $0x38] sm:$0xff]
        %v727 = vld [vmem:[%s194 + $0x40] sm:$0xff]
        %v728 = vld [vmem:[%s194 + $0x48] sm:$0xff]
        %v729 = vld [vmem:[%s194 + $0x50] sm:$0xff]
        %v730 = vld [vmem:[%s194 + $0x58] sm:$0xff]
        %v731 = vld [vmem:[%s194 + $0x60] sm:$0xff]
        %v732 = vld [vmem:[%s194 + $0x68] sm:$0xff]
        %v733 = vld [vmem:[%s194 + $0x70] sm:$0xff]
        %v734 = vld [vmem:[%s194 + $0x78] sm:$0xff]
        %v735 = vld [vmem:[%s194 + $0x80] sm:$0xff]
        %v736 = vld [vmem:[%s194 + $0x88] sm:$0xff]
        %v737 = vld [vmem:[%s194 + $0x90] sm:$0xff]
        %v738 = vld [vmem:[%s194 + $0x98] sm:$0xff]
        %v739 = vld [vmem:[%s194 + $0xa0] sm:$0xff]
        %v740 = vld [vmem:[%s194 + $0xa8] sm:$0xff]
        %v741 = vld [vmem:[%s194 + $0xb0] sm:$0xff]
        %v742 = vld [vmem:[%s194 + $0xb8] sm:$0xff]
        %v743 = vld [vmem:[%s194 + $0xc0] sm:$0xff]
        %v744 = vld [vmem:[%s194 + $0xc8] sm:$0xff]
        %v745 = vld [vmem:[%s194 + $0xd0] sm:$0xff]
        %v746 = vld [vmem:[%s194 + $0xd8] sm:$0xff]
        %v747 = vld [vmem:[%s194 + $0xe0] sm:$0xff]
        %v748 = vld [vmem:[%s194 + $0xe8] sm:$0xff]
        %v749 = vld [vmem:[%s194 + $0xf0] sm:$0xff]
        %v750 = vld [vmem:[%s194 + $0xf8] sm:$0xff]
        %v751 = vmax.f32 %v687, %v719
        %v752 = vmax.f32 %v688, %v720
        %v753 = vmax.f32 %v689, %v721
        %v754 = vmax.f32 %v690, %v722
        %v755 = vmax.f32 %v691, %v723
        %v756 = vmax.f32 %v692, %v724
        %v757 = vmax.f32 %v693, %v725
        %v758 = vmax.f32 %v694, %v726
        %v759 = vmax.f32 %v695, %v727
        %v760 = vmax.f32 %v696, %v728
        %v761 = vmax.f32 %v697, %v729
        %v762 = vmax.f32 %v698, %v730
        %v763 = vmax.f32 %v699, %v731
        %v764 = vmax.f32 %v700, %v732
        %v765 = vmax.f32 %v701, %v733
        %v766 = vmax.f32 %v702, %v734
        %v767 = vmax.f32 %v703, %v735
        %v768 = vmax.f32 %v704, %v736
        %v769 = vmax.f32 %v705, %v737
        %v770 = vmax.f32 %v706, %v738
        %v771 = vmax.f32 %v707, %v739
        %v772 = vmax.f32 %v708, %v740
        %v773 = vmax.f32 %v709, %v741
        %v774 = vmax.f32 %v710, %v742
        %v775 = vmax.f32 %v711, %v743
        %v776 = vmax.f32 %v712, %v744
        %v777 = vmax.f32 %v713, %v745
        %v778 = vmax.f32 %v714, %v746
        %v779 = vmax.f32 %v715, %v747
        %v780 = vmax.f32 %v716, %v748
        %v781 = vmax.f32 %v717, %v749
        %v782 = vmax.f32 %v718, %v750
        %v783 = vld [vmem:[%s259] sm:$0xff]
        %v784 = vld [vmem:[%s259 + $0x8] sm:$0xff]
        %v785 = vld [vmem:[%s259 + $0x10] sm:$0xff]
        %v786 = vld [vmem:[%s259 + $0x18] sm:$0xff]
        %v787 = vld [vmem:[%s259 + $0x20] sm:$0xff]
        %v788 = vld [vmem:[%s259 + $0x28] sm:$0xff]
        %v789 = vld [vmem:[%s259 + $0x30] sm:$0xff]
        %v790 = vld [vmem:[%s259 + $0x38] sm:$0xff]
        %v791 = vld [vmem:[%s259 + $0x40] sm:$0xff]
        %v792 = vld [vmem:[%s259 + $0x48] sm:$0xff]
        %v793 = vld [vmem:[%s259 + $0x50] sm:$0xff]
        %v794 = vld [vmem:[%s259 + $0x58] sm:$0xff]
        %v795 = vld [vmem:[%s259 + $0x60] sm:$0xff]
        %v796 = vld [vmem:[%s259 + $0x68] sm:$0xff]
        %v797 = vld [vmem:[%s259 + $0x70] sm:$0xff]
        %v798 = vld [vmem:[%s259 + $0x78] sm:$0xff]
        %v799 = vld [vmem:[%s259 + $0x80] sm:$0xff]
        %v800 = vld [vmem:[%s259 + $0x88] sm:$0xff]
        %v801 = vld [vmem:[%s259 + $0x90] sm:$0xff]
        %v802 = vld [vmem:[%s259 + $0x98] sm:$0xff]
        %v803 = vld [vmem:[%s259 + $0xa0] sm:$0xff]
        %v804 = vld [vmem:[%s259 + $0xa8] sm:$0xff]
        %v805 = vld [vmem:[%s259 + $0xb0] sm:$0xff]
        %v806 = vld [vmem:[%s259 + $0xb8] sm:$0xff]
        %v807 = vld [vmem:[%s259 + $0xc0] sm:$0xff]
        %v808 = vld [vmem:[%s259 + $0xc8] sm:$0xff]
        %v809 = vld [vmem:[%s259 + $0xd0] sm:$0xff]
        %v810 = vld [vmem:[%s259 + $0xd8] sm:$0xff]
        %v811 = vld [vmem:[%s259 + $0xe0] sm:$0xff]
        %v812 = vld [vmem:[%s259 + $0xe8] sm:$0xff]
        %v813 = vld [vmem:[%s259 + $0xf0] sm:$0xff]
        %v814 = vld [vmem:[%s259 + $0xf8] sm:$0xff]
        %v815 = vmax.f32 %v751, %v783
        %v816 = vmax.f32 %v752, %v784
        %v817 = vmax.f32 %v753, %v785
        %v818 = vmax.f32 %v754, %v786
        %v819 = vmax.f32 %v755, %v787
        %v820 = vmax.f32 %v756, %v788
        %v821 = vmax.f32 %v757, %v789
        %v822 = vmax.f32 %v758, %v790
        %v823 = vmax.f32 %v759, %v791
        %v824 = vmax.f32 %v760, %v792
        %v825 = vmax.f32 %v761, %v793
        %v826 = vmax.f32 %v762, %v794
        %v827 = vmax.f32 %v763, %v795
        %v828 = vmax.f32 %v764, %v796
        %v829 = vmax.f32 %v765, %v797
        %v830 = vmax.f32 %v766, %v798
        %v831 = vmax.f32 %v767, %v799
        %v832 = vmax.f32 %v768, %v800
        %v833 = vmax.f32 %v769, %v801
        %v834 = vmax.f32 %v770, %v802
        %v835 = vmax.f32 %v771, %v803
        %v836 = vmax.f32 %v772, %v804
        %v837 = vmax.f32 %v773, %v805
        %v838 = vmax.f32 %v774, %v806
        %v839 = vmax.f32 %v775, %v807
        %v840 = vmax.f32 %v776, %v808
        %v841 = vmax.f32 %v777, %v809
        %v842 = vmax.f32 %v778, %v810
        %v843 = vmax.f32 %v779, %v811
        %v844 = vmax.f32 %v780, %v812
        %v845 = vmax.f32 %v781, %v813
        %v846 = vmax.f32 %v782, %v814
        %v847 = vld [vmem:[%s324] sm:$0xff]
        %v848 = vld [vmem:[%s324 + $0x8] sm:$0xff]
        %v849 = vld [vmem:[%s324 + $0x10] sm:$0xff]
        %v850 = vld [vmem:[%s324 + $0x18] sm:$0xff]
        %v851 = vld [vmem:[%s324 + $0x20] sm:$0xff]
        %v852 = vld [vmem:[%s324 + $0x28] sm:$0xff]
        %v853 = vld [vmem:[%s324 + $0x30] sm:$0xff]
        %v854 = vld [vmem:[%s324 + $0x38] sm:$0xff]
        %v855 = vld [vmem:[%s324 + $0x40] sm:$0xff]
        %v856 = vld [vmem:[%s324 + $0x48] sm:$0xff]
        %v857 = vld [vmem:[%s324 + $0x50] sm:$0xff]
        %v858 = vld [vmem:[%s324 + $0x58] sm:$0xff]
        %v859 = vld [vmem:[%s324 + $0x60] sm:$0xff]
        %v860 = vld [vmem:[%s324 + $0x68] sm:$0xff]
        %v861 = vld [vmem:[%s324 + $0x70] sm:$0xff]
        %v862 = vld [vmem:[%s324 + $0x78] sm:$0xff]
        %v863 = vld [vmem:[%s324 + $0x80] sm:$0xff]
        %v864 = vld [vmem:[%s324 + $0x88] sm:$0xff]
        %v865 = vld [vmem:[%s324 + $0x90] sm:$0xff]
        %v866 = vld [vmem:[%s324 + $0x98] sm:$0xff]
        %v867 = vld [vmem:[%s324 + $0xa0] sm:$0xff]
        %v868 = vld [vmem:[%s324 + $0xa8] sm:$0xff]
        %v869 = vld [vmem:[%s324 + $0xb0] sm:$0xff]
        %v870 = vld [vmem:[%s324 + $0xb8] sm:$0xff]
        %v871 = vld [vmem:[%s324 + $0xc0] sm:$0xff]
        %v872 = vld [vmem:[%s324 + $0xc8] sm:$0xff]
        %v873 = vld [vmem:[%s324 + $0xd0] sm:$0xff]
        %v874 = vld [vmem:[%s324 + $0xd8] sm:$0xff]
        %v875 = vld [vmem:[%s324 + $0xe0] sm:$0xff]
        %v876 = vld [vmem:[%s324 + $0xe8] sm:$0xff]
        %v877 = vld [vmem:[%s324 + $0xf0] sm:$0xff]
        %v878 = vld [vmem:[%s324 + $0xf8] sm:$0xff]
        %v879 = vmax.f32 %v815, %v847
        %v880 = vmax.f32 %v816, %v848
        %v881 = vmax.f32 %v817, %v849
        %v882 = vmax.f32 %v818, %v850
        %v883 = vmax.f32 %v819, %v851
        %v884 = vmax.f32 %v820, %v852
        %v885 = vmax.f32 %v821, %v853
        %v886 = vmax.f32 %v822, %v854
        %v887 = vmax.f32 %v823, %v855
        %v888 = vmax.f32 %v824, %v856
        %v889 = vmax.f32 %v825, %v857
        %v890 = vmax.f32 %v826, %v858
        %v891 = vmax.f32 %v827, %v859
        %v892 = vmax.f32 %v828, %v860
        %v893 = vmax.f32 %v829, %v861
        %v894 = vmax.f32 %v830, %v862
        %v895 = vmax.f32 %v831, %v863
        %v896 = vmax.f32 %v832, %v864
        %v897 = vmax.f32 %v833, %v865
        %v898 = vmax.f32 %v834, %v866
        %v899 = vmax.f32 %v835, %v867
        %v900 = vmax.f32 %v836, %v868
        %v901 = vmax.f32 %v837, %v869
        %v902 = vmax.f32 %v838, %v870
        %v903 = vmax.f32 %v839, %v871
        %v904 = vmax.f32 %v840, %v872
        %v905 = vmax.f32 %v841, %v873
        %v906 = vmax.f32 %v842, %v874
        %v907 = vmax.f32 %v843, %v875
        %v908 = vmax.f32 %v844, %v876
        %v909 = vmax.f32 %v845, %v877
        %v910 = vmax.f32 %v846, %v878
        %v911 = vmax.f32 %v879, %v881
        %v912 = vmax.f32 %v880, %v882
        %v913 = vmax.f32 %v911, %v883
        %v914 = vmax.f32 %v912, %v884
        %v915 = vmax.f32 %v913, %v885
        %v916 = vmax.f32 %v914, %v886
        %v917 = vmax.f32 %v915, %v887
        %v918 = vmax.f32 %v916, %v888
        %v919 = vmax.f32 %v917, %v889
        %v920 = vmax.f32 %v918, %v890
        %v921 = vmax.f32 %v919, %v891
        %v922 = vmax.f32 %v920, %v892
        %v923 = vmax.f32 %v921, %v893
        %v924 = vmax.f32 %v922, %v894
        %v925 = vrot.slane %v923, 4
        %v926 = vmax.f32 %v923, %v925
        %v927 = vrot.slane %v926, 2
        %v928 = vmax.f32 %v926, %v927
        %v929 = vrot.slane %v928, 1
        %v930 = vmax.f32 %v928, %v929
        %v931 = vrot.slane %v924, 4
        %v932 = vmax.f32 %v924, %v931
        %v933 = vrot.slane %v932, 2
        %v934 = vmax.f32 %v932, %v933
        %v935 = vrot.slane %v934, 1
        %v936 = vmax.f32 %v934, %v935
        %v937 = vmax.f32 %v895, %v897
        %v938 = vmax.f32 %v896, %v898
        %v939 = vmax.f32 %v937, %v899
        %v940 = vmax.f32 %v938, %v900
        %v941 = vmax.f32 %v939, %v901
        %v942 = vmax.f32 %v940, %v902
        %v943 = vmax.f32 %v941, %v903
        %v944 = vmax.f32 %v942, %v904
        %v945 = vmax.f32 %v943, %v905
        %v946 = vmax.f32 %v944, %v906
        %v947 = vmax.f32 %v945, %v907
        %v948 = vmax.f32 %v946, %v908
        %v949 = vmax.f32 %v947, %v909
        %v950 = vmax.f32 %v948, %v910
        %v951 = vrot.slane %v949, 4
        %v952 = vmax.f32 %v949, %v951
        %v953 = vrot.slane %v952, 2
        %v954 = vmax.f32 %v952, %v953
        %v955 = vrot.slane %v954, 1
        %v956 = vmax.f32 %v954, %v955
        %v957 = vrot.slane %v950, 4
        %v958 = vmax.f32 %v950, %v957
        %v959 = vrot.slane %v958, 2
        %v960 = vmax.f32 %v958, %v959
        %v961 = vrot.slane %v960, 1
        %v962 = vmax.f32 %v960, %v961
        %v963 = vld [vmem:[%s389] sm:$0xff]
        %v964 = vld [vmem:[%s389 + $0x8] sm:$0xff]
        %v965 = vld [vmem:[%s389 + $0x10] sm:$0xff]
        %v966 = vld [vmem:[%s389 + $0x18] sm:$0xff]
        %v967 = vld [vmem:[%s389 + $0x20] sm:$0xff]
        %v968 = vld [vmem:[%s389 + $0x28] sm:$0xff]
        %v969 = vld [vmem:[%s389 + $0x30] sm:$0xff]
        %v970 = vld [vmem:[%s389 + $0x38] sm:$0xff]
        %v971 = vld [vmem:[%s389 + $0x40] sm:$0xff]
        %v972 = vld [vmem:[%s389 + $0x48] sm:$0xff]
        %v973 = vld [vmem:[%s389 + $0x50] sm:$0xff]
        %v974 = vld [vmem:[%s389 + $0x58] sm:$0xff]
        %v975 = vld [vmem:[%s389 + $0x60] sm:$0xff]
        %v976 = vld [vmem:[%s389 + $0x68] sm:$0xff]
        %v977 = vld [vmem:[%s389 + $0x70] sm:$0xff]
        %v978 = vld [vmem:[%s389 + $0x78] sm:$0xff]
        %v979 = vld [vmem:[%s389 + $0x80] sm:$0xff]
        %v980 = vld [vmem:[%s389 + $0x88] sm:$0xff]
        %v981 = vld [vmem:[%s389 + $0x90] sm:$0xff]
        %v982 = vld [vmem:[%s389 + $0x98] sm:$0xff]
        %v983 = vld [vmem:[%s389 + $0xa0] sm:$0xff]
        %v984 = vld [vmem:[%s389 + $0xa8] sm:$0xff]
        %v985 = vld [vmem:[%s389 + $0xb0] sm:$0xff]
        %v986 = vld [vmem:[%s389 + $0xb8] sm:$0xff]
        %v987 = vld [vmem:[%s389 + $0xc0] sm:$0xff]
        %v988 = vld [vmem:[%s389 + $0xc8] sm:$0xff]
        %v989 = vld [vmem:[%s389 + $0xd0] sm:$0xff]
        %v990 = vld [vmem:[%s389 + $0xd8] sm:$0xff]
        %v991 = vld [vmem:[%s389 + $0xe0] sm:$0xff]
        %v992 = vld [vmem:[%s389 + $0xe8] sm:$0xff]
        %v993 = vld [vmem:[%s389 + $0xf0] sm:$0xff]
        %v994 = vld [vmem:[%s389 + $0xf8] sm:$0xff]
        %v995 = vld [vmem:[%s454] sm:$0xff]
        %v996 = vld [vmem:[%s454 + $0x8] sm:$0xff]
        %v997 = vld [vmem:[%s454 + $0x10] sm:$0xff]
        %v998 = vld [vmem:[%s454 + $0x18] sm:$0xff]
        %v999 = vld [vmem:[%s454 + $0x20] sm:$0xff]
        %v1000 = vld [vmem:[%s454 + $0x28] sm:$0xff]
        %v1001 = vld [vmem:[%s454 + $0x30] sm:$0xff]
        %v1002 = vld [vmem:[%s454 + $0x38] sm:$0xff]
        %v1003 = vld [vmem:[%s454 + $0x40] sm:$0xff]
        %v1004 = vld [vmem:[%s454 + $0x48] sm:$0xff]
        %v1005 = vld [vmem:[%s454 + $0x50] sm:$0xff]
        %v1006 = vld [vmem:[%s454 + $0x58] sm:$0xff]
        %v1007 = vld [vmem:[%s454 + $0x60] sm:$0xff]
        %v1008 = vld [vmem:[%s454 + $0x68] sm:$0xff]
        %v1009 = vld [vmem:[%s454 + $0x70] sm:$0xff]
        %v1010 = vld [vmem:[%s454 + $0x78] sm:$0xff]
        %v1011 = vld [vmem:[%s454 + $0x80] sm:$0xff]
        %v1012 = vld [vmem:[%s454 + $0x88] sm:$0xff]
        %v1013 = vld [vmem:[%s454 + $0x90] sm:$0xff]
        %v1014 = vld [vmem:[%s454 + $0x98] sm:$0xff]
        %v1015 = vld [vmem:[%s454 + $0xa0] sm:$0xff]
        %v1016 = vld [vmem:[%s454 + $0xa8] sm:$0xff]
        %v1017 = vld [vmem:[%s454 + $0xb0] sm:$0xff]
        %v1018 = vld [vmem:[%s454 + $0xb8] sm:$0xff]
        %v1019 = vld [vmem:[%s454 + $0xc0] sm:$0xff]
        %v1020 = vld [vmem:[%s454 + $0xc8] sm:$0xff]
        %v1021 = vld [vmem:[%s454 + $0xd0] sm:$0xff]
        %v1022 = vld [vmem:[%s454 + $0xd8] sm:$0xff]
        %v1023 = vld [vmem:[%s454 + $0xe0] sm:$0xff]
        %v1024 = vld [vmem:[%s454 + $0xe8] sm:$0xff]
        %v1025 = vld [vmem:[%s454 + $0xf0] sm:$0xff]
        %v1026 = vld [vmem:[%s454 + $0xf8] sm:$0xff]
        %v1027 = vmax.f32 %v963, %v995
        %v1028 = vmax.f32 %v964, %v996
        %v1029 = vmax.f32 %v965, %v997
        %v1030 = vmax.f32 %v966, %v998
        %v1031 = vmax.f32 %v967, %v999
        %v1032 = vmax.f32 %v968, %v1000
        %v1033 = vmax.f32 %v969, %v1001
        %v1034 = vmax.f32 %v970, %v1002
        %v1035 = vmax.f32 %v971, %v1003
        %v1036 = vmax.f32 %v972, %v1004
        %v1037 = vmax.f32 %v973, %v1005
        %v1038 = vmax.f32 %v974, %v1006
        %v1039 = vmax.f32 %v975, %v1007
        %v1040 = vmax.f32 %v976, %v1008
        %v1041 = vmax.f32 %v977, %v1009
        %v1042 = vmax.f32 %v978, %v1010
        %v1043 = vmax.f32 %v979, %v1011
        %v1044 = vmax.f32 %v980, %v1012
        %v1045 = vmax.f32 %v981, %v1013
        %v1046 = vmax.f32 %v982, %v1014
        %v1047 = vmax.f32 %v983, %v1015
        %v1048 = vmax.f32 %v984, %v1016
        %v1049 = vmax.f32 %v985, %v1017
        %v1050 = vmax.f32 %v986, %v1018
        %v1051 = vmax.f32 %v987, %v1019
        %v1052 = vmax.f32 %v988, %v1020
        %v1053 = vmax.f32 %v989, %v1021
        %v1054 = vmax.f32 %v990, %v1022
        %v1055 = vmax.f32 %v991, %v1023
        %v1056 = vmax.f32 %v992, %v1024
        %v1057 = vmax.f32 %v993, %v1025
        %v1058 = vmax.f32 %v994, %v1026
        %v1059 = vld [vmem:[%s519] sm:$0xff]
        %v1060 = vld [vmem:[%s519 + $0x8] sm:$0xff]
        %v1061 = vld [vmem:[%s519 + $0x10] sm:$0xff]
        %v1062 = vld [vmem:[%s519 + $0x18] sm:$0xff]
        %v1063 = vld [vmem:[%s519 + $0x20] sm:$0xff]
        %v1064 = vld [vmem:[%s519 + $0x28] sm:$0xff]
        %v1065 = vld [vmem:[%s519 + $0x30] sm:$0xff]
        %v1066 = vld [vmem:[%s519 + $0x38] sm:$0xff]
        %v1067 = vld [vmem:[%s519 + $0x40] sm:$0xff]
        %v1068 = vld [vmem:[%s519 + $0x48] sm:$0xff]
        %v1069 = vld [vmem:[%s519 + $0x50] sm:$0xff]
        %v1070 = vld [vmem:[%s519 + $0x58] sm:$0xff]
        %v1071 = vld [vmem:[%s519 + $0x60] sm:$0xff]
        %v1072 = vld [vmem:[%s519 + $0x68] sm:$0xff]
        %v1073 = vld [vmem:[%s519 + $0x70] sm:$0xff]
        %v1074 = vld [vmem:[%s519 + $0x78] sm:$0xff]
        %v1075 = vld [vmem:[%s519 + $0x80] sm:$0xff]
        %v1076 = vld [vmem:[%s519 + $0x88] sm:$0xff]
        %v1077 = vld [vmem:[%s519 + $0x90] sm:$0xff]
        %v1078 = vld [vmem:[%s519 + $0x98] sm:$0xff]
        %v1079 = vld [vmem:[%s519 + $0xa0] sm:$0xff]
        %v1080 = vld [vmem:[%s519 + $0xa8] sm:$0xff]
        %v1081 = vld [vmem:[%s519 + $0xb0] sm:$0xff]
        %v1082 = vld [vmem:[%s519 + $0xb8] sm:$0xff]
        %v1083 = vld [vmem:[%s519 + $0xc0] sm:$0xff]
        %v1084 = vld [vmem:[%s519 + $0xc8] sm:$0xff]
        %v1085 = vld [vmem:[%s519 + $0xd0] sm:$0xff]
        %v1086 = vld [vmem:[%s519 + $0xd8] sm:$0xff]
        %v1087 = vld [vmem:[%s519 + $0xe0] sm:$0xff]
        %v1088 = vld [vmem:[%s519 + $0xe8] sm:$0xff]
        %v1089 = vld [vmem:[%s519 + $0xf0] sm:$0xff]
        %v1090 = vld [vmem:[%s519 + $0xf8] sm:$0xff]
        %v1091 = vmax.f32 %v1027, %v1059
        %v1092 = vmax.f32 %v1028, %v1060
        %v1093 = vmax.f32 %v1029, %v1061
        %v1094 = vmax.f32 %v1030, %v1062
        %v1095 = vmax.f32 %v1031, %v1063
        %v1096 = vmax.f32 %v1032, %v1064
        %v1097 = vmax.f32 %v1033, %v1065
        %v1098 = vmax.f32 %v1034, %v1066
        %v1099 = vmax.f32 %v1035, %v1067
        %v1100 = vmax.f32 %v1036, %v1068
        %v1101 = vmax.f32 %v1037, %v1069
        %v1102 = vmax.f32 %v1038, %v1070
        %v1103 = vmax.f32 %v1039, %v1071
        %v1104 = vmax.f32 %v1040, %v1072
        %v1105 = vmax.f32 %v1041, %v1073
        %v1106 = vmax.f32 %v1042, %v1074
        %v1107 = vmax.f32 %v1043, %v1075
        %v1108 = vmax.f32 %v1044, %v1076
        %v1109 = vmax.f32 %v1045, %v1077
        %v1110 = vmax.f32 %v1046, %v1078
        %v1111 = vmax.f32 %v1047, %v1079
        %v1112 = vmax.f32 %v1048, %v1080
        %v1113 = vmax.f32 %v1049, %v1081
        %v1114 = vmax.f32 %v1050, %v1082
        %v1115 = vmax.f32 %v1051, %v1083
        %v1116 = vmax.f32 %v1052, %v1084
        %v1117 = vmax.f32 %v1053, %v1085
        %v1118 = vmax.f32 %v1054, %v1086
        %v1119 = vmax.f32 %v1055, %v1087
        %v1120 = vmax.f32 %v1056, %v1088
        %v1121 = vmax.f32 %v1057, %v1089
        %v1122 = vmax.f32 %v1058, %v1090
        %v1123 = vld [vmem:[%s584] sm:$0xff]
        %v1124 = vld [vmem:[%s584 + $0x8] sm:$0xff]
        %v1125 = vld [vmem:[%s584 + $0x10] sm:$0xff]
        %v1126 = vld [vmem:[%s584 + $0x18] sm:$0xff]
        %v1127 = vld [vmem:[%s584 + $0x20] sm:$0xff]
        %v1128 = vld [vmem:[%s584 + $0x28] sm:$0xff]
        %v1129 = vld [vmem:[%s584 + $0x30] sm:$0xff]
        %v1130 = vld [vmem:[%s584 + $0x38] sm:$0xff]
        %v1131 = vld [vmem:[%s584 + $0x40] sm:$0xff]
        %v1132 = vld [vmem:[%s584 + $0x48] sm:$0xff]
        %v1133 = vld [vmem:[%s584 + $0x50] sm:$0xff]
        %v1134 = vld [vmem:[%s584 + $0x58] sm:$0xff]
        %v1135 = vld [vmem:[%s584 + $0x60] sm:$0xff]
        %v1136 = vld [vmem:[%s584 + $0x68] sm:$0xff]
        %v1137 = vld [vmem:[%s584 + $0x70] sm:$0xff]
        %v1138 = vld [vmem:[%s584 + $0x78] sm:$0xff]
        %v1139 = vld [vmem:[%s584 + $0x80] sm:$0xff]
        %v1140 = vld [vmem:[%s584 + $0x88] sm:$0xff]
        %v1141 = vld [vmem:[%s584 + $0x90] sm:$0xff]
        %v1142 = vld [vmem:[%s584 + $0x98] sm:$0xff]
        %v1143 = vld [vmem:[%s584 + $0xa0] sm:$0xff]
        %v1144 = vld [vmem:[%s584 + $0xa8] sm:$0xff]
        %v1145 = vld [vmem:[%s584 + $0xb0] sm:$0xff]
        %v1146 = vld [vmem:[%s584 + $0xb8] sm:$0xff]
        %v1147 = vld [vmem:[%s584 + $0xc0] sm:$0xff]
        %v1148 = vld [vmem:[%s584 + $0xc8] sm:$0xff]
        %v1149 = vld [vmem:[%s584 + $0xd0] sm:$0xff]
        %v1150 = vld [vmem:[%s584 + $0xd8] sm:$0xff]
        %v1151 = vld [vmem:[%s584 + $0xe0] sm:$0xff]
        %v1152 = vld [vmem:[%s584 + $0xe8] sm:$0xff]
        %v1153 = vld [vmem:[%s584 + $0xf0] sm:$0xff]
        %v1154 = vld [vmem:[%s584 + $0xf8] sm:$0xff]
        %v1155 = vmax.f32 %v1091, %v1123
        %v1156 = vmax.f32 %v1092, %v1124
        %v1157 = vmax.f32 %v1093, %v1125
        %v1158 = vmax.f32 %v1094, %v1126
        %v1159 = vmax.f32 %v1095, %v1127
        %v1160 = vmax.f32 %v1096, %v1128
        %v1161 = vmax.f32 %v1097, %v1129
        %v1162 = vmax.f32 %v1098, %v1130
        %v1163 = vmax.f32 %v1099, %v1131
        %v1164 = vmax.f32 %v1100, %v1132
        %v1165 = vmax.f32 %v1101, %v1133
        %v1166 = vmax.f32 %v1102, %v1134
        %v1167 = vmax.f32 %v1103, %v1135
        %v1168 = vmax.f32 %v1104, %v1136
        %v1169 = vmax.f32 %v1105, %v1137
        %v1170 = vmax.f32 %v1106, %v1138
        %v1171 = vmax.f32 %v1107, %v1139
        %v1172 = vmax.f32 %v1108, %v1140
        %v1173 = vmax.f32 %v1109, %v1141
        %v1174 = vmax.f32 %v1110, %v1142
        %v1175 = vmax.f32 %v1111, %v1143
        %v1176 = vmax.f32 %v1112, %v1144
        %v1177 = vmax.f32 %v1113, %v1145
        %v1178 = vmax.f32 %v1114, %v1146
        %v1179 = vmax.f32 %v1115, %v1147
        %v1180 = vmax.f32 %v1116, %v1148
        %v1181 = vmax.f32 %v1117, %v1149
        %v1182 = vmax.f32 %v1118, %v1150
        %v1183 = vmax.f32 %v1119, %v1151
        %v1184 = vmax.f32 %v1120, %v1152
        %v1185 = vmax.f32 %v1121, %v1153
        %v1186 = vmax.f32 %v1122, %v1154
        %v1187 = vmax.f32 %v1155, %v1157
        %v1188 = vmax.f32 %v1156, %v1158
        %v1189 = vmax.f32 %v1187, %v1159
        %v1190 = vmax.f32 %v1188, %v1160
        %v1191 = vmax.f32 %v1189, %v1161
        %v1192 = vmax.f32 %v1190, %v1162
        %v1193 = vmax.f32 %v1191, %v1163
        %v1194 = vmax.f32 %v1192, %v1164
        %v1195 = vmax.f32 %v1193, %v1165
        %v1196 = vmax.f32 %v1194, %v1166
        %v1197 = vmax.f32 %v1195, %v1167
        %v1198 = vmax.f32 %v1196, %v1168
        %v1199 = vmax.f32 %v1197, %v1169
        %v1200 = vmax.f32 %v1198, %v1170
        %v1201 = vrot.slane %v1199, 4
        %v1202 = vmax.f32 %v1199, %v1201
        %v1203 = vrot.slane %v1202, 2
        %v1204 = vmax.f32 %v1202, %v1203
        %v1205 = vrot.slane %v1204, 1
        %v1206 = vmax.f32 %v1204, %v1205
        %v1207 = vrot.slane %v1200, 4
        %v1208 = vmax.f32 %v1200, %v1207
        %v1209 = vrot.slane %v1208, 2
        %v1210 = vmax.f32 %v1208, %v1209
        %v1211 = vrot.slane %v1210, 1
        %v1212 = vmax.f32 %v1210, %v1211
        %v1213 = vmax.f32 %v1171, %v1173
        %v1214 = vmax.f32 %v1172, %v1174
        %v1215 = vmax.f32 %v1213, %v1175
        %v1216 = vmax.f32 %v1214, %v1176
        %v1217 = vmax.f32 %v1215, %v1177
        %v1218 = vmax.f32 %v1216, %v1178
        %v1219 = vmax.f32 %v1217, %v1179
        %v1220 = vmax.f32 %v1218, %v1180
        %v1221 = vmax.f32 %v1219, %v1181
        %v1222 = vmax.f32 %v1220, %v1182
        %v1223 = vmax.f32 %v1221, %v1183
        %v1224 = vmax.f32 %v1222, %v1184
        %v1225 = vmax.f32 %v1223, %v1185
        %v1226 = vmax.f32 %v1224, %v1186
        %v1227 = vrot.slane %v1225, 4
        %v1228 = vmax.f32 %v1225, %v1227
        %v1229 = vrot.slane %v1228, 2
        %v1230 = vmax.f32 %v1228, %v1229
        %v1231 = vrot.slane %v1230, 1
        %v1232 = vmax.f32 %v1230, %v1231
        %v1233 = vrot.slane %v1226, 4
        %v1234 = vmax.f32 %v1226, %v1233
        %v1235 = vrot.slane %v1234, 2
        %v1236 = vmax.f32 %v1234, %v1235
        %v1237 = vrot.slane %v1236, 1
        %v1238 = vmax.f32 %v1236, %v1237
        %vm1239 = vcmask 1040384
        %v1240 = vsel %vm1239, %v930, %v936
        %vm1241 = vcmask 1041408
        %v1242 = vsel %vm1241, %v1240, %v956
        %vm1243 = vcmask 1042432
        %v1244 = vsel %vm1243, %v1242, %v962
        %vm1245 = vcmask 1043456
        %v1246 = vsel %vm1245, %v1244, %v1206
        %vm1247 = vcmask 1044480
        %v1248 = vsel %vm1247, %v1246, %v1212
        %vm1249 = vcmask 1045504
        %v1250 = vsel %vm1249, %v1248, %v1232
        %vm1251 = vcmask 1046528
        %v1252 = vsel %vm1251, %v1250, %v1238
        %1253 = vst [vmem:[%s161 + $0x1] sm:$0xff] %v1252
        %v1254 = vld [vmem:[%s131] sm:$0xff]
        %v1255 = vld [vmem:[%s131 + $0x8] sm:$0xff]
        %v1256 = vld [vmem:[%s131 + $0x10] sm:$0xff]
        %v1257 = vld [vmem:[%s131 + $0x18] sm:$0xff]
        %v1258 = vld [vmem:[%s131 + $0x20] sm:$0xff]
        %v1259 = vld [vmem:[%s131 + $0x28] sm:$0xff]
        %v1260 = vld [vmem:[%s131 + $0x30] sm:$0xff]
        %v1261 = vld [vmem:[%s131 + $0x38] sm:$0xff]
        %v1262 = vld [vmem:[%s131 + $0x40] sm:$0xff]
        %v1263 = vld [vmem:[%s131 + $0x48] sm:$0xff]
        %v1264 = vld [vmem:[%s131 + $0x50] sm:$0xff]
        %v1265 = vld [vmem:[%s131 + $0x58] sm:$0xff]
        %v1266 = vld [vmem:[%s131 + $0x60] sm:$0xff]
        %v1267 = vld [vmem:[%s131 + $0x68] sm:$0xff]
        %v1268 = vld [vmem:[%s131 + $0x70] sm:$0xff]
        %v1269 = vld [vmem:[%s131 + $0x78] sm:$0xff]
        %v1270 = vld [vmem:[%s131 + $0x80] sm:$0xff]
        %v1271 = vld [vmem:[%s131 + $0x88] sm:$0xff]
        %v1272 = vld [vmem:[%s131 + $0x90] sm:$0xff]
        %v1273 = vld [vmem:[%s131 + $0x98] sm:$0xff]
        %v1274 = vld [vmem:[%s131 + $0xa0] sm:$0xff]
        %v1275 = vld [vmem:[%s131 + $0xa8] sm:$0xff]
        %v1276 = vld [vmem:[%s131 + $0xb0] sm:$0xff]
        %v1277 = vld [vmem:[%s131 + $0xb8] sm:$0xff]
        %v1278 = vld [vmem:[%s131 + $0xc0] sm:$0xff]
        %v1279 = vld [vmem:[%s131 + $0xc8] sm:$0xff]
        %v1280 = vld [vmem:[%s131 + $0xd0] sm:$0xff]
        %v1281 = vld [vmem:[%s131 + $0xd8] sm:$0xff]
        %v1282 = vld [vmem:[%s131 + $0xe0] sm:$0xff]
        %v1283 = vld [vmem:[%s131 + $0xe8] sm:$0xff]
        %v1284 = vld [vmem:[%s131 + $0xf0] sm:$0xff]
        %v1285 = vld [vmem:[%s131 + $0xf8] sm:$0xff]
        %v1286 = vld [vmem:[%s194] sm:$0xff]
        %v1287 = vld [vmem:[%s194 + $0x8] sm:$0xff]
        %v1288 = vld [vmem:[%s194 + $0x10] sm:$0xff]
        %v1289 = vld [vmem:[%s194 + $0x18] sm:$0xff]
        %v1290 = vld [vmem:[%s194 + $0x20] sm:$0xff]
        %v1291 = vld [vmem:[%s194 + $0x28] sm:$0xff]
        %v1292 = vld [vmem:[%s194 + $0x30] sm:$0xff]
        %v1293 = vld [vmem:[%s194 + $0x38] sm:$0xff]
        %v1294 = vld [vmem:[%s194 + $0x40] sm:$0xff]
        %v1295 = vld [vmem:[%s194 + $0x48] sm:$0xff]
        %v1296 = vld [vmem:[%s194 + $0x50] sm:$0xff]
        %v1297 = vld [vmem:[%s194 + $0x58] sm:$0xff]
        %v1298 = vld [vmem:[%s194 + $0x60] sm:$0xff]
        %v1299 = vld [vmem:[%s194 + $0x68] sm:$0xff]
        %v1300 = vld [vmem:[%s194 + $0x70] sm:$0xff]
        %v1301 = vld [vmem:[%s194 + $0x78] sm:$0xff]
        %v1302 = vld [vmem:[%s194 + $0x80] sm:$0xff]
        %v1303 = vld [vmem:[%s194 + $0x88] sm:$0xff]
        %v1304 = vld [vmem:[%s194 + $0x90] sm:$0xff]
        %v1305 = vld [vmem:[%s194 + $0x98] sm:$0xff]
        %v1306 = vld [vmem:[%s194 + $0xa0] sm:$0xff]
        %v1307 = vld [vmem:[%s194 + $0xa8] sm:$0xff]
        %v1308 = vld [vmem:[%s194 + $0xb0] sm:$0xff]
        %v1309 = vld [vmem:[%s194 + $0xb8] sm:$0xff]
        %v1310 = vld [vmem:[%s194 + $0xc0] sm:$0xff]
        %v1311 = vld [vmem:[%s194 + $0xc8] sm:$0xff]
        %v1312 = vld [vmem:[%s194 + $0xd0] sm:$0xff]
        %v1313 = vld [vmem:[%s194 + $0xd8] sm:$0xff]
        %v1314 = vld [vmem:[%s194 + $0xe0] sm:$0xff]
        %v1315 = vld [vmem:[%s194 + $0xe8] sm:$0xff]
        %v1316 = vld [vmem:[%s194 + $0xf0] sm:$0xff]
        %v1317 = vld [vmem:[%s194 + $0xf8] sm:$0xff]
        %v1318 = vmax.f32 %v1254, %v1286
        %v1319 = vmax.f32 %v1255, %v1287
        %v1320 = vmax.f32 %v1256, %v1288
        %v1321 = vmax.f32 %v1257, %v1289
        %v1322 = vmax.f32 %v1258, %v1290
        %v1323 = vmax.f32 %v1259, %v1291
        %v1324 = vmax.f32 %v1260, %v1292
        %v1325 = vmax.f32 %v1261, %v1293
        %v1326 = vmax.f32 %v1262, %v1294
        %v1327 = vmax.f32 %v1263, %v1295
        %v1328 = vmax.f32 %v1264, %v1296
        %v1329 = vmax.f32 %v1265, %v1297
        %v1330 = vmax.f32 %v1266, %v1298
        %v1331 = vmax.f32 %v1267, %v1299
        %v1332 = vmax.f32 %v1268, %v1300
        %v1333 = vmax.f32 %v1269, %v1301
        %v1334 = vmax.f32 %v1270, %v1302
        %v1335 = vmax.f32 %v1271, %v1303
        %v1336 = vmax.f32 %v1272, %v1304
        %v1337 = vmax.f32 %v1273, %v1305
        %v1338 = vmax.f32 %v1274, %v1306
        %v1339 = vmax.f32 %v1275, %v1307
        %v1340 = vmax.f32 %v1276, %v1308
        %v1341 = vmax.f32 %v1277, %v1309
        %v1342 = vmax.f32 %v1278, %v1310
        %v1343 = vmax.f32 %v1279, %v1311
        %v1344 = vmax.f32 %v1280, %v1312
        %v1345 = vmax.f32 %v1281, %v1313
        %v1346 = vmax.f32 %v1282, %v1314
        %v1347 = vmax.f32 %v1283, %v1315
        %v1348 = vmax.f32 %v1284, %v1316
        %v1349 = vmax.f32 %v1285, %v1317
        %v1350 = vld [vmem:[%s259] sm:$0xff]
        %v1351 = vld [vmem:[%s259 + $0x8] sm:$0xff]
        %v1352 = vld [vmem:[%s259 + $0x10] sm:$0xff]
        %v1353 = vld [vmem:[%s259 + $0x18] sm:$0xff]
        %v1354 = vld [vmem:[%s259 + $0x20] sm:$0xff]
        %v1355 = vld [vmem:[%s259 + $0x28] sm:$0xff]
        %v1356 = vld [vmem:[%s259 + $0x30] sm:$0xff]
        %v1357 = vld [vmem:[%s259 + $0x38] sm:$0xff]
        %v1358 = vld [vmem:[%s259 + $0x40] sm:$0xff]
        %v1359 = vld [vmem:[%s259 + $0x48] sm:$0xff]
        %v1360 = vld [vmem:[%s259 + $0x50] sm:$0xff]
        %v1361 = vld [vmem:[%s259 + $0x58] sm:$0xff]
        %v1362 = vld [vmem:[%s259 + $0x60] sm:$0xff]
        %v1363 = vld [vmem:[%s259 + $0x68] sm:$0xff]
        %v1364 = vld [vmem:[%s259 + $0x70] sm:$0xff]
        %v1365 = vld [vmem:[%s259 + $0x78] sm:$0xff]
        %v1366 = vld [vmem:[%s259 + $0x80] sm:$0xff]
        %v1367 = vld [vmem:[%s259 + $0x88] sm:$0xff]
        %v1368 = vld [vmem:[%s259 + $0x90] sm:$0xff]
        %v1369 = vld [vmem:[%s259 + $0x98] sm:$0xff]
        %v1370 = vld [vmem:[%s259 + $0xa0] sm:$0xff]
        %v1371 = vld [vmem:[%s259 + $0xa8] sm:$0xff]
        %v1372 = vld [vmem:[%s259 + $0xb0] sm:$0xff]
        %v1373 = vld [vmem:[%s259 + $0xb8] sm:$0xff]
        %v1374 = vld [vmem:[%s259 + $0xc0] sm:$0xff]
        %v1375 = vld [vmem:[%s259 + $0xc8] sm:$0xff]
        %v1376 = vld [vmem:[%s259 + $0xd0] sm:$0xff]
        %v1377 = vld [vmem:[%s259 + $0xd8] sm:$0xff]
        %v1378 = vld [vmem:[%s259 + $0xe0] sm:$0xff]
        %v1379 = vld [vmem:[%s259 + $0xe8] sm:$0xff]
        %v1380 = vld [vmem:[%s259 + $0xf0] sm:$0xff]
        %v1381 = vld [vmem:[%s259 + $0xf8] sm:$0xff]
        %v1382 = vmax.f32 %v1318, %v1350
        %v1383 = vmax.f32 %v1319, %v1351
        %v1384 = vmax.f32 %v1320, %v1352
        %v1385 = vmax.f32 %v1321, %v1353
        %v1386 = vmax.f32 %v1322, %v1354
        %v1387 = vmax.f32 %v1323, %v1355
        %v1388 = vmax.f32 %v1324, %v1356
        %v1389 = vmax.f32 %v1325, %v1357
        %v1390 = vmax.f32 %v1326, %v1358
        %v1391 = vmax.f32 %v1327, %v1359
        %v1392 = vmax.f32 %v1328, %v1360
        %v1393 = vmax.f32 %v1329, %v1361
        %v1394 = vmax.f32 %v1330, %v1362
        %v1395 = vmax.f32 %v1331, %v1363
        %v1396 = vmax.f32 %v1332, %v1364
        %v1397 = vmax.f32 %v1333, %v1365
        %v1398 = vmax.f32 %v1334, %v1366
        %v1399 = vmax.f32 %v1335, %v1367
        %v1400 = vmax.f32 %v1336, %v1368
        %v1401 = vmax.f32 %v1337, %v1369
        %v1402 = vmax.f32 %v1338, %v1370
        %v1403 = vmax.f32 %v1339, %v1371
        %v1404 = vmax.f32 %v1340, %v1372
        %v1405 = vmax.f32 %v1341, %v1373
        %v1406 = vmax.f32 %v1342, %v1374
        %v1407 = vmax.f32 %v1343, %v1375
        %v1408 = vmax.f32 %v1344, %v1376
        %v1409 = vmax.f32 %v1345, %v1377
        %v1410 = vmax.f32 %v1346, %v1378
        %v1411 = vmax.f32 %v1347, %v1379
        %v1412 = vmax.f32 %v1348, %v1380
        %v1413 = vmax.f32 %v1349, %v1381
        %v1414 = vmax.f32 %v1382, %v1384
        %v1415 = vmax.f32 %v1383, %v1385
        %v1416 = vmax.f32 %v1414, %v1386
        %v1417 = vmax.f32 %v1415, %v1387
        %v1418 = vmax.f32 %v1416, %v1388
        %v1419 = vmax.f32 %v1417, %v1389
        %v1420 = vmax.f32 %v1418, %v1390
        %v1421 = vmax.f32 %v1419, %v1391
        %v1422 = vsel %vm1247, %v1420, -inf
        %v1423 = vrot.slane %v1422, 4
        %v1424 = vmax.f32 %v1422, %v1423
        %v1425 = vrot.slane %v1424, 2
        %v1426 = vmax.f32 %v1424, %v1425
        %v1427 = vrot.slane %v1426, 1
        %v1428 = vmax.f32 %v1426, %v1427
        %v1429 = vmax.f32 %v1428, 0.0
        %vm1430 = vcmask 1047557
        %v1431 = vsel %vm1430, %v1420, -inf
        %v1432 = vsel %vm1243, %v1421, -inf
        %v1433 = vmax.f32 %v1431, %v1432
        %v1434 = vrot.slane %v1433, 4
        %v1435 = vmax.f32 %v1433, %v1434
        %v1436 = vrot.slane %v1435, 2
        %v1437 = vmax.f32 %v1435, %v1436
        %v1438 = vrot.slane %v1437, 1
        %v1439 = vmax.f32 %v1437, %v1438
        %v1440 = vmax.f32 %v1439, 0.0
        %vm1441 = vcmask 1047555
        %v1442 = vsel %vm1441, %v1421, -inf
        %v1443 = vrot.slane %v1442, 4
        %v1444 = vmax.f32 %v1442, %v1443
        %v1445 = vrot.slane %v1444, 2
        %v1446 = vmax.f32 %v1444, %v1445
        %v1447 = vrot.slane %v1446, 1
        %v1448 = vmax.f32 %v1446, %v1447
        %v1449 = vmax.f32 %v1448, 0.0
        %v1450 = vmax.f32 %v1392, %v1394
        %v1451 = vmax.f32 %v1393, %v1395
        %v1452 = vmax.f32 %v1450, %v1396
        %v1453 = vmax.f32 %v1451, %v1397
        %v1454 = vmax.f32 %v1452, %v1398
        %v1455 = vmax.f32 %v1453, %v1399
        %v1456 = vmax.f32 %v1454, %v1400
        %v1457 = vmax.f32 %v1455, %v1401
        %v1458 = vmax.f32 %v1456, %v1402
        %v1459 = vmax.f32 %v1457, %v1403
        %v1460 = vsel %vm1247, %v1458, -inf
        %v1461 = vrot.slane %v1460, 4
        %v1462 = vmax.f32 %v1460, %v1461
        %v1463 = vrot.slane %v1462, 2
        %v1464 = vmax.f32 %v1462, %v1463
        %v1465 = vrot.slane %v1464, 1
        %v1466 = vmax.f32 %v1464, %v1465
        %v1467 = vmax.f32 %v1466, 0.0
        %v1468 = vsel %vm1430, %v1458, -inf
        %v1469 = vsel %vm1243, %v1459, -inf
        %v1470 = vmax.f32 %v1468, %v1469
        %v1471 = vrot.slane %v1470, 4
        %v1472 = vmax.f32 %v1470, %v1471
        %v1473 = vrot.slane %v1472, 2
        %v1474 = vmax.f32 %v1472, %v1473
        %v1475 = vrot.slane %v1474, 1
        %v1476 = vmax.f32 %v1474, %v1475
        %v1477 = vsel %vm1441, %v1459, -inf
        %v1478 = vrot.slane %v1477, 4
        %v1479 = vmax.f32 %v1477, %v1478
        %v1480 = vrot.slane %v1479, 2
        %v1481 = vmax.f32 %v1479, %v1480
        %v1482 = vrot.slane %v1481, 1
        %v1483 = vmax.f32 %v1481, %v1482
        %v1484 = vmax.f32 %v1483, 0.0
        %v1485 = vmax.f32 %v1404, %v1406
        %v1486 = vmax.f32 %v1405, %v1407
        %v1487 = vmax.f32 %v1485, %v1408
        %v1488 = vmax.f32 %v1486, %v1409
        %v1489 = vmax.f32 %v1487, %v1410
        %v1490 = vmax.f32 %v1488, %v1411
        %v1491 = vmax.f32 %v1489, %v1412
        %v1492 = vmax.f32 %v1490, %v1413
        %v1493 = vsel %vm1247, %v1491, -inf
        %v1494 = vrot.slane %v1493, 4
        %v1495 = vmax.f32 %v1493, %v1494
        %v1496 = vrot.slane %v1495, 2
        %v1497 = vmax.f32 %v1495, %v1496
        %v1498 = vrot.slane %v1497, 1
        %v1499 = vmax.f32 %v1497, %v1498
        %v1500 = vmax.f32 %v1499, 0.0
        %v1501 = vsel %vm1430, %v1491, -inf
        %v1502 = vsel %vm1243, %v1492, -inf
        %v1503 = vmax.f32 %v1501, %v1502
        %v1504 = vrot.slane %v1503, 4
        %v1505 = vmax.f32 %v1503, %v1504
        %v1506 = vrot.slane %v1505, 2
        %v1507 = vmax.f32 %v1505, %v1506
        %v1508 = vrot.slane %v1507, 1
        %v1509 = vmax.f32 %v1507, %v1508
        %v1510 = vmax.f32 %v1509, 0.0
        %v1511 = vsel %vm1441, %v1492, -inf
        %v1512 = vrot.slane %v1511, 4
        %v1513 = vmax.f32 %v1511, %v1512
        %v1514 = vrot.slane %v1513, 2
        %v1515 = vmax.f32 %v1513, %v1514
        %v1516 = vrot.slane %v1515, 1
        %v1517 = vmax.f32 %v1515, %v1516
        %v1518 = vmax.f32 %v1517, 0.0
        %v1519 = vld [vmem:[%s324] sm:$0xff]
        %v1520 = vld [vmem:[%s324 + $0x8] sm:$0xff]
        %v1521 = vld [vmem:[%s324 + $0x10] sm:$0xff]
        %v1522 = vld [vmem:[%s324 + $0x18] sm:$0xff]
        %v1523 = vld [vmem:[%s324 + $0x20] sm:$0xff]
        %v1524 = vld [vmem:[%s324 + $0x28] sm:$0xff]
        %v1525 = vld [vmem:[%s324 + $0x30] sm:$0xff]
        %v1526 = vld [vmem:[%s324 + $0x38] sm:$0xff]
        %v1527 = vld [vmem:[%s324 + $0x40] sm:$0xff]
        %v1528 = vld [vmem:[%s324 + $0x48] sm:$0xff]
        %v1529 = vld [vmem:[%s324 + $0x50] sm:$0xff]
        %v1530 = vld [vmem:[%s324 + $0x58] sm:$0xff]
        %v1531 = vld [vmem:[%s324 + $0x60] sm:$0xff]
        %v1532 = vld [vmem:[%s324 + $0x68] sm:$0xff]
        %v1533 = vld [vmem:[%s324 + $0x70] sm:$0xff]
        %v1534 = vld [vmem:[%s324 + $0x78] sm:$0xff]
        %v1535 = vld [vmem:[%s324 + $0x80] sm:$0xff]
        %v1536 = vld [vmem:[%s324 + $0x88] sm:$0xff]
        %v1537 = vld [vmem:[%s324 + $0x90] sm:$0xff]
        %v1538 = vld [vmem:[%s324 + $0x98] sm:$0xff]
        %v1539 = vld [vmem:[%s324 + $0xa0] sm:$0xff]
        %v1540 = vld [vmem:[%s324 + $0xa8] sm:$0xff]
        %v1541 = vld [vmem:[%s324 + $0xb0] sm:$0xff]
        %v1542 = vld [vmem:[%s324 + $0xb8] sm:$0xff]
        %v1543 = vld [vmem:[%s324 + $0xc0] sm:$0xff]
        %v1544 = vld [vmem:[%s324 + $0xc8] sm:$0xff]
        %v1545 = vld [vmem:[%s324 + $0xd0] sm:$0xff]
        %v1546 = vld [vmem:[%s324 + $0xd8] sm:$0xff]
        %v1547 = vld [vmem:[%s324 + $0xe0] sm:$0xff]
        %v1548 = vld [vmem:[%s324 + $0xe8] sm:$0xff]
        %v1549 = vld [vmem:[%s324 + $0xf0] sm:$0xff]
        %v1550 = vld [vmem:[%s324 + $0xf8] sm:$0xff]
        %v1551 = vld [vmem:[%s389] sm:$0xff]
        %v1552 = vld [vmem:[%s389 + $0x8] sm:$0xff]
        %v1553 = vld [vmem:[%s389 + $0x10] sm:$0xff]
        %v1554 = vld [vmem:[%s389 + $0x18] sm:$0xff]
        %v1555 = vld [vmem:[%s389 + $0x20] sm:$0xff]
        %v1556 = vld [vmem:[%s389 + $0x28] sm:$0xff]
        %v1557 = vld [vmem:[%s389 + $0x30] sm:$0xff]
        %v1558 = vld [vmem:[%s389 + $0x38] sm:$0xff]
        %v1559 = vld [vmem:[%s389 + $0x40] sm:$0xff]
        %v1560 = vld [vmem:[%s389 + $0x48] sm:$0xff]
        %v1561 = vld [vmem:[%s389 + $0x50] sm:$0xff]
        %v1562 = vld [vmem:[%s389 + $0x58] sm:$0xff]
        %v1563 = vld [vmem:[%s389 + $0x60] sm:$0xff]
        %v1564 = vld [vmem:[%s389 + $0x68] sm:$0xff]
        %v1565 = vld [vmem:[%s389 + $0x70] sm:$0xff]
        %v1566 = vld [vmem:[%s389 + $0x78] sm:$0xff]
        %v1567 = vld [vmem:[%s389 + $0x80] sm:$0xff]
        %v1568 = vld [vmem:[%s389 + $0x88] sm:$0xff]
        %v1569 = vld [vmem:[%s389 + $0x90] sm:$0xff]
        %v1570 = vld [vmem:[%s389 + $0x98] sm:$0xff]
        %v1571 = vld [vmem:[%s389 + $0xa0] sm:$0xff]
        %v1572 = vld [vmem:[%s389 + $0xa8] sm:$0xff]
        %v1573 = vld [vmem:[%s389 + $0xb0] sm:$0xff]
        %v1574 = vld [vmem:[%s389 + $0xb8] sm:$0xff]
        %v1575 = vld [vmem:[%s389 + $0xc0] sm:$0xff]
        %v1576 = vld [vmem:[%s389 + $0xc8] sm:$0xff]
        %v1577 = vld [vmem:[%s389 + $0xd0] sm:$0xff]
        %v1578 = vld [vmem:[%s389 + $0xd8] sm:$0xff]
        %v1579 = vld [vmem:[%s389 + $0xe0] sm:$0xff]
        %v1580 = vld [vmem:[%s389 + $0xe8] sm:$0xff]
        %v1581 = vld [vmem:[%s389 + $0xf0] sm:$0xff]
        %v1582 = vld [vmem:[%s389 + $0xf8] sm:$0xff]
        %v1583 = vmax.f32 %v1519, %v1551
        %v1584 = vmax.f32 %v1520, %v1552
        %v1585 = vmax.f32 %v1521, %v1553
        %v1586 = vmax.f32 %v1522, %v1554
        %v1587 = vmax.f32 %v1523, %v1555
        %v1588 = vmax.f32 %v1524, %v1556
        %v1589 = vmax.f32 %v1525, %v1557
        %v1590 = vmax.f32 %v1526, %v1558
        %v1591 = vmax.f32 %v1527, %v1559
        %v1592 = vmax.f32 %v1528, %v1560
        %v1593 = vmax.f32 %v1529, %v1561
        %v1594 = vmax.f32 %v1530, %v1562
        %v1595 = vmax.f32 %v1531, %v1563
        %v1596 = vmax.f32 %v1532, %v1564
        %v1597 = vmax.f32 %v1533, %v1565
        %v1598 = vmax.f32 %v1534, %v1566
        %v1599 = vmax.f32 %v1535, %v1567
        %v1600 = vmax.f32 %v1536, %v1568
        %v1601 = vmax.f32 %v1537, %v1569
        %v1602 = vmax.f32 %v1538, %v1570
        %v1603 = vmax.f32 %v1539, %v1571
        %v1604 = vmax.f32 %v1540, %v1572
        %v1605 = vmax.f32 %v1541, %v1573
        %v1606 = vmax.f32 %v1542, %v1574
        %v1607 = vmax.f32 %v1543, %v1575
        %v1608 = vmax.f32 %v1544, %v1576
        %v1609 = vmax.f32 %v1545, %v1577
        %v1610 = vmax.f32 %v1546, %v1578
        %v1611 = vmax.f32 %v1547, %v1579
        %v1612 = vmax.f32 %v1548, %v1580
        %v1613 = vmax.f32 %v1549, %v1581
        %v1614 = vmax.f32 %v1550, %v1582
        %v1615 = vld [vmem:[%s454] sm:$0xff]
        %v1616 = vld [vmem:[%s454 + $0x8] sm:$0xff]
        %v1617 = vld [vmem:[%s454 + $0x10] sm:$0xff]
        %v1618 = vld [vmem:[%s454 + $0x18] sm:$0xff]
        %v1619 = vld [vmem:[%s454 + $0x20] sm:$0xff]
        %v1620 = vld [vmem:[%s454 + $0x28] sm:$0xff]
        %v1621 = vld [vmem:[%s454 + $0x30] sm:$0xff]
        %v1622 = vld [vmem:[%s454 + $0x38] sm:$0xff]
        %v1623 = vld [vmem:[%s454 + $0x40] sm:$0xff]
        %v1624 = vld [vmem:[%s454 + $0x48] sm:$0xff]
        %v1625 = vld [vmem:[%s454 + $0x50] sm:$0xff]
        %v1626 = vld [vmem:[%s454 + $0x58] sm:$0xff]
        %v1627 = vld [vmem:[%s454 + $0x60] sm:$0xff]
        %v1628 = vld [vmem:[%s454 + $0x68] sm:$0xff]
        %v1629 = vld [vmem:[%s454 + $0x70] sm:$0xff]
        %v1630 = vld [vmem:[%s454 + $0x78] sm:$0xff]
        %v1631 = vld [vmem:[%s454 + $0x80] sm:$0xff]
        %v1632 = vld [vmem:[%s454 + $0x88] sm:$0xff]
        %v1633 = vld [vmem:[%s454 + $0x90] sm:$0xff]
        %v1634 = vld [vmem:[%s454 + $0x98] sm:$0xff]
        %v1635 = vld [vmem:[%s454 + $0xa0] sm:$0xff]
        %v1636 = vld [vmem:[%s454 + $0xa8] sm:$0xff]
        %v1637 = vld [vmem:[%s454 + $0xb0] sm:$0xff]
        %v1638 = vld [vmem:[%s454 + $0xb8] sm:$0xff]
        %v1639 = vld [vmem:[%s454 + $0xc0] sm:$0xff]
        %v1640 = vld [vmem:[%s454 + $0xc8] sm:$0xff]
        %v1641 = vld [vmem:[%s454 + $0xd0] sm:$0xff]
        %v1642 = vld [vmem:[%s454 + $0xd8] sm:$0xff]
        %v1643 = vld [vmem:[%s454 + $0xe0] sm:$0xff]
        %v1644 = vld [vmem:[%s454 + $0xe8] sm:$0xff]
        %v1645 = vld [vmem:[%s454 + $0xf0] sm:$0xff]
        %v1646 = vld [vmem:[%s454 + $0xf8] sm:$0xff]
        %v1647 = vmax.f32 %v1583, %v1615
        %v1648 = vmax.f32 %v1584, %v1616
        %v1649 = vmax.f32 %v1585, %v1617
        %v1650 = vmax.f32 %v1586, %v1618
        %v1651 = vmax.f32 %v1587, %v1619
        %v1652 = vmax.f32 %v1588, %v1620
        %v1653 = vmax.f32 %v1589, %v1621
        %v1654 = vmax.f32 %v1590, %v1622
        %v1655 = vmax.f32 %v1591, %v1623
        %v1656 = vmax.f32 %v1592, %v1624
        %v1657 = vmax.f32 %v1593, %v1625
        %v1658 = vmax.f32 %v1594, %v1626
        %v1659 = vmax.f32 %v1595, %v1627
        %v1660 = vmax.f32 %v1596, %v1628
        %v1661 = vmax.f32 %v1597, %v1629
        %v1662 = vmax.f32 %v1598, %v1630
        %v1663 = vmax.f32 %v1599, %v1631
        %v1664 = vmax.f32 %v1600, %v1632
        %v1665 = vmax.f32 %v1601, %v1633
        %v1666 = vmax.f32 %v1602, %v1634
        %v1667 = vmax.f32 %v1603, %v1635
        %v1668 = vmax.f32 %v1604, %v1636
        %v1669 = vmax.f32 %v1605, %v1637
        %v1670 = vmax.f32 %v1606, %v1638
        %v1671 = vmax.f32 %v1607, %v1639
        %v1672 = vmax.f32 %v1608, %v1640
        %v1673 = vmax.f32 %v1609, %v1641
        %v1674 = vmax.f32 %v1610, %v1642
        %v1675 = vmax.f32 %v1611, %v1643
        %v1676 = vmax.f32 %v1612, %v1644
        %v1677 = vmax.f32 %v1613, %v1645
        %v1678 = vmax.f32 %v1614, %v1646
        %v1679 = vmax.f32 %v1647, %v1649
        %v1680 = vmax.f32 %v1648, %v1650
        %v1681 = vmax.f32 %v1679, %v1651
        %v1682 = vmax.f32 %v1680, %v1652
        %v1683 = vmax.f32 %v1681, %v1653
        %v1684 = vmax.f32 %v1682, %v1654
        %v1685 = vmax.f32 %v1683, %v1655
        %v1686 = vmax.f32 %v1684, %v1656
        %v1687 = vsel %vm1247, %v1685, -inf
        %v1688 = vrot.slane %v1687, 4
        %v1689 = vmax.f32 %v1687, %v1688
        %v1690 = vrot.slane %v1689, 2
        %v1691 = vmax.f32 %v1689, %v1690
        %v1692 = vrot.slane %v1691, 1
        %v1693 = vmax.f32 %v1691, %v1692
        %v1694 = vmax.f32 %v1693, 0.0
        %v1695 = vsel %vm1430, %v1685, -inf
        %v1696 = vsel %vm1243, %v1686, -inf
        %v1697 = vmax.f32 %v1695, %v1696
        %v1698 = vrot.slane %v1697, 4
        %v1699 = vmax.f32 %v1697, %v1698
        %v1700 = vrot.slane %v1699, 2
        %v1701 = vmax.f32 %v1699, %v1700
        %v1702 = vrot.slane %v1701, 1
        %v1703 = vmax.f32 %v1701, %v1702
        %v1704 = vmax.f32 %v1703, 0.0
        %v1705 = vsel %vm1441, %v1686, -inf
        %v1706 = vrot.slane %v1705, 4
        %v1707 = vmax.f32 %v1705, %v1706
        %v1708 = vrot.slane %v1707, 2
        %v1709 = vmax.f32 %v1707, %v1708
        %v1710 = vrot.slane %v1709, 1
        %v1711 = vmax.f32 %v1709, %v1710
        %v1712 = vmax.f32 %v1711, 0.0
        %v1713 = vmax.f32 %v1657, %v1659
        %v1714 = vmax.f32 %v1658, %v1660
        %v1715 = vmax.f32 %v1713, %v1661
        %v1716 = vmax.f32 %v1714, %v1662
        %v1717 = vmax.f32 %v1715, %v1663
        %v1718 = vmax.f32 %v1716, %v1664
        %v1719 = vmax.f32 %v1717, %v1665
        %v1720 = vmax.f32 %v1718, %v1666
        %v1721 = vmax.f32 %v1719, %v1667
        %v1722 = vmax.f32 %v1720, %v1668
        %v1723 = vsel %vm1247, %v1721, -inf
        %v1724 = vrot.slane %v1723, 4
        %v1725 = vmax.f32 %v1723, %v1724
        %v1726 = vrot.slane %v1725, 2
        %v1727 = vmax.f32 %v1725, %v1726
        %v1728 = vrot.slane %v1727, 1
        %v1729 = vmax.f32 %v1727, %v1728
        %v1730 = vmax.f32 %v1729, 0.0
        %v1731 = vsel %vm1430, %v1721, -inf
        %v1732 = vsel %vm1243, %v1722, -inf
        %v1733 = vmax.f32 %v1731, %v1732
        %v1734 = vrot.slane %v1733, 4
        %v1735 = vmax.f32 %v1733, %v1734
        %v1736 = vrot.slane %v1735, 2
        %v1737 = vmax.f32 %v1735, %v1736
        %v1738 = vrot.slane %v1737, 1
        %v1739 = vmax.f32 %v1737, %v1738
        %v1740 = vsel %vm1441, %v1722, -inf
        %v1741 = vrot.slane %v1740, 4
        %v1742 = vmax.f32 %v1740, %v1741
        %v1743 = vrot.slane %v1742, 2
        %v1744 = vmax.f32 %v1742, %v1743
        %v1745 = vrot.slane %v1744, 1
        %v1746 = vmax.f32 %v1744, %v1745
        %v1747 = vmax.f32 %v1746, 0.0
        %v1748 = vmax.f32 %v1669, %v1671
        %v1749 = vmax.f32 %v1670, %v1672
        %v1750 = vmax.f32 %v1748, %v1673
        %v1751 = vmax.f32 %v1749, %v1674
        %v1752 = vmax.f32 %v1750, %v1675
        %v1753 = vmax.f32 %v1751, %v1676
        %v1754 = vmax.f32 %v1752, %v1677
        %v1755 = vmax.f32 %v1753, %v1678
        %v1756 = vsel %vm1247, %v1754, -inf
        %v1757 = vrot.slane %v1756, 4
        %v1758 = vmax.f32 %v1756, %v1757
        %v1759 = vrot.slane %v1758, 2
        %v1760 = vmax.f32 %v1758, %v1759
        %v1761 = vrot.slane %v1760, 1
        %v1762 = vmax.f32 %v1760, %v1761
        %v1763 = vmax.f32 %v1762, 0.0
        %v1764 = vsel %vm1430, %v1754, -inf
        %v1765 = vsel %vm1243, %v1755, -inf
        %v1766 = vmax.f32 %v1764, %v1765
        %v1767 = vrot.slane %v1766, 4
        %v1768 = vmax.f32 %v1766, %v1767
        %v1769 = vrot.slane %v1768, 2
        %v1770 = vmax.f32 %v1768, %v1769
        %v1771 = vrot.slane %v1770, 1
        %v1772 = vmax.f32 %v1770, %v1771
        %v1773 = vmax.f32 %v1772, 0.0
        %v1774 = vsel %vm1441, %v1755, -inf
        %v1775 = vrot.slane %v1774, 4
        %v1776 = vmax.f32 %v1774, %v1775
        %v1777 = vrot.slane %v1776, 2
        %v1778 = vmax.f32 %v1776, %v1777
        %v1779 = vrot.slane %v1778, 1
        %v1780 = vmax.f32 %v1778, %v1779
        %v1781 = vmax.f32 %v1780, 0.0
        %v1782 = vld [vmem:[%s519] sm:$0xff]
        %v1783 = vld [vmem:[%s519 + $0x8] sm:$0xff]
        %v1784 = vld [vmem:[%s519 + $0x10] sm:$0xff]
        %v1785 = vld [vmem:[%s519 + $0x18] sm:$0xff]
        %v1786 = vld [vmem:[%s519 + $0x20] sm:$0xff]
        %v1787 = vld [vmem:[%s519 + $0x28] sm:$0xff]
        %v1788 = vld [vmem:[%s519 + $0x30] sm:$0xff]
        %v1789 = vld [vmem:[%s519 + $0x38] sm:$0xff]
        %v1790 = vld [vmem:[%s519 + $0x40] sm:$0xff]
        %v1791 = vld [vmem:[%s519 + $0x48] sm:$0xff]
        %v1792 = vld [vmem:[%s519 + $0x50] sm:$0xff]
        %v1793 = vld [vmem:[%s519 + $0x58] sm:$0xff]
        %v1794 = vld [vmem:[%s519 + $0x60] sm:$0xff]
        %v1795 = vld [vmem:[%s519 + $0x68] sm:$0xff]
        %v1796 = vld [vmem:[%s519 + $0x70] sm:$0xff]
        %v1797 = vld [vmem:[%s519 + $0x78] sm:$0xff]
        %v1798 = vld [vmem:[%s519 + $0x80] sm:$0xff]
        %v1799 = vld [vmem:[%s519 + $0x88] sm:$0xff]
        %v1800 = vld [vmem:[%s519 + $0x90] sm:$0xff]
        %v1801 = vld [vmem:[%s519 + $0x98] sm:$0xff]
        %v1802 = vld [vmem:[%s519 + $0xa0] sm:$0xff]
        %v1803 = vld [vmem:[%s519 + $0xa8] sm:$0xff]
        %v1804 = vld [vmem:[%s519 + $0xb0] sm:$0xff]
        %v1805 = vld [vmem:[%s519 + $0xb8] sm:$0xff]
        %v1806 = vld [vmem:[%s519 + $0xc0] sm:$0xff]
        %v1807 = vld [vmem:[%s519 + $0xc8] sm:$0xff]
        %v1808 = vld [vmem:[%s519 + $0xd0] sm:$0xff]
        %v1809 = vld [vmem:[%s519 + $0xd8] sm:$0xff]
        %v1810 = vld [vmem:[%s519 + $0xe0] sm:$0xff]
        %v1811 = vld [vmem:[%s519 + $0xe8] sm:$0xff]
        %v1812 = vld [vmem:[%s519 + $0xf0] sm:$0xff]
        %v1813 = vld [vmem:[%s519 + $0xf8] sm:$0xff]
        %v1814 = vld [vmem:[%s584] sm:$0xff]
        %v1815 = vld [vmem:[%s584 + $0x8] sm:$0xff]
        %v1816 = vld [vmem:[%s584 + $0x10] sm:$0xff]
        %v1817 = vld [vmem:[%s584 + $0x18] sm:$0xff]
        %v1818 = vld [vmem:[%s584 + $0x20] sm:$0xff]
        %v1819 = vld [vmem:[%s584 + $0x28] sm:$0xff]
        %v1820 = vld [vmem:[%s584 + $0x30] sm:$0xff]
        %v1821 = vld [vmem:[%s584 + $0x38] sm:$0xff]
        %v1822 = vld [vmem:[%s584 + $0x40] sm:$0xff]
        %v1823 = vld [vmem:[%s584 + $0x48] sm:$0xff]
        %v1824 = vld [vmem:[%s584 + $0x50] sm:$0xff]
        %v1825 = vld [vmem:[%s584 + $0x58] sm:$0xff]
        %v1826 = vld [vmem:[%s584 + $0x60] sm:$0xff]
        %v1827 = vld [vmem:[%s584 + $0x68] sm:$0xff]
        %v1828 = vld [vmem:[%s584 + $0x70] sm:$0xff]
        %v1829 = vld [vmem:[%s584 + $0x78] sm:$0xff]
        %v1830 = vld [vmem:[%s584 + $0x80] sm:$0xff]
        %v1831 = vld [vmem:[%s584 + $0x88] sm:$0xff]
        %v1832 = vld [vmem:[%s584 + $0x90] sm:$0xff]
        %v1833 = vld [vmem:[%s584 + $0x98] sm:$0xff]
        %v1834 = vld [vmem:[%s584 + $0xa0] sm:$0xff]
        %v1835 = vld [vmem:[%s584 + $0xa8] sm:$0xff]
        %v1836 = vld [vmem:[%s584 + $0xb0] sm:$0xff]
        %v1837 = vld [vmem:[%s584 + $0xb8] sm:$0xff]
        %v1838 = vld [vmem:[%s584 + $0xc0] sm:$0xff]
        %v1839 = vld [vmem:[%s584 + $0xc8] sm:$0xff]
        %v1840 = vld [vmem:[%s584 + $0xd0] sm:$0xff]
        %v1841 = vld [vmem:[%s584 + $0xd8] sm:$0xff]
        %v1842 = vld [vmem:[%s584 + $0xe0] sm:$0xff]
        %v1843 = vld [vmem:[%s584 + $0xe8] sm:$0xff]
        %v1844 = vld [vmem:[%s584 + $0xf0] sm:$0xff]
        %v1845 = vld [vmem:[%s584 + $0xf8] sm:$0xff]
        %v1846 = vmax.f32 %v1782, %v1814
        %v1847 = vmax.f32 %v1783, %v1815
        %v1848 = vmax.f32 %v1784, %v1816
        %v1849 = vmax.f32 %v1785, %v1817
        %v1850 = vmax.f32 %v1786, %v1818
        %v1851 = vmax.f32 %v1787, %v1819
        %v1852 = vmax.f32 %v1788, %v1820
        %v1853 = vmax.f32 %v1789, %v1821
        %v1854 = vmax.f32 %v1790, %v1822
        %v1855 = vmax.f32 %v1791, %v1823
        %v1856 = vmax.f32 %v1792, %v1824
        %v1857 = vmax.f32 %v1793, %v1825
        %v1858 = vmax.f32 %v1794, %v1826
        %v1859 = vmax.f32 %v1795, %v1827
        %v1860 = vmax.f32 %v1796, %v1828
        %v1861 = vmax.f32 %v1797, %v1829
        %v1862 = vmax.f32 %v1798, %v1830
        %v1863 = vmax.f32 %v1799, %v1831
        %v1864 = vmax.f32 %v1800, %v1832
        %v1865 = vmax.f32 %v1801, %v1833
        %v1866 = vmax.f32 %v1802, %v1834
        %v1867 = vmax.f32 %v1803, %v1835
        %v1868 = vmax.f32 %v1804, %v1836
        %v1869 = vmax.f32 %v1805, %v1837
        %v1870 = vmax.f32 %v1806, %v1838
        %v1871 = vmax.f32 %v1807, %v1839
        %v1872 = vmax.f32 %v1808, %v1840
        %v1873 = vmax.f32 %v1809, %v1841
        %v1874 = vmax.f32 %v1810, %v1842
        %v1875 = vmax.f32 %v1811, %v1843
        %v1876 = vmax.f32 %v1812, %v1844
        %v1877 = vmax.f32 %v1813, %v1845
        %v1878 = vmax.f32 %v1846, %v1848
        %v1879 = vmax.f32 %v1847, %v1849
        %v1880 = vmax.f32 %v1878, %v1850
        %v1881 = vmax.f32 %v1879, %v1851
        %v1882 = vmax.f32 %v1880, %v1852
        %v1883 = vmax.f32 %v1881, %v1853
        %v1884 = vmax.f32 %v1882, %v1854
        %v1885 = vmax.f32 %v1883, %v1855
        %v1886 = vsel %vm1247, %v1884, -inf
        %v1887 = vrot.slane %v1886, 4
        %v1888 = vmax.f32 %v1886, %v1887
        %v1889 = vrot.slane %v1888, 2
        %v1890 = vmax.f32 %v1888, %v1889
        %v1891 = vrot.slane %v1890, 1
        %v1892 = vmax.f32 %v1890, %v1891
        %v1893 = vmax.f32 %v1892, 0.0
        %v1894 = vsel %vm1430, %v1884, -inf
        %v1895 = vsel %vm1243, %v1885, -inf
        %v1896 = vmax.f32 %v1894, %v1895
        %v1897 = vrot.slane %v1896, 4
        %v1898 = vmax.f32 %v1896, %v1897
        %v1899 = vrot.slane %v1898, 2
        %v1900 = vmax.f32 %v1898, %v1899
        %v1901 = vrot.slane %v1900, 1
        %v1902 = vmax.f32 %v1900, %v1901
        %v1903 = vmax.f32 %v1902, 0.0
        %v1904 = vsel %vm1441, %v1885, -inf
        %v1905 = vrot.slane %v1904, 4
        %v1906 = vmax.f32 %v1904, %v1905
        %v1907 = vrot.slane %v1906, 2
        %v1908 = vmax.f32 %v1906, %v1907
        %v1909 = vrot.slane %v1908, 1
        %v1910 = vmax.f32 %v1908, %v1909
        %v1911 = vmax.f32 %v1910, 0.0
        %v1912 = vmax.f32 %v1856, %v1858
        %v1913 = vmax.f32 %v1857, %v1859
        %v1914 = vmax.f32 %v1912, %v1860
        %v1915 = vmax.f32 %v1913, %v1861
        %v1916 = vmax.f32 %v1914, %v1862
        %v1917 = vmax.f32 %v1915, %v1863
        %v1918 = vmax.f32 %v1916, %v1864
        %v1919 = vmax.f32 %v1917, %v1865
        %v1920 = vmax.f32 %v1918, %v1866
        %v1921 = vmax.f32 %v1919, %v1867
        %v1922 = vsel %vm1247, %v1920, -inf
        %v1923 = vrot.slane %v1922, 4
        %v1924 = vmax.f32 %v1922, %v1923
        %v1925 = vrot.slane %v1924, 2
        %v1926 = vmax.f32 %v1924, %v1925
        %v1927 = vrot.slane %v1926, 1
        %v1928 = vmax.f32 %v1926, %v1927
        %v1929 = vmax.f32 %v1928, 0.0
        %v1930 = vsel %vm1430, %v1920, -inf
        %v1931 = vsel %vm1243, %v1921, -inf
        %v1932 = vmax.f32 %v1930, %v1931
        %v1933 = vrot.slane %v1932, 4
        %v1934 = vmax.f32 %v1932, %v1933
        %v1935 = vrot.slane %v1934, 2
        %v1936 = vmax.f32 %v1934, %v1935
        %v1937 = vrot.slane %v1936, 1
        %v1938 = vmax.f32 %v1936, %v1937
        %v1939 = vmax.f32 %v1938, 0.0
        %v1940 = vsel %vm1441, %v1921, -inf
        %v1941 = vrot.slane %v1940, 4
        %v1942 = vmax.f32 %v1940, %v1941
        %v1943 = vrot.slane %v1942, 2
        %v1944 = vmax.f32 %v1942, %v1943
        %v1945 = vrot.slane %v1944, 1
        %v1946 = vmax.f32 %v1944, %v1945
        %v1947 = vmax.f32 %v1946, 0.0
        %v1948 = vmax.f32 %v1868, %v1870
        %v1949 = vmax.f32 %v1869, %v1871
        %v1950 = vmax.f32 %v1948, %v1872
        %v1951 = vmax.f32 %v1949, %v1873
        %v1952 = vmax.f32 %v1950, %v1874
        %v1953 = vmax.f32 %v1951, %v1875
        %v1954 = vmax.f32 %v1952, %v1876
        %v1955 = vmax.f32 %v1953, %v1877
        %v1956 = vsel %vm1247, %v1954, -inf
        %v1957 = vrot.slane %v1956, 4
        %v1958 = vmax.f32 %v1956, %v1957
        %v1959 = vrot.slane %v1958, 2
        %v1960 = vmax.f32 %v1958, %v1959
        %v1961 = vrot.slane %v1960, 1
        %v1962 = vmax.f32 %v1960, %v1961
        %v1963 = vmax.f32 %v1962, 0.0
        %v1964 = vsel %vm1430, %v1954, -inf
        %v1965 = vsel %vm1243, %v1955, -inf
        %v1966 = vmax.f32 %v1964, %v1965
        %v1967 = vrot.slane %v1966, 4
        %v1968 = vmax.f32 %v1966, %v1967
        %v1969 = vrot.slane %v1968, 2
        %v1970 = vmax.f32 %v1968, %v1969
        %v1971 = vrot.slane %v1970, 1
        %v1972 = vmax.f32 %v1970, %v1971
        %v1973 = vmax.f32 %v1972, 0.0
        %v1974 = vsel %vm1441, %v1955, -inf
        %v1975 = vrot.slane %v1974, 4
        %v1976 = vmax.f32 %v1974, %v1975
        %v1977 = vrot.slane %v1976, 2
        %v1978 = vmax.f32 %v1976, %v1977
        %v1979 = vrot.slane %v1978, 1
        %v1980 = vmax.f32 %v1978, %v1979
        %v1981 = vmax.f32 %v1980, 0.0
        %v1982 = vsel %vm1239, %v1429, %v1440
        %v1983 = vsel %vm1241, %v1982, %v1449
        %v1984 = vsel %vm1243, %v1983, %v1467
        %v1985 = vsel %vm1245, %v1984, %v1476
        %v1986 = vsel %vm1247, %v1985, %v1484
        %v1987 = vsel %vm1249, %v1986, %v1500
        %v1988 = vsel %vm1251, %v1987, %v1510
        %v1989 = vsel %vm1239, %v1518, %v1694
        %v1990 = vsel %vm1241, %v1989, %v1704
        %v1991 = vsel %vm1243, %v1990, %v1712
        %v1992 = vsel %vm1245, %v1991, %v1730
        %v1993 = vsel %vm1247, %v1992, %v1739
        %v1994 = vsel %vm1249, %v1993, %v1747
        %v1995 = vsel %vm1251, %v1994, %v1763
        %v1996 = vsel %vm1239, %v1773, %v1781
        %v1997 = vsel %vm1241, %v1996, %v1893
        %v1998 = vsel %vm1243, %v1997, %v1903
        %v1999 = vsel %vm1245, %v1998, %v1911
        %v2000 = vsel %vm1247, %v1999, %v1929
        %v2001 = vsel %vm1249, %v2000, %v1939
        %v2002 = vsel %vm1251, %v2001, %v1947
        %v2003 = vsel %vm1239, %v1963, %v1973
        %v2004 = vsel %vm1241, %v2003, %v1981
        %2005 = vst [vmem:[%s161 + $0x9] sm:$0xff] %v1988
        %2006 = vst [vmem:[%s161 + $0x11] sm:$0xff] %v1995
        %2007 = vst [vmem:[%s161 + $0x19] sm:$0xff] %v2002
        %2008 = vst [vmem:[%s161 + $0x21] sm:$0x7] %v2004
        %p2009 = scmp.lt.s32.totalorder %s19, 1
        %s2010 = scalar_select %p2009, %s19, 1
        %p2011 = scmp.lt.s32.totalorder %s20, 0
        %s2012 = scalar_select %p2011, %s20, 0
        %s2013 = smul.addr %s2010, 5
        %s2014 = sadd.s32 %s2012, %s2013
        %s2015 = smul.addr %s2014, 8
        %s2016 = scalar_lea.vmem %s1, %s2015
        // Predicated region
        $region29: #{tpu_custom_call.1} parent=23 // pred_check
          %p2017 = pneg %p75
        $region30: #{tpu_custom_call.1} parent=23 // pred_check_branch
          %2019 = sbr.rel (%p2017) target = $region32
        $region31: #{tpu_custom_call.1} parent=23 // pred_region
          _
        $region32: #{tpu_custom_call.1} parent=23 // pred_fallthru
          _
      $region24: #{tpu_custom_call.1} parent=5 // pred_fallthru
        _
      %p2020 = scmp.le.s32.totalorder 2, %s10
      // Predicated region
      $region33: #{tpu_custom_call.1} parent=5 // pred_check
        %p2021 = pneg %p2020
      $region34: #{tpu_custom_call.1} parent=5 // pred_check_branch
        %2023 = sbr.rel (%p2021) target = $region36
      $region35: #{tpu_custom_call.1} parent=5 // pred_region
        %s2024 = ssub.s32 %s10, 2
        // Predicated region
        $region37: #{tpu_custom_call.1} parent=35 // pred_check
          %p2025 = pneg %p81
        $region38: #{tpu_custom_call.1} parent=35 // pred_check_branch
          %2027 = sbr.rel (%p2025) target = $region40
        $region39: #{tpu_custom_call.1} parent=35 // pred_region
          %p2028 = scmp.lt.s32.totalorder %s21, 1
          %s2029 = scalar_select %p2028, %s21, 1
          %p2030 = scmp.lt.s32.totalorder %s22, 0
          %s2031 = scalar_select %p2030, %s22, 0
          %s2032 = smul.addr %s2029, 5
          %s2033 = sadd.s32 %s2031, %s2032
          %s2034 = smul.addr %s2033, 8
          %s2035 = scalar_lea.vmem %s1, %s2034
        $region40: #{tpu_custom_call.1} parent=35 // pred_fallthru
          _
      $region36: #{tpu_custom_call.1} parent=5 // pred_fallthru
        _
    $region6: #{tpu_custom_call.1} parent=1 // loop_footer
      %s14 = sadd.s32 1, %s10
    $region7: #{tpu_custom_call.1} parent=1 // loop_footer_branch
      %9 = sbr.rel target = $region3
    $region8: #{tpu_custom_call.1} parent=1 // loop_exit
      _
    %2036 = vsyncpa [#allocation3], 1
    %s2037 = scalar_lea.sflag [#allocation3], 1
    %2038 = vsyncpa %s2037, 1

</llo_original>
